<compile_context>
chip_gen: v5e
topology: v5e:2x2
jax: 0.10.0
libtpu: 0.0.40
codegen_flags: <defaults>
</compile_context>

<pallas_src>
import functools

import jax
import jax.numpy as jnp
from jax.experimental import pallas as pl
from jax.experimental.pallas import tpu as pltpu

KSIZE = 4
LEFT_PAD = 1                        # torch Conv1d padding='same', k=4: pad 3 total -> 1 left, 2 right
RIGHT_PAD = KSIZE - 1 - LEFT_PAD


def _split_bf16(x):
    """f32 -> (hi, lo) bf16 pair with hi + lo reconstructing x to ~2^-16 relative."""
    hi = x.astype(jnp.bfloat16)
    lo = (x - hi.astype(jnp.float32)).astype(jnp.bfloat16)
    return hi, lo


def _dot_bf16x2(x_f32, w_bf16):
    """~f32-accurate matmul of an f32 lhs against an exact (0/1) bf16 rhs.

    Two bf16 MXU passes (hi and lo of the lhs) recover the lhs rounding error while the
    large rhs operand stays bf16 (half the HBM/VMEM bytes of f32)."""
    hi, lo = _split_bf16(x_f32)
    return (jnp.dot(hi, w_bf16, preferred_element_type=jnp.float32)
            + jnp.dot(lo, w_bf16, preferred_element_type=jnp.float32))


def _shifted_col_stack(x_t):
    """vstack_k of x_t shifted along the last axis by (k - LEFT_PAD); zeros outside. (4T, C)."""
    T, C = x_t.shape
    zl = jnp.zeros((T, LEFT_PAD), x_t.dtype)
    zr = jnp.zeros((T, RIGHT_PAD), x_t.dtype)
    xp = jnp.concatenate([zl, x_t, zr], axis=1)                               # (T, C+3)
    return jnp.concatenate([xp[:, k:k + C] for k in range(KSIZE)], axis=0)    # (4T, C)


def _shifted_row_stack(x_t):
    """hstack_k of x_t shifted along the first axis by (k - LEFT_PAD); zeros outside. (T, 4C)."""
    T, C = x_t.shape
    zt = jnp.zeros((LEFT_PAD, C), x_t.dtype)
    zb = jnp.zeros((RIGHT_PAD, C), x_t.dtype)
    xp = jnp.concatenate([zt, x_t, zb], axis=0)                               # (T+3, C)
    return jnp.concatenate([xp[k:k + T, :] for k in range(KSIZE)], axis=1)    # (T, 4C)


def _txa_kernel(scale_ref, x_ref, pool_ref, expand_ref, wt_ref, wc_ref, y_ref, *, bb, t):
    # scale_ref : (1,) f32 SMEM    -> scale_t * scale_c (folded)
    # x_ref     : (BB*T, J) f32    -> lane-dense input rows block, J = C*H*W
    # pool_ref  : (J, C) bf16      -> 0/1 spatial pooling matrix (1/HW folded into wt/wc)
    # expand_ref: (C, J) bf16      -> 0/1 channel -> lane broadcast matrix
    # wt_ref    : (T, 4T) f32      -> [Wt[:,:,0] | ... | Wt[:,:,3]] / HW
    # wc_ref    : (4C, C) f32      -> [Wc[:,:,0].T ; ... ; Wc[:,:,3].T] / HW
    # y_ref     : (BB*T, J)        -> output rows block
    pool = pool_ref[...]
    x_sum = _dot_bf16x2(x_ref[...], pool)                                     # (BB*T, C) f32

    wt = wt_ref[...]
    wc = wc_ref[...]
    outs_t = []
    outs_c = []
    for b in range(bb):                                 # static unroll: tiny (T, C) work per batch
        xt_b = x_sum[b * t:(b + 1) * t, :]                                    # (T, C)
        # conv_t (channels = T, length = C): one MXU matmul over all 4 taps.
        xc = _shifted_col_stack(xt_b)                                         # (4T, C)
        outs_t.append(jnp.dot(wt, xc, preferred_element_type=jnp.float32))    # (T, C)
        # conv_c (channels = C, length = T), already permuted back to (T, C).
        xr = _shifted_row_stack(xt_b)                                         # (T, 4C)
        outs_c.append(jnp.dot(xr, wc, preferred_element_type=jnp.float32))    # (T, C)
    out_t = outs_t[0] if bb == 1 else jnp.concatenate(outs_t, axis=0)         # (BB*T, C)
    out_c = outs_c[0] if bb == 1 else jnp.concatenate(outs_c, axis=0)         # (BB*T, C)

    attn = jax.nn.sigmoid(out_t) * jax.nn.sigmoid(out_c) * scale_ref[0]       # (BB*T, C)
    attn_full = _dot_bf16x2(attn, expand_ref[...])                            # (BB*T, J)

    # Re-read x from VMEM for the final multiply instead of keeping it live across the body.
    y_ref[...] = (x_ref[...] * attn_full).astype(y_ref.dtype)


def _pick_bb(batch, tlen, target_rows=128):
    """Batches per grid step: fill MXU rows, but keep >= 2 grid steps for v7x megacore."""
    cap = max(1, min(batch, max(1, target_rows // max(tlen, 1))))
    if batch >= 2:
        cap = max(1, min(cap, batch // 2))
    bb = cap
    while batch % bb:
        bb -= 1
    return bb


def t_xa_forward(x_seq, Wt, Wc, scale_t, scale_c):
    B, T, C, H, W = x_seq.shape
    HW = H * W
    J = C * HW
    assert C == 64, "conv_c in the reference module is hard-wired to 64 channels"
    assert J % 128 == 0, "C*H*W must be a multiple of 128 for a lane-dense layout"

    BB = _pick_bb(B, T)
    R = BB * T
    assert R % 8 == 0, "rows per grid step must be a multiple of 8 (sublane tiling)"

    x2 = x_seq.reshape(B * T, J)                                              # contiguous, free

    # Tiny structured constants. pool/expand are exact 0/1 in bf16 (half the HBM bytes of
    # f32) and are fetched exactly once since their block index never changes.
    eye_c = jnp.eye(C, dtype=jnp.bfloat16)
    pool = jnp.repeat(eye_c, HW, axis=0)                                      # (J, C)
    expand = jnp.repeat(eye_c, HW, axis=1)                                    # (C, J)

    inv_hw = jnp.float32(1.0 / HW)                # mean = (0/1 pool sum) * 1/HW, folded into weights
    wt_cat = jnp.concatenate([Wt[:, :, k] for k in range(KSIZE)], axis=1) * inv_hw    # (T, 4T)
    wc_cat = jnp.concatenate([Wc[:, :, k].T for k in range(KSIZE)], axis=0) * inv_hw  # (4C, C)
    scale = jnp.reshape(jnp.asarray(scale_t, jnp.float32) *
                        jnp.asarray(scale_c, jnp.float32), (1,))              # (1,)

    kernel = functools.partial(_txa_kernel, bb=BB, t=T)

    y2 = pl.pallas_call(
        kernel,
        out_shape=jax.ShapeDtypeStruct((B * T, J), x_seq.dtype),
        grid=(B // BB,),
        in_specs=[
            pl.BlockSpec(memory_space=pltpu.MemorySpace.SMEM),                # scale (scalar)
            pl.BlockSpec((R, J), lambda g: (g, 0)),                           # x rows, lane-dense
            pl.BlockSpec((J, C), lambda g: (0, 0)),                           # pool (fetched once)
            pl.BlockSpec((C, J), lambda g: (0, 0)),                           # expand (fetched once)
            pl.BlockSpec((T, KSIZE * T), lambda g: (0, 0)),                   # folded Wt taps
            pl.BlockSpec((KSIZE * C, C), lambda g: (0, 0)),                   # folded Wc taps
        ],
        out_specs=pl.BlockSpec((R, J), lambda g: (g, 0)),
        compiler_params=pltpu.CompilerParams(
            dimension_semantics=("parallel",),      # v7x: batch blocks split across TensorCores
            vmem_limit_bytes=32 * 1024 * 1024,
        ),
    )(scale, x2, pool, expand, wt_cat, wc_cat)
    return y2.reshape(B, T, C, H, W)


def t_xa_reference(x_seq, Wt, Wc, scale_t, scale_c):
    # Pure-JAX reference using explicit (1, 2) padding, matching torch Conv1d 'same', k=4.
    B, T, C, H, W = x_seq.shape
    x_t = x_seq.mean(axis=(3, 4))                                             # (B, T, C)

    xp = jnp.pad(x_t, ((0, 0), (0, 0), (LEFT_PAD, RIGHT_PAD)))
    out_t = jnp.zeros((B, T, C), jnp.float32)
    for k in range(KSIZE):
        out_t = out_t + jnp.einsum("oi,bic->boc", Wt[:, :, k], xp[:, :, k:k + C])

    x_c = jnp.transpose(x_t, (0, 2, 1))                                       # (B, C, T)
    xcp = jnp.pad(x_c, ((0, 0), (0, 0), (LEFT_PAD, RIGHT_PAD)))
    out_c = jnp.zeros((B, C, T), jnp.float32)
    for k in range(KSIZE):
        out_c = out_c + jnp.einsum("oi,bit->bot", Wc[:, :, k], xcp[:, :, k:k + T])
    out_c = jnp.transpose(out_c, (0, 2, 1))                                   # (B, T, C)

    attn = (jax.nn.sigmoid(out_t) * scale_t) * (jax.nn.sigmoid(out_c) * scale_c)
    return x_seq * attn[:, :, :, None, None]


if __name__ == "__main__":
    B, T, C, H, W = 2, 8, 64, 8, 8     # time_step = 8; conv_c requires C == 64

    key = jax.random.PRNGKey(0)
    k1, k2, k3 = jax.random.split(key, 3)
    x_seq = jax.random.normal(k1, (B, T, C, H, W), jnp.float32)
    Wt = jax.random.normal(k2, (T, T, KSIZE), jnp.float32) * (1.0 / (T * KSIZE) ** 0.5)
    Wc = jax.random.normal(k3, (C, C, KSIZE), jnp.float32) * (1.0 / (C * KSIZE) ** 0.5)
    scale_t = jnp.float32(1.0)
    scale_c = jnp.float32(1.0)

    y = jax.block_until_ready(t_xa_forward(x_seq, Wt, Wc, scale_t, scale_c))
    y_ref = jax.block_until_ready(t_xa_reference(x_seq, Wt, Wc, scale_t, scale_c))

    assert y.shape == x_seq.shape
    # hi/lo bf16 operand splits keep the kernel at ~f32 accuracy, so the original tolerance holds.
    assert jnp.allclose(y, y_ref, atol=2e-3, rtol=2e-3), "mismatch vs reference"
    print("KERNEL_OK")
</pallas_src>

<mosaic_0001>
module attributes {stable_mosaic.version = 11 : i64} {
  func.func @_txa_kernel(%arg0: i32, %arg1: memref<1xf32, #tpu.memory_space<smem>>, %arg2: memref<8x4096xf32, #tpu.memory_space<vmem>>, %arg3: memref<4096x64xbf16, #tpu.memory_space<vmem>>, %arg4: memref<64x4096xbf16, #tpu.memory_space<vmem>>, %arg5: memref<8x32xf32, #tpu.memory_space<vmem>>, %arg6: memref<256x64xf32, #tpu.memory_space<vmem>>, %arg7: memref<8x4096xf32, #tpu.memory_space<vmem>>) attributes {dimension_semantics = [#tpu.dimension_semantics<parallel>], iteration_bounds = array<i64: 2>, scalar_prefetch = 0 : i64, scratch_operands = 0 : i64, tpu.core_type = #tpu.core_type<tc>, window_params = [{transform_indices = @transform_0, window_bounds = array<i64: 1>}, {transform_indices = @transform_1, window_bounds = array<i64: 8, 4096>}, {pipeline_mode = #tpu.pipeline_mode<synchronous>, transform_indices = @transform_2, window_bounds = array<i64: 4096, 64>}, {pipeline_mode = #tpu.pipeline_mode<synchronous>, transform_indices = @transform_3, window_bounds = array<i64: 64, 4096>}, {pipeline_mode = #tpu.pipeline_mode<synchronous>, transform_indices = @transform_4, window_bounds = array<i64: 8, 32>}, {pipeline_mode = #tpu.pipeline_mode<synchronous>, transform_indices = @transform_5, window_bounds = array<i64: 256, 64>}, {transform_indices = @transform_6, window_bounds = array<i64: 8, 4096>}]} {
    %c0 = arith.constant 0 : index
    %c0_0 = arith.constant 0 : index
    %0 = vector.load %arg3[%c0, %c0_0] : memref<4096x64xbf16, #tpu.memory_space<vmem>>, vector<4096x64xbf16>
    %c0_1 = arith.constant 0 : index
    %c0_2 = arith.constant 0 : index
    %1 = vector.load %arg2[%c0_1, %c0_2] : memref<8x4096xf32, #tpu.memory_space<vmem>>, vector<8x4096xf32>
    %2 = arith.truncf %1 : vector<8x4096xf32> to vector<8x4096xbf16>
    %3 = arith.extf %2 : vector<8x4096xbf16> to vector<8x4096xf32>
    %4 = arith.subf %1, %3 : vector<8x4096xf32>
    %5 = arith.truncf %4 : vector<8x4096xf32> to vector<8x4096xbf16>
    %cst = arith.constant dense<0.000000e+00> : vector<8x64xf32>
    %6 = tpu.matmul %2, %0, %cst {dimension_numbers = #tpu.dot_dimension_numbers<[1], [0], [0], [1], [0, 0, 1, 1], [], []>} : vector<8x4096xbf16>, vector<4096x64xbf16>, vector<8x64xf32> -> vector<8x64xf32>
    %cst_3 = arith.constant dense<0.000000e+00> : vector<8x64xf32>
    %7 = tpu.matmul %5, %0, %cst_3 {dimension_numbers = #tpu.dot_dimension_numbers<[1], [0], [0], [1], [0, 0, 1, 1], [], []>} : vector<8x4096xbf16>, vector<4096x64xbf16>, vector<8x64xf32> -> vector<8x64xf32>
    %8 = arith.addf %6, %7 : vector<8x64xf32>
    %c0_4 = arith.constant 0 : index
    %c0_5 = arith.constant 0 : index
    %9 = vector.load %arg5[%c0_4, %c0_5] : memref<8x32xf32, #tpu.memory_space<vmem>>, vector<8x32xf32>
    %c0_6 = arith.constant 0 : index
    %c0_7 = arith.constant 0 : index
    %10 = vector.load %arg6[%c0_6, %c0_7] : memref<256x64xf32, #tpu.memory_space<vmem>>, vector<256x64xf32>
    %cst_8 = arith.constant 0.000000e+00 : f32
    %11 = vector.broadcast %cst_8 : f32 to vector<8x1xf32>
    %cst_9 = arith.constant 0.000000e+00 : f32
    %12 = vector.broadcast %cst_9 : f32 to vector<8x2xf32>
    %13 = tpu.concatenate %11, %8, %12 in 1 : vector<8x1xf32>, vector<8x64xf32>, vector<8x2xf32> -> vector<8x67xf32>
    %14 = vector.extract_strided_slice %13 {offsets = [0, 0], sizes = [8, 64], strides = [1, 1]} : vector<8x67xf32> to vector<8x64xf32>
    %15 = vector.extract_strided_slice %13 {offsets = [0, 1], sizes = [8, 64], strides = [1, 1]} : vector<8x67xf32> to vector<8x64xf32>
    %16 = vector.extract_strided_slice %13 {offsets = [0, 2], sizes = [8, 64], strides = [1, 1]} : vector<8x67xf32> to vector<8x64xf32>
    %17 = vector.extract_strided_slice %13 {offsets = [0, 3], sizes = [8, 64], strides = [1, 1]} : vector<8x67xf32> to vector<8x64xf32>
    %18 = tpu.concatenate %14, %15, %16, %17 in 0 : vector<8x64xf32>, vector<8x64xf32>, vector<8x64xf32>, vector<8x64xf32> -> vector<32x64xf32>
    %cst_10 = arith.constant dense<0.000000e+00> : vector<8x64xf32>
    %19 = tpu.matmul %9, %18, %cst_10 {dimension_numbers = #tpu.dot_dimension_numbers<[1], [0], [0], [1], [0, 0, 1, 1], [], []>} : vector<8x32xf32>, vector<32x64xf32>, vector<8x64xf32> -> vector<8x64xf32>
    %cst_11 = arith.constant 0.000000e+00 : f32
    %20 = vector.broadcast %cst_11 : f32 to vector<1x64xf32>
    %cst_12 = arith.constant 0.000000e+00 : f32
    %21 = vector.broadcast %cst_12 : f32 to vector<2x64xf32>
    %22 = tpu.concatenate %20, %8, %21 in 0 : vector<1x64xf32>, vector<8x64xf32>, vector<2x64xf32> -> vector<11x64xf32>
    %23 = vector.extract_strided_slice %22 {offsets = [0, 0], sizes = [8, 64], strides = [1, 1]} : vector<11x64xf32> to vector<8x64xf32>
    %24 = vector.extract_strided_slice %22 {offsets = [1, 0], sizes = [8, 64], strides = [1, 1]} : vector<11x64xf32> to vector<8x64xf32>
    %25 = vector.extract_strided_slice %22 {offsets = [2, 0], sizes = [8, 64], strides = [1, 1]} : vector<11x64xf32> to vector<8x64xf32>
    %26 = vector.extract_strided_slice %22 {offsets = [3, 0], sizes = [8, 64], strides = [1, 1]} : vector<11x64xf32> to vector<8x64xf32>
    %27 = tpu.concatenate %23, %24, %25, %26 in 1 : vector<8x64xf32>, vector<8x64xf32>, vector<8x64xf32>, vector<8x64xf32> -> vector<8x256xf32>
    %cst_13 = arith.constant dense<0.000000e+00> : vector<8x64xf32>
    %28 = tpu.matmul %27, %10, %cst_13 {dimension_numbers = #tpu.dot_dimension_numbers<[1], [0], [0], [1], [0, 0, 1, 1], [], []>} : vector<8x256xf32>, vector<256x64xf32>, vector<8x64xf32> -> vector<8x64xf32>
    %29 = arith.negf %19 : vector<8x64xf32>
    %30 = math.exp %29 : vector<8x64xf32>
    %cst_14 = arith.constant 1.000000e+00 : f32
    %31 = vector.broadcast %cst_14 : f32 to vector<8x64xf32>
    %32 = arith.addf %31, %30 : vector<8x64xf32>
    %33 = arith.divf %31, %32 : vector<8x64xf32>
    %34 = arith.negf %28 : vector<8x64xf32>
    %35 = math.exp %34 : vector<8x64xf32>
    %cst_15 = arith.constant 1.000000e+00 : f32
    %36 = vector.broadcast %cst_15 : f32 to vector<8x64xf32>
    %37 = arith.addf %36, %35 : vector<8x64xf32>
    %38 = arith.divf %36, %37 : vector<8x64xf32>
    %39 = arith.mulf %33, %38 : vector<8x64xf32>
    %c0_16 = arith.constant 0 : index
    %40 = memref.load %arg1[%c0_16] : memref<1xf32, #tpu.memory_space<smem>>
    %41 = vector.broadcast %40 : f32 to vector<8x64xf32>
    %42 = arith.mulf %39, %41 : vector<8x64xf32>
    %c0_17 = arith.constant 0 : index
    %c0_18 = arith.constant 0 : index
    %43 = vector.load %arg4[%c0_17, %c0_18] : memref<64x4096xbf16, #tpu.memory_space<vmem>>, vector<64x4096xbf16>
    %44 = arith.truncf %42 : vector<8x64xf32> to vector<8x64xbf16>
    %45 = arith.extf %44 : vector<8x64xbf16> to vector<8x64xf32>
    %46 = arith.subf %42, %45 : vector<8x64xf32>
    %47 = arith.truncf %46 : vector<8x64xf32> to vector<8x64xbf16>
    %cst_19 = arith.constant dense<0.000000e+00> : vector<8x4096xf32>
    %48 = tpu.matmul %44, %43, %cst_19 {dimension_numbers = #tpu.dot_dimension_numbers<[1], [0], [0], [1], [0, 0, 1, 1], [], []>} : vector<8x64xbf16>, vector<64x4096xbf16>, vector<8x4096xf32> -> vector<8x4096xf32>
    %cst_20 = arith.constant dense<0.000000e+00> : vector<8x4096xf32>
    %49 = tpu.matmul %47, %43, %cst_20 {dimension_numbers = #tpu.dot_dimension_numbers<[1], [0], [0], [1], [0, 0, 1, 1], [], []>} : vector<8x64xbf16>, vector<64x4096xbf16>, vector<8x4096xf32> -> vector<8x4096xf32>
    %50 = arith.addf %48, %49 : vector<8x4096xf32>
    %c0_21 = arith.constant 0 : index
    %c0_22 = arith.constant 0 : index
    %51 = vector.load %arg2[%c0_21, %c0_22] : memref<8x4096xf32, #tpu.memory_space<vmem>>, vector<8x4096xf32>
    %52 = arith.mulf %51, %50 : vector<8x4096xf32>
    %c0_23 = arith.constant 0 : index
    %c0_24 = arith.constant 0 : index
    %53 = vector.load %arg7[%c0_23, %c0_24] : memref<8x4096xf32, #tpu.memory_space<vmem>>, vector<8x4096xf32>
    tpu.vector_store %arg7[%c0_23, %c0_24], %52 {strides = array<i32>} : memref<8x4096xf32, #tpu.memory_space<vmem>>, vector<8x4096xf32>,
    return
  }
  func.func @transform_0(%arg0: i32) -> i32 {
    %c0_i32 = arith.constant 0 : i32
    %c0_i32_0 = arith.constant 0 : i32
    return %c0_i32 : i32
  }
  func.func @transform_1(%arg0: i32) -> (i32, i32) {
    %c0_i32 = arith.constant 0 : i32
    %c0_i32_0 = arith.constant 0 : i32
    return %arg0, %c0_i32 : i32, i32
  }
  func.func @transform_2(%arg0: i32) -> (i32, i32) {
    %c0_i32 = arith.constant 0 : i32
    %c0_i32_0 = arith.constant 0 : i32
    %c0_i32_1 = arith.constant 0 : i32
    return %c0_i32, %c0_i32_0 : i32, i32
  }
  func.func @transform_3(%arg0: i32) -> (i32, i32) {
    %c0_i32 = arith.constant 0 : i32
    %c0_i32_0 = arith.constant 0 : i32
    %c0_i32_1 = arith.constant 0 : i32
    return %c0_i32, %c0_i32_0 : i32, i32
  }
  func.func @transform_4(%arg0: i32) -> (i32, i32) {
    %c0_i32 = arith.constant 0 : i32
    %c0_i32_0 = arith.constant 0 : i32
    %c0_i32_1 = arith.constant 0 : i32
    return %c0_i32, %c0_i32_0 : i32, i32
  }
  func.func @transform_5(%arg0: i32) -> (i32, i32) {
    %c0_i32 = arith.constant 0 : i32
    %c0_i32_0 = arith.constant 0 : i32
    %c0_i32_1 = arith.constant 0 : i32
    return %c0_i32, %c0_i32_0 : i32, i32
  }
  func.func @transform_6(%arg0: i32) -> (i32, i32) {
    %c0_i32 = arith.constant 0 : i32
    %c0_i32_0 = arith.constant 0 : i32
    return %arg0, %c0_i32 : i32, i32
  }
}

</mosaic_0001>

<llo_original>
// kernel: tpu_custom_call.1
$region0: #{tpu_custom_call.1}
  #allocation0 [shape = 'u32[]', space=smem, size = 0x4, offset = 0x4, fixed_abs, tag = 'smem constant byte address 0x4 - core index']
  #allocation1 [shape = 'u32[72,128]{1,0:T(1,128)}', space=vmem, size = 0x9000, scoped, tag = 'internal scratch']
  #allocation2 [shape = 'f32[1]{0:T(128)S(6)}', space=smem, size = 0x200, scoped, tag = 'scoped memory for tpu_custom_call.1']
  %s0 = inlined_call_operand.<no memory space> [shape: f32[1], index: 0, kind: input, shape index: {}]
  %s1 = inlined_call_operand.vmem [shape: f32[16,4096], index: 1, kind: input, shape index: {}]
  %s2 = inlined_call_operand.vmem [shape: bf16[4096,64], index: 2, kind: input, shape index: {}]
  %s3 = inlined_call_operand.vmem [shape: bf16[64,4096], index: 3, kind: input, shape index: {}]
  %s4 = inlined_call_operand.vmem [shape: f32[8,32], index: 4, kind: input, shape index: {}]
  %s5 = inlined_call_operand.vmem [shape: f32[256,64], index: 5, kind: input, shape index: {}]
  %s6 = inlined_call_operand.hbm [shape: f32[16,4096], index: 6, kind: output, shape index: {}]
  %s7 = sld [smem:[#allocation0]]
  $region57: #{tpu_custom_call.1} parent=0
    _
  %s9 = ssub.s32 1, %s7
  %s10 = scalar_select 0, %s9, %s7
  %11 = sst [smem:[#allocation2]] %s0
  $region1: #{tpu_custom_call.1} parent=0
    #allocation3 [shape = 'u8[262144]{0}', space=vmem, size = 0x40000, scoped, tag = 'output window, operand 0']
    #allocation4 [shape = 's32[2]{0}', space=sflag, size = 0x8, scoped, tag = 'scoped memory for tpu_custom_call.1']
    %12 = vsyncpa [#allocation4], 0
    %s13 = scalar_lea.sflag [#allocation4], 1
    %14 = vsyncpa %s13, 0
    loop: start=0, step=1, limit=4
    $region2: #{tpu_custom_call.1} parent=1 // loop_pre_header
      _
    $region3: #{tpu_custom_call.1} parent=1 // loop_header
      %s16 = sphi 0, %s20
      %p17 = scmp.ge.s32.totalorder %s16, 4
      %s24 = sphi 0, %s24
      %s26 = sphi 0, %s24
      %s27 = sphi 0, %s26
      %s41 = sphi 0, %s27
      %s47 = sphi 0, %s49
      %s50 = sphi 0, %s47
      %s51 = sphi 0, %s50
      %s67 = sphi 0, %s51
      %s71 = sphi 0, %s71
      %s73 = sphi 0, %s71
      %s74 = sphi 0, %s73
      %s88 = sphi 0, %s74
      %s92 = sphi 0, %s92
      %s94 = sphi 0, %s92
      %s95 = sphi 0, %s94
      %s109 = sphi 0, %s95
      %s113 = sphi 0, %s113
      %s115 = sphi 0, %s113
      %s116 = sphi 0, %s115
      %s130 = sphi 0, %s116
      %s134 = sphi 0, %s134
      %s136 = sphi 0, %s134
      %s137 = sphi 0, %s136
      %s151 = sphi 0, %s137
      %s157 = sphi 0, %s159
      %s160 = sphi 0, %s157
      %s161 = sphi 0, %s160
      %s177 = sphi 0, %s161
    $region4: #{tpu_custom_call.1} parent=1 // loop_header_branch
      %19 = sbr.rel (%p17) target = $region8
    $region5: #{tpu_custom_call.1} parent=1 // loop_body
      %s21 = ssub.s32 %s16, 1
      %s22 = ssub.s32 %s16, 2
      %s23 = sadd.s32 %s16, 1
      %s25 = sadd.s32 %s24, 1
      %p28 = scmp.eq.s32.totalorder %s16, 1
      %p29 = scmp.ne.s32.totalorder %s24, %s26
      %p30 = scmp.eq.s32.totalorder %s16, 0
      %p31 = por %p29, %p30
      %p32 = scmp.ne.s32.totalorder %s24, %s26
      %p33 = scmp.eq.s32.totalorder %s21, 1
      %p34 = por %p32, %p33
      %p35 = scmp.ne.s32.totalorder %s26, %s27
      %p36 = scmp.eq.s32.totalorder %s21, 0
      %p37 = por %p35, %p36
      %p38 = scmp.ne.s32.totalorder %s26, %s27
      %p39 = scmp.eq.s32.totalorder %s22, 1
      %p40 = por %p38, %p39
      %p42 = scmp.ne.s32.totalorder %s27, %s41
      %p43 = scmp.eq.s32.totalorder %s22, 0
      %p44 = por %p42, %p43
      %s45 = ssub.s32 %s16, %s23
      %p46 = scmp.eq.s32.totalorder %s45, 0
      %s48 = sadd.s32 %s47, 1
      %s49 = scalar_select %p46, %s47, %s48
      %p52 = pneg %p46
      %p53 = scmp.eq.s32.totalorder %s16, 1
      %p54 = por %p52, %p53
      %p55 = scmp.ne.s32.totalorder %s47, %s50
      %p56 = scmp.eq.s32.totalorder %s16, 0
      %p57 = por %p55, %p56
      %p58 = scmp.ne.s32.totalorder %s47, %s50
      %p59 = scmp.eq.s32.totalorder %s21, 1
      %p60 = por %p58, %p59
      %p61 = scmp.ne.s32.totalorder %s50, %s51
      %p62 = scmp.eq.s32.totalorder %s21, 0
      %p63 = por %p61, %p62
      %p64 = scmp.ne.s32.totalorder %s50, %s51
      %p65 = scmp.eq.s32.totalorder %s22, 1
      %p66 = por %p64, %p65
      %p68 = scmp.ne.s32.totalorder %s51, %s67
      %p69 = scmp.eq.s32.totalorder %s22, 0
      %p70 = por %p68, %p69
      %s72 = sadd.s32 %s71, 1
      %p75 = scmp.eq.s32.totalorder %s16, 1
      %p76 = scmp.ne.s32.totalorder %s71, %s73
      %p77 = scmp.eq.s32.totalorder %s16, 0
      %p78 = por %p76, %p77
      %p79 = scmp.ne.s32.totalorder %s71, %s73
      %p80 = scmp.eq.s32.totalorder %s21, 1
      %p81 = por %p79, %p80
      %p82 = scmp.ne.s32.totalorder %s73, %s74
      %p83 = scmp.eq.s32.totalorder %s21, 0
      %p84 = por %p82, %p83
      %p85 = scmp.ne.s32.totalorder %s73, %s74
      %p86 = scmp.eq.s32.totalorder %s22, 1
      %p87 = por %p85, %p86
      %p89 = scmp.ne.s32.totalorder %s74, %s88
      %p90 = scmp.eq.s32.totalorder %s22, 0
      %p91 = por %p89, %p90
      %s93 = sadd.s32 %s92, 1
      %p96 = scmp.eq.s32.totalorder %s16, 1
      %p97 = scmp.ne.s32.totalorder %s92, %s94
      %p98 = scmp.eq.s32.totalorder %s16, 0
      %p99 = por %p97, %p98
      %p100 = scmp.ne.s32.totalorder %s92, %s94
      %p101 = scmp.eq.s32.totalorder %s21, 1
      %p102 = por %p100, %p101
      %p103 = scmp.ne.s32.totalorder %s94, %s95
      %p104 = scmp.eq.s32.totalorder %s21, 0
      %p105 = por %p103, %p104
      %p106 = scmp.ne.s32.totalorder %s94, %s95
      %p107 = scmp.eq.s32.totalorder %s22, 1
      %p108 = por %p106, %p107
      %p110 = scmp.ne.s32.totalorder %s95, %s109
      %p111 = scmp.eq.s32.totalorder %s22, 0
      %p112 = por %p110, %p111
      %s114 = sadd.s32 %s113, 1
      %p117 = scmp.eq.s32.totalorder %s16, 1
      %p118 = scmp.ne.s32.totalorder %s113, %s115
      %p119 = scmp.eq.s32.totalorder %s16, 0
      %p120 = por %p118, %p119
      %p121 = scmp.ne.s32.totalorder %s113, %s115
      %p122 = scmp.eq.s32.totalorder %s21, 1
      %p123 = por %p121, %p122
      %p124 = scmp.ne.s32.totalorder %s115, %s116
      %p125 = scmp.eq.s32.totalorder %s21, 0
      %p126 = por %p124, %p125
      %p127 = scmp.ne.s32.totalorder %s115, %s116
      %p128 = scmp.eq.s32.totalorder %s22, 1
      %p129 = por %p127, %p128
      %p131 = scmp.ne.s32.totalorder %s116, %s130
      %p132 = scmp.eq.s32.totalorder %s22, 0
      %p133 = por %p131, %p132
      %s135 = sadd.s32 %s134, 1
      %p138 = scmp.eq.s32.totalorder %s16, 1
      %p139 = scmp.ne.s32.totalorder %s134, %s136
      %p140 = scmp.eq.s32.totalorder %s16, 0
      %p141 = por %p139, %p140
      %p142 = scmp.ne.s32.totalorder %s134, %s136
      %p143 = scmp.eq.s32.totalorder %s21, 1
      %p144 = por %p142, %p143
      %p145 = scmp.ne.s32.totalorder %s136, %s137
      %p146 = scmp.eq.s32.totalorder %s21, 0
      %p147 = por %p145, %p146
      %p148 = scmp.ne.s32.totalorder %s136, %s137
      %p149 = scmp.eq.s32.totalorder %s22, 1
      %p150 = por %p148, %p149
      %p152 = scmp.ne.s32.totalorder %s137, %s151
      %p153 = scmp.eq.s32.totalorder %s22, 0
      %p154 = por %p152, %p153
      %s155 = ssub.s32 %s16, %s23
      %p156 = scmp.eq.s32.totalorder %s155, 0
      %s158 = sadd.s32 %s157, 1
      %s159 = scalar_select %p156, %s157, %s158
      %p162 = pneg %p156
      %p163 = scmp.eq.s32.totalorder %s16, 1
      %p164 = por %p162, %p163
      %p165 = scmp.ne.s32.totalorder %s157, %s160
      %p166 = scmp.eq.s32.totalorder %s16, 0
      %p167 = por %p165, %p166
      %p168 = scmp.ne.s32.totalorder %s157, %s160
      %p169 = scmp.eq.s32.totalorder %s21, 1
      %p170 = por %p168, %p169
      %p171 = scmp.ne.s32.totalorder %s160, %s161
      %p172 = scmp.eq.s32.totalorder %s21, 0
      %p173 = por %p171, %p172
      %p174 = scmp.ne.s32.totalorder %s160, %s161
      %p175 = scmp.eq.s32.totalorder %s22, 1
      %p176 = por %p174, %p175
      %p178 = scmp.ne.s32.totalorder %s161, %s177
      %p179 = scmp.eq.s32.totalorder %s22, 0
      %p180 = por %p178, %p179
      %p181 = scmp.le.s32.totalorder 1, %s16
      %p182 = scmp.lt.s32.totalorder %s16, 3
      %p183 = pnand %p181, %p182
      %p184 = pneg %p183
      // Predicated region
      $region9: #{tpu_custom_call.1} parent=5 // pred_check
        _
      $region10: #{tpu_custom_call.1} parent=5 // pred_check_branch
        %186 = sbr.rel (%p183) target = $region12
      $region11: #{tpu_custom_call.1} parent=5 // pred_region
        %s187 = ssub.s32 %s16, 1
        // Predicated region
        $region13: #{tpu_custom_call.1} parent=11 // pred_check
          %p188 = pneg %p37
        $region14: #{tpu_custom_call.1} parent=11 // pred_check_branch
          %190 = sbr.rel (%p188) target = $region16
        $region15: #{tpu_custom_call.1} parent=11 // pred_region
          _
        $region16: #{tpu_custom_call.1} parent=11 // pred_fallthru
          _
        // Predicated region
        $region17: #{tpu_custom_call.1} parent=11 // pred_check
          %p191 = pneg %p84
        $region18: #{tpu_custom_call.1} parent=11 // pred_check_branch
          %193 = sbr.rel (%p191) target = $region20
        $region19: #{tpu_custom_call.1} parent=11 // pred_region
          _
        $region20: #{tpu_custom_call.1} parent=11 // pred_fallthru
          _
        // Predicated region
        $region21: #{tpu_custom_call.1} parent=11 // pred_check
          %p194 = pneg %p105
        $region22: #{tpu_custom_call.1} parent=11 // pred_check_branch
          %196 = sbr.rel (%p194) target = $region24
        $region23: #{tpu_custom_call.1} parent=11 // pred_region
          _
        $region24: #{tpu_custom_call.1} parent=11 // pred_fallthru
          _
        // Predicated region
        $region25: #{tpu_custom_call.1} parent=11 // pred_check
          %p197 = pneg %p126
        $region26: #{tpu_custom_call.1} parent=11 // pred_check_branch
          %199 = sbr.rel (%p197) target = $region28
        $region27: #{tpu_custom_call.1} parent=11 // pred_region
          _
        $region28: #{tpu_custom_call.1} parent=11 // pred_fallthru
          _
        // Predicated region
        $region29: #{tpu_custom_call.1} parent=11 // pred_check
          %p200 = pneg %p147
        $region30: #{tpu_custom_call.1} parent=11 // pred_check_branch
          %202 = sbr.rel (%p200) target = $region32
        $region31: #{tpu_custom_call.1} parent=11 // pred_region
          _
        $region32: #{tpu_custom_call.1} parent=11 // pred_fallthru
          _
      $region12: #{tpu_custom_call.1} parent=5 // pred_fallthru
        _
      %p203 = scmp.lt.s32.totalorder %s16, 2
      // Predicated region
      $region33: #{tpu_custom_call.1} parent=5 // pred_check
        %p204 = pneg %p203
      $region34: #{tpu_custom_call.1} parent=5 // pred_check_branch
        %206 = sbr.rel (%p204) target = $region36
      $region35: #{tpu_custom_call.1} parent=5 // pred_region
        // Predicated region
        $region37: #{tpu_custom_call.1} parent=35 // pred_check
          %p207 = pneg %p57
        $region38: #{tpu_custom_call.1} parent=35 // pred_check_branch
          %209 = sbr.rel (%p207) target = $region40
        $region39: #{tpu_custom_call.1} parent=35 // pred_region
          %p210 = scmp.lt.s32.totalorder %s16, 1
          %s211 = scalar_select %p210, %s16, 1
          %s212 = smul.addr %s211, 32
          %s213 = smul.addr %s212, 8
          %s214 = scalar_lea.vmem %s1, %s213
        $region40: #{tpu_custom_call.1} parent=35 // pred_fallthru
          _
      $region36: #{tpu_custom_call.1} parent=5 // pred_fallthru
        _
      %p215 = scmp.le.s32.totalorder 1, %s16
      %p216 = scmp.lt.s32.totalorder %s16, 3
      %p217 = pnand %p215, %p216
      %p218 = pneg %p217
      // Predicated region
      $region41: #{tpu_custom_call.1} parent=5 // pred_check
        _
      $region42: #{tpu_custom_call.1} parent=5 // pred_check_branch
        %220 = sbr.rel (%p217) target = $region44
      $region43: #{tpu_custom_call.1} parent=5 // pred_region
        %s221 = ssub.s32 %s16, 1
        %p222 = pneg %p37
        %p223 = pneg %p34
        %p224 = scmp.lt.s32.totalorder %s21, 1
        %s225 = scalar_select %p224, %s21, 1
        %s226 = smul.addr %s225, 32
        %s227 = smul.addr %s226, 8
        %s228 = scalar_lea.vmem %s1, %s227
        %p229 = pneg %p63
        %p230 = pneg %p60
        %p231 = pneg %p84
        %p232 = pneg %p81
        %p233 = pneg %p105
        %p234 = pneg %p102
        %p235 = pneg %p126
        %p236 = pneg %p123
        %p237 = pneg %p147
        %p238 = pneg %p144
        %p239 = pneg %p173
        %p240 = pneg %p170
        %s241 = sand.u32 %s160, 1
        %s242 = scalar_lea.sflag [#allocation4], %s241
        %s243 = sand.u32 %s160, 1
        %s244 = smul.addr %s243, 256
        %s245 = scalar_lea.vmem [#allocation3], %s244
        %p246 = scmp.lt.s32.totalorder %s21, 1
        %s247 = scalar_select %p246, %s21, 1
        %s248 = smul.addr %s247, 32
        %s249 = smul.addr %s248, 8
        %s250 = scalar_lea.vmem %s1, %s249
        %v252 = vld [vmem:[%s2] sm:$0xf]
        %v253 = vld [vmem:[%s2 + $0x4] sm:$0xf]
        %v254 = vld [vmem:[%s2 + $0x8] sm:$0xf]
        %v255 = vld [vmem:[%s2 + $0xc] sm:$0xf]
        %v256 = vld [vmem:[%s2 + $0x10] sm:$0xf]
        %v257 = vld [vmem:[%s2 + $0x14] sm:$0xf]
        %v258 = vld [vmem:[%s2 + $0x18] sm:$0xf]
        %v259 = vld [vmem:[%s2 + $0x1c] sm:$0xf]
        %v260 = vld [vmem:[%s2 + $0x20] sm:$0xf]
        %v261 = vld [vmem:[%s2 + $0x24] sm:$0xf]
        %v262 = vld [vmem:[%s2 + $0x28] sm:$0xf]
        %v263 = vld [vmem:[%s2 + $0x2c] sm:$0xf]
        %v264 = vld [vmem:[%s2 + $0x30] sm:$0xf]
        %v265 = vld [vmem:[%s2 + $0x34] sm:$0xf]
        %v266 = vld [vmem:[%s2 + $0x38] sm:$0xf]
        %v267 = vld [vmem:[%s2 + $0x3c] sm:$0xf]
        %v268 = vld [vmem:[%s2 + $0x40] sm:$0xf]
        %v269 = vld [vmem:[%s2 + $0x44] sm:$0xf]
        %v270 = vld [vmem:[%s2 + $0x48] sm:$0xf]
        %v271 = vld [vmem:[%s2 + $0x4c] sm:$0xf]
        %v272 = vld [vmem:[%s2 + $0x50] sm:$0xf]
        %v273 = vld [vmem:[%s2 + $0x54] sm:$0xf]
        %v274 = vld [vmem:[%s2 + $0x58] sm:$0xf]
        %v275 = vld [vmem:[%s2 + $0x5c] sm:$0xf]
        %v276 = vld [vmem:[%s2 + $0x60] sm:$0xf]
        %v277 = vld [vmem:[%s2 + $0x64] sm:$0xf]
        %v278 = vld [vmem:[%s2 + $0x68] sm:$0xf]
        %v279 = vld [vmem:[%s2 + $0x6c] sm:$0xf]
        %v280 = vld [vmem:[%s2 + $0x70] sm:$0xf]
        %v281 = vld [vmem:[%s2 + $0x74] sm:$0xf]
        %v282 = vld [vmem:[%s2 + $0x78] sm:$0xf]
        %v283 = vld [vmem:[%s2 + $0x7c] sm:$0xf]
        %v284 = vld [vmem:[%s2 + $0x80] sm:$0xf]
        %v285 = vld [vmem:[%s2 + $0x84] sm:$0xf]
        %v286 = vld [vmem:[%s2 + $0x88] sm:$0xf]
        %v287 = vld [vmem:[%s2 + $0x8c] sm:$0xf]
        %v288 = vld [vmem:[%s2 + $0x90] sm:$0xf]
        %v289 = vld [vmem:[%s2 + $0x94] sm:$0xf]
        %v290 = vld [vmem:[%s2 + $0x98] sm:$0xf]
        %v291 = vld [vmem:[%s2 + $0x9c] sm:$0xf]
        %v292 = vld [vmem:[%s2 + $0xa0] sm:$0xf]
        %v293 = vld [vmem:[%s2 + $0xa4] sm:$0xf]
        %v294 = vld [vmem:[%s2 + $0xa8] sm:$0xf]
        %v295 = vld [vmem:[%s2 + $0xac] sm:$0xf]
        %v296 = vld [vmem:[%s2 + $0xb0] sm:$0xf]
        %v297 = vld [vmem:[%s2 + $0xb4] sm:$0xf]
        %v298 = vld [vmem:[%s2 + $0xb8] sm:$0xf]
        %v299 = vld [vmem:[%s2 + $0xbc] sm:$0xf]
        %v300 = vld [vmem:[%s2 + $0xc0] sm:$0xf]
        %v301 = vld [vmem:[%s2 + $0xc4] sm:$0xf]
        %v302 = vld [vmem:[%s2 + $0xc8] sm:$0xf]
        %v303 = vld [vmem:[%s2 + $0xcc] sm:$0xf]
        %v304 = vld [vmem:[%s2 + $0xd0] sm:$0xf]
        %v305 = vld [vmem:[%s2 + $0xd4] sm:$0xf]
        %v306 = vld [vmem:[%s2 + $0xd8] sm:$0xf]
        %v307 = vld [vmem:[%s2 + $0xdc] sm:$0xf]
        %v308 = vld [vmem:[%s2 + $0xe0] sm:$0xf]
        %v309 = vld [vmem:[%s2 + $0xe4] sm:$0xf]
        %v310 = vld [vmem:[%s2 + $0xe8] sm:$0xf]
        %v311 = vld [vmem:[%s2 + $0xec] sm:$0xf]
        %v312 = vld [vmem:[%s2 + $0xf0] sm:$0xf]
        %v313 = vld [vmem:[%s2 + $0xf4] sm:$0xf]
        %v314 = vld [vmem:[%s2 + $0xf8] sm:$0xf]
        %v315 = vld [vmem:[%s2 + $0xfc] sm:$0xf]
        %v316 = vld [vmem:[%s2 + $0x100] sm:$0xf]
        %v317 = vld [vmem:[%s2 + $0x104] sm:$0xf]
        %v318 = vld [vmem:[%s2 + $0x108] sm:$0xf]
        %v319 = vld [vmem:[%s2 + $0x10c] sm:$0xf]
        %v320 = vld [vmem:[%s2 + $0x110] sm:$0xf]
        %v321 = vld [vmem:[%s2 + $0x114] sm:$0xf]
        %v322 = vld [vmem:[%s2 + $0x118] sm:$0xf]
        %v323 = vld [vmem:[%s2 + $0x11c] sm:$0xf]
        %v324 = vld [vmem:[%s2 + $0x120] sm:$0xf]
        %v325 = vld [vmem:[%s2 + $0x124] sm:$0xf]
        %v326 = vld [vmem:[%s2 + $0x128] sm:$0xf]
        %v327 = vld [vmem:[%s2 + $0x12c] sm:$0xf]
        %v328 = vld [vmem:[%s2 + $0x130] sm:$0xf]
        %v329 = vld [vmem:[%s2 + $0x134] sm:$0xf]
        %v330 = vld [vmem:[%s2 + $0x138] sm:$0xf]
        %v331 = vld [vmem:[%s2 + $0x13c] sm:$0xf]
        %v332 = vld [vmem:[%s2 + $0x140] sm:$0xf]
        %v333 = vld [vmem:[%s2 + $0x144] sm:$0xf]
        %v334 = vld [vmem:[%s2 + $0x148] sm:$0xf]
        %v335 = vld [vmem:[%s2 + $0x14c] sm:$0xf]
        %v336 = vld [vmem:[%s2 + $0x150] sm:$0xf]
        %v337 = vld [vmem:[%s2 + $0x154] sm:$0xf]
        %v338 = vld [vmem:[%s2 + $0x158] sm:$0xf]
        %v339 = vld [vmem:[%s2 + $0x15c] sm:$0xf]
        %v340 = vld [vmem:[%s2 + $0x160] sm:$0xf]
        %v341 = vld [vmem:[%s2 + $0x164] sm:$0xf]
        %v342 = vld [vmem:[%s2 + $0x168] sm:$0xf]
        %v343 = vld [vmem:[%s2 + $0x16c] sm:$0xf]
        %v344 = vld [vmem:[%s2 + $0x170] sm:$0xf]
        %v345 = vld [vmem:[%s2 + $0x174] sm:$0xf]
        %v346 = vld [vmem:[%s2 + $0x178] sm:$0xf]
        %v347 = vld [vmem:[%s2 + $0x17c] sm:$0xf]
        %v348 = vld [vmem:[%s2 + $0x180] sm:$0xf]
        %v349 = vld [vmem:[%s2 + $0x184] sm:$0xf]
        %v350 = vld [vmem:[%s2 + $0x188] sm:$0xf]
        %v351 = vld [vmem:[%s2 + $0x18c] sm:$0xf]
        %v352 = vld [vmem:[%s2 + $0x190] sm:$0xf]
        %v353 = vld [vmem:[%s2 + $0x194] sm:$0xf]
        %v354 = vld [vmem:[%s2 + $0x198] sm:$0xf]
        %v355 = vld [vmem:[%s2 + $0x19c] sm:$0xf]
        %v356 = vld [vmem:[%s2 + $0x1a0] sm:$0xf]
        %v357 = vld [vmem:[%s2 + $0x1a4] sm:$0xf]
        %v358 = vld [vmem:[%s2 + $0x1a8] sm:$0xf]
        %v359 = vld [vmem:[%s2 + $0x1ac] sm:$0xf]
        %v360 = vld [vmem:[%s2 + $0x1b0] sm:$0xf]
        %v361 = vld [vmem:[%s2 + $0x1b4] sm:$0xf]
        %v362 = vld [vmem:[%s2 + $0x1b8] sm:$0xf]
        %v363 = vld [vmem:[%s2 + $0x1bc] sm:$0xf]
        %v364 = vld [vmem:[%s2 + $0x1c0] sm:$0xf]
        %v365 = vld [vmem:[%s2 + $0x1c4] sm:$0xf]
        %v366 = vld [vmem:[%s2 + $0x1c8] sm:$0xf]
        %v367 = vld [vmem:[%s2 + $0x1cc] sm:$0xf]
        %v368 = vld [vmem:[%s2 + $0x1d0] sm:$0xf]
        %v369 = vld [vmem:[%s2 + $0x1d4] sm:$0xf]
        %v370 = vld [vmem:[%s2 + $0x1d8] sm:$0xf]
        %v371 = vld [vmem:[%s2 + $0x1dc] sm:$0xf]
        %v372 = vld [vmem:[%s2 + $0x1e0] sm:$0xf]
        %v373 = vld [vmem:[%s2 + $0x1e4] sm:$0xf]
        %v374 = vld [vmem:[%s2 + $0x1e8] sm:$0xf]
        %v375 = vld [vmem:[%s2 + $0x1ec] sm:$0xf]
        %v376 = vld [vmem:[%s2 + $0x1f0] sm:$0xf]
        %v377 = vld [vmem:[%s2 + $0x1f4] sm:$0xf]
        %v378 = vld [vmem:[%s2 + $0x1f8] sm:$0xf]
        %v379 = vld [vmem:[%s2 + $0x1fc] sm:$0xf]
        %v380 = vld [vmem:[%s2 + $0x200] sm:$0xf]
        %v381 = vld [vmem:[%s2 + $0x204] sm:$0xf]
        %v382 = vld [vmem:[%s2 + $0x208] sm:$0xf]
        %v383 = vld [vmem:[%s2 + $0x20c] sm:$0xf]
        %v384 = vld [vmem:[%s2 + $0x210] sm:$0xf]
        %v385 = vld [vmem:[%s2 + $0x214] sm:$0xf]
        %v386 = vld [vmem:[%s2 + $0x218] sm:$0xf]
        %v387 = vld [vmem:[%s2 + $0x21c] sm:$0xf]
        %v388 = vld [vmem:[%s2 + $0x220] sm:$0xf]
        %v389 = vld [vmem:[%s2 + $0x224] sm:$0xf]
        %v390 = vld [vmem:[%s2 + $0x228] sm:$0xf]
        %v391 = vld [vmem:[%s2 + $0x22c] sm:$0xf]
        %v392 = vld [vmem:[%s2 + $0x230] sm:$0xf]
        %v393 = vld [vmem:[%s2 + $0x234] sm:$0xf]
        %v394 = vld [vmem:[%s2 + $0x238] sm:$0xf]
        %v395 = vld [vmem:[%s2 + $0x23c] sm:$0xf]
        %v396 = vld [vmem:[%s2 + $0x240] sm:$0xf]
        %v397 = vld [vmem:[%s2 + $0x244] sm:$0xf]
        %v398 = vld [vmem:[%s2 + $0x248] sm:$0xf]
        %v399 = vld [vmem:[%s2 + $0x24c] sm:$0xf]
        %v400 = vld [vmem:[%s2 + $0x250] sm:$0xf]
        %v401 = vld [vmem:[%s2 + $0x254] sm:$0xf]
        %v402 = vld [vmem:[%s2 + $0x258] sm:$0xf]
        %v403 = vld [vmem:[%s2 + $0x25c] sm:$0xf]
        %v404 = vld [vmem:[%s2 + $0x260] sm:$0xf]
        %v405 = vld [vmem:[%s2 + $0x264] sm:$0xf]
        %v406 = vld [vmem:[%s2 + $0x268] sm:$0xf]
        %v407 = vld [vmem:[%s2 + $0x26c] sm:$0xf]
        %v408 = vld [vmem:[%s2 + $0x270] sm:$0xf]
        %v409 = vld [vmem:[%s2 + $0x274] sm:$0xf]
        %v410 = vld [vmem:[%s2 + $0x278] sm:$0xf]
        %v411 = vld [vmem:[%s2 + $0x27c] sm:$0xf]
        %v412 = vld [vmem:[%s2 + $0x280] sm:$0xf]
        %v413 = vld [vmem:[%s2 + $0x284] sm:$0xf]
        %v414 = vld [vmem:[%s2 + $0x288] sm:$0xf]
        %v415 = vld [vmem:[%s2 + $0x28c] sm:$0xf]
        %v416 = vld [vmem:[%s2 + $0x290] sm:$0xf]
        %v417 = vld [vmem:[%s2 + $0x294] sm:$0xf]
        %v418 = vld [vmem:[%s2 + $0x298] sm:$0xf]
        %v419 = vld [vmem:[%s2 + $0x29c] sm:$0xf]
        %v420 = vld [vmem:[%s2 + $0x2a0] sm:$0xf]
        %v421 = vld [vmem:[%s2 + $0x2a4] sm:$0xf]
        %v422 = vld [vmem:[%s2 + $0x2a8] sm:$0xf]
        %v423 = vld [vmem:[%s2 + $0x2ac] sm:$0xf]
        %v424 = vld [vmem:[%s2 + $0x2b0] sm:$0xf]
        %v425 = vld [vmem:[%s2 + $0x2b4] sm:$0xf]
        %v426 = vld [vmem:[%s2 + $0x2b8] sm:$0xf]
        %v427 = vld [vmem:[%s2 + $0x2bc] sm:$0xf]
        %v428 = vld [vmem:[%s2 + $0x2c0] sm:$0xf]
        %v429 = vld [vmem:[%s2 + $0x2c4] sm:$0xf]
        %v430 = vld [vmem:[%s2 + $0x2c8] sm:$0xf]
        %v431 = vld [vmem:[%s2 + $0x2cc] sm:$0xf]
        %v432 = vld [vmem:[%s2 + $0x2d0] sm:$0xf]
        %v433 = vld [vmem:[%s2 + $0x2d4] sm:$0xf]
        %v434 = vld [vmem:[%s2 + $0x2d8] sm:$0xf]
        %v435 = vld [vmem:[%s2 + $0x2dc] sm:$0xf]
        %v436 = vld [vmem:[%s2 + $0x2e0] sm:$0xf]
        %v437 = vld [vmem:[%s2 + $0x2e4] sm:$0xf]
        %v438 = vld [vmem:[%s2 + $0x2e8] sm:$0xf]
        %v439 = vld [vmem:[%s2 + $0x2ec] sm:$0xf]
        %v440 = vld [vmem:[%s2 + $0x2f0] sm:$0xf]
        %v441 = vld [vmem:[%s2 + $0x2f4] sm:$0xf]
        %v442 = vld [vmem:[%s2 + $0x2f8] sm:$0xf]
        %v443 = vld [vmem:[%s2 + $0x2fc] sm:$0xf]
        %v444 = vld [vmem:[%s2 + $0x300] sm:$0xf]
        %v445 = vld [vmem:[%s2 + $0x304] sm:$0xf]
        %v446 = vld [vmem:[%s2 + $0x308] sm:$0xf]
        %v447 = vld [vmem:[%s2 + $0x30c] sm:$0xf]
        %v448 = vld [vmem:[%s2 + $0x310] sm:$0xf]
        %v449 = vld [vmem:[%s2 + $0x314] sm:$0xf]
        %v450 = vld [vmem:[%s2 + $0x318] sm:$0xf]
        %v451 = vld [vmem:[%s2 + $0x31c] sm:$0xf]
        %v452 = vld [vmem:[%s2 + $0x320] sm:$0xf]
        %v453 = vld [vmem:[%s2 + $0x324] sm:$0xf]
        %v454 = vld [vmem:[%s2 + $0x328] sm:$0xf]
        %v455 = vld [vmem:[%s2 + $0x32c] sm:$0xf]
        %v456 = vld [vmem:[%s2 + $0x330] sm:$0xf]
        %v457 = vld [vmem:[%s2 + $0x334] sm:$0xf]
        %v458 = vld [vmem:[%s2 + $0x338] sm:$0xf]
        %v459 = vld [vmem:[%s2 + $0x33c] sm:$0xf]
        %v460 = vld [vmem:[%s2 + $0x340] sm:$0xf]
        %v461 = vld [vmem:[%s2 + $0x344] sm:$0xf]
        %v462 = vld [vmem:[%s2 + $0x348] sm:$0xf]
        %v463 = vld [vmem:[%s2 + $0x34c] sm:$0xf]
        %v464 = vld [vmem:[%s2 + $0x350] sm:$0xf]
        %v465 = vld [vmem:[%s2 + $0x354] sm:$0xf]
        %v466 = vld [vmem:[%s2 + $0x358] sm:$0xf]
        %v467 = vld [vmem:[%s2 + $0x35c] sm:$0xf]
        %v468 = vld [vmem:[%s2 + $0x360] sm:$0xf]
        %v469 = vld [vmem:[%s2 + $0x364] sm:$0xf]
        %v470 = vld [vmem:[%s2 + $0x368] sm:$0xf]
        %v471 = vld [vmem:[%s2 + $0x36c] sm:$0xf]
        %v472 = vld [vmem:[%s2 + $0x370] sm:$0xf]
        %v473 = vld [vmem:[%s2 + $0x374] sm:$0xf]
        %v474 = vld [vmem:[%s2 + $0x378] sm:$0xf]
        %v475 = vld [vmem:[%s2 + $0x37c] sm:$0xf]
        %v476 = vld [vmem:[%s2 + $0x380] sm:$0xf]
        %v477 = vld [vmem:[%s2 + $0x384] sm:$0xf]
        %v478 = vld [vmem:[%s2 + $0x388] sm:$0xf]
        %v479 = vld [vmem:[%s2 + $0x38c] sm:$0xf]
        %v480 = vld [vmem:[%s2 + $0x390] sm:$0xf]
        %v481 = vld [vmem:[%s2 + $0x394] sm:$0xf]
        %v482 = vld [vmem:[%s2 + $0x398] sm:$0xf]
        %v483 = vld [vmem:[%s2 + $0x39c] sm:$0xf]
        %v484 = vld [vmem:[%s2 + $0x3a0] sm:$0xf]
        %v485 = vld [vmem:[%s2 + $0x3a4] sm:$0xf]
        %v486 = vld [vmem:[%s2 + $0x3a8] sm:$0xf]
        %v487 = vld [vmem:[%s2 + $0x3ac] sm:$0xf]
        %v488 = vld [vmem:[%s2 + $0x3b0] sm:$0xf]
        %v489 = vld [vmem:[%s2 + $0x3b4] sm:$0xf]
        %v490 = vld [vmem:[%s2 + $0x3b8] sm:$0xf]
        %v491 = vld [vmem:[%s2 + $0x3bc] sm:$0xf]
        %v492 = vld [vmem:[%s2 + $0x3c0] sm:$0xf]
        %v493 = vld [vmem:[%s2 + $0x3c4] sm:$0xf]
        %v494 = vld [vmem:[%s2 + $0x3c8] sm:$0xf]
        %v495 = vld [vmem:[%s2 + $0x3cc] sm:$0xf]
        %v496 = vld [vmem:[%s2 + $0x3d0] sm:$0xf]
        %v497 = vld [vmem:[%s2 + $0x3d4] sm:$0xf]
        %v498 = vld [vmem:[%s2 + $0x3d8] sm:$0xf]
        %v499 = vld [vmem:[%s2 + $0x3dc] sm:$0xf]
        %v500 = vld [vmem:[%s2 + $0x3e0] sm:$0xf]
        %v501 = vld [vmem:[%s2 + $0x3e4] sm:$0xf]
        %v502 = vld [vmem:[%s2 + $0x3e8] sm:$0xf]
        %v503 = vld [vmem:[%s2 + $0x3ec] sm:$0xf]
        %v504 = vld [vmem:[%s2 + $0x3f0] sm:$0xf]
        %v505 = vld [vmem:[%s2 + $0x3f4] sm:$0xf]
        %v506 = vld [vmem:[%s2 + $0x3f8] sm:$0xf]
        %v507 = vld [vmem:[%s2 + $0x3fc] sm:$0xf]
        %v508 = vld [vmem:[%s2 + $0x400] sm:$0xf]
        %v509 = vld [vmem:[%s2 + $0x404] sm:$0xf]
        %v510 = vld [vmem:[%s2 + $0x408] sm:$0xf]
        %v511 = vld [vmem:[%s2 + $0x40c] sm:$0xf]
        %v512 = vld [vmem:[%s2 + $0x410] sm:$0xf]
        %v513 = vld [vmem:[%s2 + $0x414] sm:$0xf]
        %v514 = vld [vmem:[%s2 + $0x418] sm:$0xf]
        %v515 = vld [vmem:[%s2 + $0x41c] sm:$0xf]
        %v516 = vld [vmem:[%s2 + $0x420] sm:$0xf]
        %v517 = vld [vmem:[%s2 + $0x424] sm:$0xf]
        %v518 = vld [vmem:[%s2 + $0x428] sm:$0xf]
        %v519 = vld [vmem:[%s2 + $0x42c] sm:$0xf]
        %v520 = vld [vmem:[%s2 + $0x430] sm:$0xf]
        %v521 = vld [vmem:[%s2 + $0x434] sm:$0xf]
        %v522 = vld [vmem:[%s2 + $0x438] sm:$0xf]
        %v523 = vld [vmem:[%s2 + $0x43c] sm:$0xf]
        %v524 = vld [vmem:[%s2 + $0x440] sm:$0xf]
        %v525 = vld [vmem:[%s2 + $0x444] sm:$0xf]
        %v526 = vld [vmem:[%s2 + $0x448] sm:$0xf]
        %v527 = vld [vmem:[%s2 + $0x44c] sm:$0xf]
        %v528 = vld [vmem:[%s2 + $0x450] sm:$0xf]
        %v529 = vld [vmem:[%s2 + $0x454] sm:$0xf]
        %v530 = vld [vmem:[%s2 + $0x458] sm:$0xf]
        %v531 = vld [vmem:[%s2 + $0x45c] sm:$0xf]
        %v532 = vld [vmem:[%s2 + $0x460] sm:$0xf]
        %v533 = vld [vmem:[%s2 + $0x464] sm:$0xf]
        %v534 = vld [vmem:[%s2 + $0x468] sm:$0xf]
        %v535 = vld [vmem:[%s2 + $0x46c] sm:$0xf]
        %v536 = vld [vmem:[%s2 + $0x470] sm:$0xf]
        %v537 = vld [vmem:[%s2 + $0x474] sm:$0xf]
        %v538 = vld [vmem:[%s2 + $0x478] sm:$0xf]
        %v539 = vld [vmem:[%s2 + $0x47c] sm:$0xf]
        %v540 = vld [vmem:[%s2 + $0x480] sm:$0xf]
        %v541 = vld [vmem:[%s2 + $0x484] sm:$0xf]
        %v542 = vld [vmem:[%s2 + $0x488] sm:$0xf]
        %v543 = vld [vmem:[%s2 + $0x48c] sm:$0xf]
        %v544 = vld [vmem:[%s2 + $0x490] sm:$0xf]
        %v545 = vld [vmem:[%s2 + $0x494] sm:$0xf]
        %v546 = vld [vmem:[%s2 + $0x498] sm:$0xf]
        %v547 = vld [vmem:[%s2 + $0x49c] sm:$0xf]
        %v548 = vld [vmem:[%s2 + $0x4a0] sm:$0xf]
        %v549 = vld [vmem:[%s2 + $0x4a4] sm:$0xf]
        %v550 = vld [vmem:[%s2 + $0x4a8] sm:$0xf]
        %v551 = vld [vmem:[%s2 + $0x4ac] sm:$0xf]
        %v552 = vld [vmem:[%s2 + $0x4b0] sm:$0xf]
        %v553 = vld [vmem:[%s2 + $0x4b4] sm:$0xf]
        %v554 = vld [vmem:[%s2 + $0x4b8] sm:$0xf]
        %v555 = vld [vmem:[%s2 + $0x4bc] sm:$0xf]
        %v556 = vld [vmem:[%s2 + $0x4c0] sm:$0xf]
        %v557 = vld [vmem:[%s2 + $0x4c4] sm:$0xf]
        %v558 = vld [vmem:[%s2 + $0x4c8] sm:$0xf]
        %v559 = vld [vmem:[%s2 + $0x4cc] sm:$0xf]
        %v560 = vld [vmem:[%s2 + $0x4d0] sm:$0xf]
        %v561 = vld [vmem:[%s2 + $0x4d4] sm:$0xf]
        %v562 = vld [vmem:[%s2 + $0x4d8] sm:$0xf]
        %v563 = vld [vmem:[%s2 + $0x4dc] sm:$0xf]
        %v564 = vld [vmem:[%s2 + $0x4e0] sm:$0xf]
        %v565 = vld [vmem:[%s2 + $0x4e4] sm:$0xf]
        %v566 = vld [vmem:[%s2 + $0x4e8] sm:$0xf]
        %v567 = vld [vmem:[%s2 + $0x4ec] sm:$0xf]
        %v568 = vld [vmem:[%s2 + $0x4f0] sm:$0xf]
        %v569 = vld [vmem:[%s2 + $0x4f4] sm:$0xf]
        %v570 = vld [vmem:[%s2 + $0x4f8] sm:$0xf]
        %v571 = vld [vmem:[%s2 + $0x4fc] sm:$0xf]
        %v572 = vld [vmem:[%s2 + $0x500] sm:$0xf]
        %v573 = vld [vmem:[%s2 + $0x504] sm:$0xf]
        %v574 = vld [vmem:[%s2 + $0x508] sm:$0xf]
        %v575 = vld [vmem:[%s2 + $0x50c] sm:$0xf]
        %v576 = vld [vmem:[%s2 + $0x510] sm:$0xf]
        %v577 = vld [vmem:[%s2 + $0x514] sm:$0xf]
        %v578 = vld [vmem:[%s2 + $0x518] sm:$0xf]
        %v579 = vld [vmem:[%s2 + $0x51c] sm:$0xf]
        %v580 = vld [vmem:[%s2 + $0x520] sm:$0xf]
        %v581 = vld [vmem:[%s2 + $0x524] sm:$0xf]
        %v582 = vld [vmem:[%s2 + $0x528] sm:$0xf]
        %v583 = vld [vmem:[%s2 + $0x52c] sm:$0xf]
        %v584 = vld [vmem:[%s2 + $0x530] sm:$0xf]
        %v585 = vld [vmem:[%s2 + $0x534] sm:$0xf]
        %v586 = vld [vmem:[%s2 + $0x538] sm:$0xf]
        %v587 = vld [vmem:[%s2 + $0x53c] sm:$0xf]
        %v588 = vld [vmem:[%s2 + $0x540] sm:$0xf]
        %v589 = vld [vmem:[%s2 + $0x544] sm:$0xf]
        %v590 = vld [vmem:[%s2 + $0x548] sm:$0xf]
        %v591 = vld [vmem:[%s2 + $0x54c] sm:$0xf]
        %v592 = vld [vmem:[%s2 + $0x550] sm:$0xf]
        %v593 = vld [vmem:[%s2 + $0x554] sm:$0xf]
        %v594 = vld [vmem:[%s2 + $0x558] sm:$0xf]
        %v595 = vld [vmem:[%s2 + $0x55c] sm:$0xf]
        %v596 = vld [vmem:[%s2 + $0x560] sm:$0xf]
        %v597 = vld [vmem:[%s2 + $0x564] sm:$0xf]
        %v598 = vld [vmem:[%s2 + $0x568] sm:$0xf]
        %v599 = vld [vmem:[%s2 + $0x56c] sm:$0xf]
        %v600 = vld [vmem:[%s2 + $0x570] sm:$0xf]
        %v601 = vld [vmem:[%s2 + $0x574] sm:$0xf]
        %v602 = vld [vmem:[%s2 + $0x578] sm:$0xf]
        %v603 = vld [vmem:[%s2 + $0x57c] sm:$0xf]
        %v604 = vld [vmem:[%s2 + $0x580] sm:$0xf]
        %v605 = vld [vmem:[%s2 + $0x584] sm:$0xf]
        %v606 = vld [vmem:[%s2 + $0x588] sm:$0xf]
        %v607 = vld [vmem:[%s2 + $0x58c] sm:$0xf]
        %v608 = vld [vmem:[%s2 + $0x590] sm:$0xf]
        %v609 = vld [vmem:[%s2 + $0x594] sm:$0xf]
        %v610 = vld [vmem:[%s2 + $0x598] sm:$0xf]
        %v611 = vld [vmem:[%s2 + $0x59c] sm:$0xf]
        %v612 = vld [vmem:[%s2 + $0x5a0] sm:$0xf]
        %v613 = vld [vmem:[%s2 + $0x5a4] sm:$0xf]
        %v614 = vld [vmem:[%s2 + $0x5a8] sm:$0xf]
        %v615 = vld [vmem:[%s2 + $0x5ac] sm:$0xf]
        %v616 = vld [vmem:[%s2 + $0x5b0] sm:$0xf]
        %v617 = vld [vmem:[%s2 + $0x5b4] sm:$0xf]
        %v618 = vld [vmem:[%s2 + $0x5b8] sm:$0xf]
        %v619 = vld [vmem:[%s2 + $0x5bc] sm:$0xf]
        %v620 = vld [vmem:[%s2 + $0x5c0] sm:$0xf]
        %v621 = vld [vmem:[%s2 + $0x5c4] sm:$0xf]
        %v622 = vld [vmem:[%s2 + $0x5c8] sm:$0xf]
        %v623 = vld [vmem:[%s2 + $0x5cc] sm:$0xf]
        %v624 = vld [vmem:[%s2 + $0x5d0] sm:$0xf]
        %v625 = vld [vmem:[%s2 + $0x5d4] sm:$0xf]
        %v626 = vld [vmem:[%s2 + $0x5d8] sm:$0xf]
        %v627 = vld [vmem:[%s2 + $0x5dc] sm:$0xf]
        %v628 = vld [vmem:[%s2 + $0x5e0] sm:$0xf]
        %v629 = vld [vmem:[%s2 + $0x5e4] sm:$0xf]
        %v630 = vld [vmem:[%s2 + $0x5e8] sm:$0xf]
        %v631 = vld [vmem:[%s2 + $0x5ec] sm:$0xf]
        %v632 = vld [vmem:[%s2 + $0x5f0] sm:$0xf]
        %v633 = vld [vmem:[%s2 + $0x5f4] sm:$0xf]
        %v634 = vld [vmem:[%s2 + $0x5f8] sm:$0xf]
        %v635 = vld [vmem:[%s2 + $0x5fc] sm:$0xf]
        %v636 = vld [vmem:[%s2 + $0x600] sm:$0xf]
        %v637 = vld [vmem:[%s2 + $0x604] sm:$0xf]
        %v638 = vld [vmem:[%s2 + $0x608] sm:$0xf]
        %v639 = vld [vmem:[%s2 + $0x60c] sm:$0xf]
        %v640 = vld [vmem:[%s2 + $0x610] sm:$0xf]
        %v641 = vld [vmem:[%s2 + $0x614] sm:$0xf]
        %v642 = vld [vmem:[%s2 + $0x618] sm:$0xf]
        %v643 = vld [vmem:[%s2 + $0x61c] sm:$0xf]
        %v644 = vld [vmem:[%s2 + $0x620] sm:$0xf]
        %v645 = vld [vmem:[%s2 + $0x624] sm:$0xf]
        %v646 = vld [vmem:[%s2 + $0x628] sm:$0xf]
        %v647 = vld [vmem:[%s2 + $0x62c] sm:$0xf]
        %v648 = vld [vmem:[%s2 + $0x630] sm:$0xf]
        %v649 = vld [vmem:[%s2 + $0x634] sm:$0xf]
        %v650 = vld [vmem:[%s2 + $0x638] sm:$0xf]
        %v651 = vld [vmem:[%s2 + $0x63c] sm:$0xf]
        %v652 = vld [vmem:[%s2 + $0x640] sm:$0xf]
        %v653 = vld [vmem:[%s2 + $0x644] sm:$0xf]
        %v654 = vld [vmem:[%s2 + $0x648] sm:$0xf]
        %v655 = vld [vmem:[%s2 + $0x64c] sm:$0xf]
        %v656 = vld [vmem:[%s2 + $0x650] sm:$0xf]
        %v657 = vld [vmem:[%s2 + $0x654] sm:$0xf]
        %v658 = vld [vmem:[%s2 + $0x658] sm:$0xf]
        %v659 = vld [vmem:[%s2 + $0x65c] sm:$0xf]
        %v660 = vld [vmem:[%s2 + $0x660] sm:$0xf]
        %v661 = vld [vmem:[%s2 + $0x664] sm:$0xf]
        %v662 = vld [vmem:[%s2 + $0x668] sm:$0xf]
        %v663 = vld [vmem:[%s2 + $0x66c] sm:$0xf]
        %v664 = vld [vmem:[%s2 + $0x670] sm:$0xf]
        %v665 = vld [vmem:[%s2 + $0x674] sm:$0xf]
        %v666 = vld [vmem:[%s2 + $0x678] sm:$0xf]
        %v667 = vld [vmem:[%s2 + $0x67c] sm:$0xf]
        %v668 = vld [vmem:[%s2 + $0x680] sm:$0xf]
        %v669 = vld [vmem:[%s2 + $0x684] sm:$0xf]
        %v670 = vld [vmem:[%s2 + $0x688] sm:$0xf]
        %v671 = vld [vmem:[%s2 + $0x68c] sm:$0xf]
        %v672 = vld [vmem:[%s2 + $0x690] sm:$0xf]
        %v673 = vld [vmem:[%s2 + $0x694] sm:$0xf]
        %v674 = vld [vmem:[%s2 + $0x698] sm:$0xf]
        %v675 = vld [vmem:[%s2 + $0x69c] sm:$0xf]
        %v676 = vld [vmem:[%s2 + $0x6a0] sm:$0xf]
        %v677 = vld [vmem:[%s2 + $0x6a4] sm:$0xf]
        %v678 = vld [vmem:[%s2 + $0x6a8] sm:$0xf]
        %v679 = vld [vmem:[%s2 + $0x6ac] sm:$0xf]
        %v680 = vld [vmem:[%s2 + $0x6b0] sm:$0xf]
        %v681 = vld [vmem:[%s2 + $0x6b4] sm:$0xf]
        %v682 = vld [vmem:[%s2 + $0x6b8] sm:$0xf]
        %v683 = vld [vmem:[%s2 + $0x6bc] sm:$0xf]
        %v684 = vld [vmem:[%s2 + $0x6c0] sm:$0xf]
        %v685 = vld [vmem:[%s2 + $0x6c4] sm:$0xf]
        %v686 = vld [vmem:[%s2 + $0x6c8] sm:$0xf]
        %v687 = vld [vmem:[%s2 + $0x6cc] sm:$0xf]
        %v688 = vld [vmem:[%s2 + $0x6d0] sm:$0xf]
        %v689 = vld [vmem:[%s2 + $0x6d4] sm:$0xf]
        %v690 = vld [vmem:[%s2 + $0x6d8] sm:$0xf]
        %v691 = vld [vmem:[%s2 + $0x6dc] sm:$0xf]
        %v692 = vld [vmem:[%s2 + $0x6e0] sm:$0xf]
        %v693 = vld [vmem:[%s2 + $0x6e4] sm:$0xf]
        %v694 = vld [vmem:[%s2 + $0x6e8] sm:$0xf]
        %v695 = vld [vmem:[%s2 + $0x6ec] sm:$0xf]
        %v696 = vld [vmem:[%s2 + $0x6f0] sm:$0xf]
        %v697 = vld [vmem:[%s2 + $0x6f4] sm:$0xf]
        %v698 = vld [vmem:[%s2 + $0x6f8] sm:$0xf]
        %v699 = vld [vmem:[%s2 + $0x6fc] sm:$0xf]
        %v700 = vld [vmem:[%s2 + $0x700] sm:$0xf]
        %v701 = vld [vmem:[%s2 + $0x704] sm:$0xf]
        %v702 = vld [vmem:[%s2 + $0x708] sm:$0xf]
        %v703 = vld [vmem:[%s2 + $0x70c] sm:$0xf]
        %v704 = vld [vmem:[%s2 + $0x710] sm:$0xf]
        %v705 = vld [vmem:[%s2 + $0x714] sm:$0xf]
        %v706 = vld [vmem:[%s2 + $0x718] sm:$0xf]
        %v707 = vld [vmem:[%s2 + $0x71c] sm:$0xf]
        %v708 = vld [vmem:[%s2 + $0x720] sm:$0xf]
        %v709 = vld [vmem:[%s2 + $0x724] sm:$0xf]
        %v710 = vld [vmem:[%s2 + $0x728] sm:$0xf]
        %v711 = vld [vmem:[%s2 + $0x72c] sm:$0xf]
        %v712 = vld [vmem:[%s2 + $0x730] sm:$0xf]
        %v713 = vld [vmem:[%s2 + $0x734] sm:$0xf]
        %v714 = vld [vmem:[%s2 + $0x738] sm:$0xf]
        %v715 = vld [vmem:[%s2 + $0x73c] sm:$0xf]
        %v716 = vld [vmem:[%s2 + $0x740] sm:$0xf]
        %v717 = vld [vmem:[%s2 + $0x744] sm:$0xf]
        %v718 = vld [vmem:[%s2 + $0x748] sm:$0xf]
        %v719 = vld [vmem:[%s2 + $0x74c] sm:$0xf]
        %v720 = vld [vmem:[%s2 + $0x750] sm:$0xf]
        %v721 = vld [vmem:[%s2 + $0x754] sm:$0xf]
        %v722 = vld [vmem:[%s2 + $0x758] sm:$0xf]
        %v723 = vld [vmem:[%s2 + $0x75c] sm:$0xf]
        %v724 = vld [vmem:[%s2 + $0x760] sm:$0xf]
        %v725 = vld [vmem:[%s2 + $0x764] sm:$0xf]
        %v726 = vld [vmem:[%s2 + $0x768] sm:$0xf]
        %v727 = vld [vmem:[%s2 + $0x76c] sm:$0xf]
        %v728 = vld [vmem:[%s2 + $0x770] sm:$0xf]
        %v729 = vld [vmem:[%s2 + $0x774] sm:$0xf]
        %v730 = vld [vmem:[%s2 + $0x778] sm:$0xf]
        %v731 = vld [vmem:[%s2 + $0x77c] sm:$0xf]
        %v732 = vld [vmem:[%s2 + $0x780] sm:$0xf]
        %v733 = vld [vmem:[%s2 + $0x784] sm:$0xf]
        %v734 = vld [vmem:[%s2 + $0x788] sm:$0xf]
        %v735 = vld [vmem:[%s2 + $0x78c] sm:$0xf]
        %v736 = vld [vmem:[%s2 + $0x790] sm:$0xf]
        %v737 = vld [vmem:[%s2 + $0x794] sm:$0xf]
        %v738 = vld [vmem:[%s2 + $0x798] sm:$0xf]
        %v739 = vld [vmem:[%s2 + $0x79c] sm:$0xf]
        %v740 = vld [vmem:[%s2 + $0x7a0] sm:$0xf]
        %v741 = vld [vmem:[%s2 + $0x7a4] sm:$0xf]
        %v742 = vld [vmem:[%s2 + $0x7a8] sm:$0xf]
        %v743 = vld [vmem:[%s2 + $0x7ac] sm:$0xf]
        %v744 = vld [vmem:[%s2 + $0x7b0] sm:$0xf]
        %v745 = vld [vmem:[%s2 + $0x7b4] sm:$0xf]
        %v746 = vld [vmem:[%s2 + $0x7b8] sm:$0xf]
        %v747 = vld [vmem:[%s2 + $0x7bc] sm:$0xf]
        %v748 = vld [vmem:[%s2 + $0x7c0] sm:$0xf]
        %v749 = vld [vmem:[%s2 + $0x7c4] sm:$0xf]
        %v750 = vld [vmem:[%s2 + $0x7c8] sm:$0xf]
        %v751 = vld [vmem:[%s2 + $0x7cc] sm:$0xf]
        %v752 = vld [vmem:[%s2 + $0x7d0] sm:$0xf]
        %v753 = vld [vmem:[%s2 + $0x7d4] sm:$0xf]
        %v754 = vld [vmem:[%s2 + $0x7d8] sm:$0xf]
        %v755 = vld [vmem:[%s2 + $0x7dc] sm:$0xf]
        %v756 = vld [vmem:[%s2 + $0x7e0] sm:$0xf]
        %v757 = vld [vmem:[%s2 + $0x7e4] sm:$0xf]
        %v758 = vld [vmem:[%s2 + $0x7e8] sm:$0xf]
        %v759 = vld [vmem:[%s2 + $0x7ec] sm:$0xf]
        %v760 = vld [vmem:[%s2 + $0x7f0] sm:$0xf]
        %v761 = vld [vmem:[%s2 + $0x7f4] sm:$0xf]
        %v762 = vld [vmem:[%s2 + $0x7f8] sm:$0xf]
        %v763 = vld [vmem:[%s2 + $0x7fc] sm:$0xf]
        %v764 = vld [vmem:[%s250] sm:$0xff]
        %v765 = vld [vmem:[%s250 + $0x8] sm:$0xff]
        %v766 = vld [vmem:[%s250 + $0x10] sm:$0xff]
        %v767 = vld [vmem:[%s250 + $0x18] sm:$0xff]
        %v768 = vld [vmem:[%s250 + $0x20] sm:$0xff]
        %v769 = vld [vmem:[%s250 + $0x28] sm:$0xff]
        %v770 = vld [vmem:[%s250 + $0x30] sm:$0xff]
        %v771 = vld [vmem:[%s250 + $0x38] sm:$0xff]
        %v772 = vld [vmem:[%s250 + $0x40] sm:$0xff]
        %v773 = vld [vmem:[%s250 + $0x48] sm:$0xff]
        %v774 = vld [vmem:[%s250 + $0x50] sm:$0xff]
        %v775 = vld [vmem:[%s250 + $0x58] sm:$0xff]
        %v776 = vld [vmem:[%s250 + $0x60] sm:$0xff]
        %v777 = vld [vmem:[%s250 + $0x68] sm:$0xff]
        %v778 = vld [vmem:[%s250 + $0x70] sm:$0xff]
        %v779 = vld [vmem:[%s250 + $0x78] sm:$0xff]
        %v780 = vld [vmem:[%s250 + $0x80] sm:$0xff]
        %v781 = vld [vmem:[%s250 + $0x88] sm:$0xff]
        %v782 = vld [vmem:[%s250 + $0x90] sm:$0xff]
        %v783 = vld [vmem:[%s250 + $0x98] sm:$0xff]
        %v784 = vld [vmem:[%s250 + $0xa0] sm:$0xff]
        %v785 = vld [vmem:[%s250 + $0xa8] sm:$0xff]
        %v786 = vld [vmem:[%s250 + $0xb0] sm:$0xff]
        %v787 = vld [vmem:[%s250 + $0xb8] sm:$0xff]
        %v788 = vld [vmem:[%s250 + $0xc0] sm:$0xff]
        %v789 = vld [vmem:[%s250 + $0xc8] sm:$0xff]
        %v790 = vld [vmem:[%s250 + $0xd0] sm:$0xff]
        %v791 = vld [vmem:[%s250 + $0xd8] sm:$0xff]
        %v792 = vld [vmem:[%s250 + $0xe0] sm:$0xff]
        %v793 = vld [vmem:[%s250 + $0xe8] sm:$0xff]
        %v794 = vld [vmem:[%s250 + $0xf0] sm:$0xff]
        %v795 = vld [vmem:[%s250 + $0xf8] sm:$0xff]
        %v796 = vpack.c.bf16 %v765, %v764
        %v797 = vpack.c.bf16 %v767, %v766
        %v798 = vpack.c.bf16 %v769, %v768
        %v799 = vpack.c.bf16 %v771, %v770
        %v800 = vpack.c.bf16 %v773, %v772
        %v801 = vpack.c.bf16 %v775, %v774
        %v802 = vpack.c.bf16 %v777, %v776
        %v803 = vpack.c.bf16 %v779, %v778
        %v804 = vpack.c.bf16 %v781, %v780
        %v805 = vpack.c.bf16 %v783, %v782
        %v806 = vpack.c.bf16 %v785, %v784
        %v807 = vpack.c.bf16 %v787, %v786
        %v808 = vpack.c.bf16 %v789, %v788
        %v809 = vpack.c.bf16 %v791, %v790
        %v810 = vpack.c.bf16 %v793, %v792
        %v811 = vpack.c.bf16 %v795, %v794
        %v812 = vunpack.c.l.bf16 %v796
        %v813 = vunpack.c.h.bf16 %v796
        %v814 = vunpack.c.l.bf16 %v797
        %v815 = vunpack.c.h.bf16 %v797
        %v816 = vunpack.c.l.bf16 %v798
        %v817 = vunpack.c.h.bf16 %v798
        %v818 = vunpack.c.l.bf16 %v799
        %v819 = vunpack.c.h.bf16 %v799
        %v820 = vunpack.c.l.bf16 %v800
        %v821 = vunpack.c.h.bf16 %v800
        %v822 = vunpack.c.l.bf16 %v801
        %v823 = vunpack.c.h.bf16 %v801
        %v824 = vunpack.c.l.bf16 %v802
        %v825 = vunpack.c.h.bf16 %v802
        %v826 = vunpack.c.l.bf16 %v803
        %v827 = vunpack.c.h.bf16 %v803
        %v828 = vunpack.c.l.bf16 %v804
        %v829 = vunpack.c.h.bf16 %v804
        %v830 = vunpack.c.l.bf16 %v805
        %v831 = vunpack.c.h.bf16 %v805
        %v832 = vunpack.c.l.bf16 %v806
        %v833 = vunpack.c.h.bf16 %v806
        %v834 = vunpack.c.l.bf16 %v807
        %v835 = vunpack.c.h.bf16 %v807
        %v836 = vunpack.c.l.bf16 %v808
        %v837 = vunpack.c.h.bf16 %v808
        %v838 = vunpack.c.l.bf16 %v809
        %v839 = vunpack.c.h.bf16 %v809
        %v840 = vunpack.c.l.bf16 %v810
        %v841 = vunpack.c.h.bf16 %v810
        %v842 = vunpack.c.l.bf16 %v811
        %v843 = vunpack.c.h.bf16 %v811
        %v844 = vsub.f32 %v764, %v812
        %v845 = vsub.f32 %v765, %v813
        %v846 = vsub.f32 %v766, %v814
        %v847 = vsub.f32 %v767, %v815
        %v848 = vsub.f32 %v768, %v816
        %v849 = vsub.f32 %v769, %v817
        %v850 = vsub.f32 %v770, %v818
        %v851 = vsub.f32 %v771, %v819
        %v852 = vsub.f32 %v772, %v820
        %v853 = vsub.f32 %v773, %v821
        %v854 = vsub.f32 %v774, %v822
        %v855 = vsub.f32 %v775, %v823
        %v856 = vsub.f32 %v776, %v824
        %v857 = vsub.f32 %v777, %v825
        %v858 = vsub.f32 %v778, %v826
        %v859 = vsub.f32 %v779, %v827
        %v860 = vsub.f32 %v780, %v828
        %v861 = vsub.f32 %v781, %v829
        %v862 = vsub.f32 %v782, %v830
        %v863 = vsub.f32 %v783, %v831
        %v864 = vsub.f32 %v784, %v832
        %v865 = vsub.f32 %v785, %v833
        %v866 = vsub.f32 %v786, %v834
        %v867 = vsub.f32 %v787, %v835
        %v868 = vsub.f32 %v788, %v836
        %v869 = vsub.f32 %v789, %v837
        %v870 = vsub.f32 %v790, %v838
        %v871 = vsub.f32 %v791, %v839
        %v872 = vsub.f32 %v792, %v840
        %v873 = vsub.f32 %v793, %v841
        %v874 = vsub.f32 %v794, %v842
        %v875 = vsub.f32 %v795, %v843
        %v876 = vpack.c.bf16 %v844, %v844
        %v877 = vpack.c.bf16 %v845, %v845
        %v878 = vpack.c.bf16 %v846, %v846
        %v879 = vpack.c.bf16 %v847, %v847
        %v880 = vpack.c.bf16 %v848, %v848
        %v881 = vpack.c.bf16 %v849, %v849
        %v882 = vpack.c.bf16 %v850, %v850
        %v883 = vpack.c.bf16 %v851, %v851
        %v884 = vpack.c.bf16 %v852, %v852
        %v885 = vpack.c.bf16 %v853, %v853
        %v886 = vpack.c.bf16 %v854, %v854
        %v887 = vpack.c.bf16 %v855, %v855
        %v888 = vpack.c.bf16 %v856, %v856
        %v889 = vpack.c.bf16 %v857, %v857
        %v890 = vpack.c.bf16 %v858, %v858
        %v891 = vpack.c.bf16 %v859, %v859
        %v892 = vpack.c.bf16 %v860, %v860
        %v893 = vpack.c.bf16 %v861, %v861
        %v894 = vpack.c.bf16 %v862, %v862
        %v895 = vpack.c.bf16 %v863, %v863
        %v896 = vpack.c.bf16 %v864, %v864
        %v897 = vpack.c.bf16 %v865, %v865
        %v898 = vpack.c.bf16 %v866, %v866
        %v899 = vpack.c.bf16 %v867, %v867
        %v900 = vpack.c.bf16 %v868, %v868
        %v901 = vpack.c.bf16 %v869, %v869
        %v902 = vpack.c.bf16 %v870, %v870
        %v903 = vpack.c.bf16 %v871, %v871
        %v904 = vpack.c.bf16 %v872, %v872
        %v905 = vpack.c.bf16 %v873, %v873
        %v906 = vpack.c.bf16 %v874, %v874
        %v907 = vpack.c.bf16 %v875, %v875
        %v1420 = vunpack.c.l.b16 %v252
        %v1421 = vunpack.c.l.b16 %v253
        %v1422 = vunpack.c.l.b16 %v254
        %v1423 = vunpack.c.l.b16 %v255
        %v1424 = vunpack.c.l.b16 %v256
        %v1425 = vunpack.c.l.b16 %v257
        %v1426 = vunpack.c.l.b16 %v258
        %v1427 = vunpack.c.l.b16 %v259
        %v1428 = vunpack.c.l.b16 %v260
        %v1429 = vunpack.c.l.b16 %v261
        %v1430 = vunpack.c.l.b16 %v262
        %v1431 = vunpack.c.l.b16 %v263
        %v1432 = vunpack.c.l.b16 %v264
        %v1433 = vunpack.c.l.b16 %v265
        %v1434 = vunpack.c.l.b16 %v266
        %v1435 = vunpack.c.l.b16 %v267
        %v1436 = vunpack.c.l.b16 %v268
        %v1437 = vunpack.c.l.b16 %v269
        %v1438 = vunpack.c.l.b16 %v270
        %v1439 = vunpack.c.l.b16 %v271
        %v1440 = vunpack.c.l.b16 %v272
        %v1441 = vunpack.c.l.b16 %v273
        %v1442 = vunpack.c.l.b16 %v274
        %v1443 = vunpack.c.l.b16 %v275
        %v1444 = vunpack.c.l.b16 %v276
        %v1445 = vunpack.c.l.b16 %v277
        %v1446 = vunpack.c.l.b16 %v278
        %v1447 = vunpack.c.l.b16 %v279
        %v1448 = vunpack.c.l.b16 %v280
        %v1449 = vunpack.c.l.b16 %v281
        %v1450 = vunpack.c.l.b16 %v282
        %v1451 = vunpack.c.l.b16 %v283
        %v1452 = vunpack.c.l.b16 %v284
        %v1453 = vunpack.c.l.b16 %v285
        %v1454 = vunpack.c.l.b16 %v286
        %v1455 = vunpack.c.l.b16 %v287
        %v1456 = vunpack.c.l.b16 %v288
        %v1457 = vunpack.c.l.b16 %v289
        %v1458 = vunpack.c.l.b16 %v290
        %v1459 = vunpack.c.l.b16 %v291
        %v1460 = vunpack.c.l.b16 %v292
        %v1461 = vunpack.c.l.b16 %v293
        %v1462 = vunpack.c.l.b16 %v294
        %v1463 = vunpack.c.l.b16 %v295
        %v1464 = vunpack.c.l.b16 %v296
        %v1465 = vunpack.c.l.b16 %v297
        %v1466 = vunpack.c.l.b16 %v298
        %v1467 = vunpack.c.l.b16 %v299
        %v1468 = vunpack.c.l.b16 %v300
        %v1469 = vunpack.c.l.b16 %v301
        %v1470 = vunpack.c.l.b16 %v302
        %v1471 = vunpack.c.l.b16 %v303
        %v1472 = vunpack.c.l.b16 %v304
        %v1473 = vunpack.c.l.b16 %v305
        %v1474 = vunpack.c.l.b16 %v306
        %v1475 = vunpack.c.l.b16 %v307
        %v1476 = vunpack.c.l.b16 %v308
        %v1477 = vunpack.c.l.b16 %v309
        %v1478 = vunpack.c.l.b16 %v310
        %v1479 = vunpack.c.l.b16 %v311
        %v1480 = vunpack.c.l.b16 %v312
        %v1481 = vunpack.c.l.b16 %v313
        %v1482 = vunpack.c.l.b16 %v314
        %v1483 = vunpack.c.l.b16 %v315
        %v1484 = vunpack.c.l.b16 %v316
        %v1485 = vunpack.c.l.b16 %v317
        %v1486 = vunpack.c.l.b16 %v318
        %v1487 = vunpack.c.l.b16 %v319
        %v1488 = vunpack.c.l.b16 %v320
        %v1489 = vunpack.c.l.b16 %v321
        %v1490 = vunpack.c.l.b16 %v322
        %v1491 = vunpack.c.l.b16 %v323
        %v1492 = vunpack.c.l.b16 %v324
        %v1493 = vunpack.c.l.b16 %v325
        %v1494 = vunpack.c.l.b16 %v326
        %v1495 = vunpack.c.l.b16 %v327
        %v1496 = vunpack.c.l.b16 %v328
        %v1497 = vunpack.c.l.b16 %v329
        %v1498 = vunpack.c.l.b16 %v330
        %v1499 = vunpack.c.l.b16 %v331
        %v1500 = vunpack.c.l.b16 %v332
        %v1501 = vunpack.c.l.b16 %v333
        %v1502 = vunpack.c.l.b16 %v334
        %v1503 = vunpack.c.l.b16 %v335
        %v1504 = vunpack.c.l.b16 %v336
        %v1505 = vunpack.c.l.b16 %v337
        %v1506 = vunpack.c.l.b16 %v338
        %v1507 = vunpack.c.l.b16 %v339
        %v1508 = vunpack.c.l.b16 %v340
        %v1509 = vunpack.c.l.b16 %v341
        %v1510 = vunpack.c.l.b16 %v342
        %v1511 = vunpack.c.l.b16 %v343
        %v1512 = vunpack.c.l.b16 %v344
        %v1513 = vunpack.c.l.b16 %v345
        %v1514 = vunpack.c.l.b16 %v346
        %v1515 = vunpack.c.l.b16 %v347
        %v1516 = vunpack.c.l.b16 %v348
        %v1517 = vunpack.c.l.b16 %v349
        %v1518 = vunpack.c.l.b16 %v350
        %v1519 = vunpack.c.l.b16 %v351
        %v1520 = vunpack.c.l.b16 %v352
        %v1521 = vunpack.c.l.b16 %v353
        %v1522 = vunpack.c.l.b16 %v354
        %v1523 = vunpack.c.l.b16 %v355
        %v1524 = vunpack.c.l.b16 %v356
        %v1525 = vunpack.c.l.b16 %v357
        %v1526 = vunpack.c.l.b16 %v358
        %v1527 = vunpack.c.l.b16 %v359
        %v1528 = vunpack.c.l.b16 %v360
        %v1529 = vunpack.c.l.b16 %v361
        %v1530 = vunpack.c.l.b16 %v362
        %v1531 = vunpack.c.l.b16 %v363
        %v1532 = vunpack.c.l.b16 %v364
        %v1533 = vunpack.c.l.b16 %v365
        %v1534 = vunpack.c.l.b16 %v366
        %v1535 = vunpack.c.l.b16 %v367
        %v1536 = vunpack.c.l.b16 %v368
        %v1537 = vunpack.c.l.b16 %v369
        %v1538 = vunpack.c.l.b16 %v370
        %v1539 = vunpack.c.l.b16 %v371
        %v1540 = vunpack.c.l.b16 %v372
        %v1541 = vunpack.c.l.b16 %v373
        %v1542 = vunpack.c.l.b16 %v374
        %v1543 = vunpack.c.l.b16 %v375
        %v1544 = vunpack.c.l.b16 %v376
        %v1545 = vunpack.c.l.b16 %v377
        %v1546 = vunpack.c.l.b16 %v378
        %v1547 = vunpack.c.l.b16 %v379
        %v1548 = vunpack.c.l.b16 %v380
        %v1549 = vunpack.c.l.b16 %v381
        %v1550 = vunpack.c.l.b16 %v382
        %v1551 = vunpack.c.l.b16 %v383
        %v1552 = vunpack.c.l.b16 %v384
        %v1553 = vunpack.c.l.b16 %v385
        %v1554 = vunpack.c.l.b16 %v386
        %v1555 = vunpack.c.l.b16 %v387
        %v1556 = vunpack.c.l.b16 %v388
        %v1557 = vunpack.c.l.b16 %v389
        %v1558 = vunpack.c.l.b16 %v390
        %v1559 = vunpack.c.l.b16 %v391
        %v1560 = vunpack.c.l.b16 %v392
        %v1561 = vunpack.c.l.b16 %v393
        %v1562 = vunpack.c.l.b16 %v394
        %v1563 = vunpack.c.l.b16 %v395
        %v1564 = vunpack.c.l.b16 %v396
        %v1565 = vunpack.c.l.b16 %v397
        %v1566 = vunpack.c.l.b16 %v398
        %v1567 = vunpack.c.l.b16 %v399
        %v1568 = vunpack.c.l.b16 %v400
        %v1569 = vunpack.c.l.b16 %v401
        %v1570 = vunpack.c.l.b16 %v402
        %v1571 = vunpack.c.l.b16 %v403
        %v1572 = vunpack.c.l.b16 %v404
        %v1573 = vunpack.c.l.b16 %v405
        %v1574 = vunpack.c.l.b16 %v406
        %v1575 = vunpack.c.l.b16 %v407
        %v1576 = vunpack.c.l.b16 %v408
        %v1577 = vunpack.c.l.b16 %v409
        %v1578 = vunpack.c.l.b16 %v410
        %v1579 = vunpack.c.l.b16 %v411
        %v1580 = vunpack.c.l.b16 %v412
        %v1581 = vunpack.c.l.b16 %v413
        %v1582 = vunpack.c.l.b16 %v414
        %v1583 = vunpack.c.l.b16 %v415
        %v1584 = vunpack.c.l.b16 %v416
        %v1585 = vunpack.c.l.b16 %v417
        %v1586 = vunpack.c.l.b16 %v418
        %v1587 = vunpack.c.l.b16 %v419
        %v1588 = vunpack.c.l.b16 %v420
        %v1589 = vunpack.c.l.b16 %v421
        %v1590 = vunpack.c.l.b16 %v422
        %v1591 = vunpack.c.l.b16 %v423
        %v1592 = vunpack.c.l.b16 %v424
        %v1593 = vunpack.c.l.b16 %v425
        %v1594 = vunpack.c.l.b16 %v426
        %v1595 = vunpack.c.l.b16 %v427
        %v1596 = vunpack.c.l.b16 %v428
        %v1597 = vunpack.c.l.b16 %v429
        %v1598 = vunpack.c.l.b16 %v430
        %v1599 = vunpack.c.l.b16 %v431
        %v1600 = vunpack.c.l.b16 %v432
        %v1601 = vunpack.c.l.b16 %v433
        %v1602 = vunpack.c.l.b16 %v434
        %v1603 = vunpack.c.l.b16 %v435
        %v1604 = vunpack.c.l.b16 %v436
        %v1605 = vunpack.c.l.b16 %v437
        %v1606 = vunpack.c.l.b16 %v438
        %v1607 = vunpack.c.l.b16 %v439
        %v1608 = vunpack.c.l.b16 %v440
        %v1609 = vunpack.c.l.b16 %v441
        %v1610 = vunpack.c.l.b16 %v442
        %v1611 = vunpack.c.l.b16 %v443
        %v1612 = vunpack.c.l.b16 %v444
        %v1613 = vunpack.c.l.b16 %v445
        %v1614 = vunpack.c.l.b16 %v446
        %v1615 = vunpack.c.l.b16 %v447
        %v1616 = vunpack.c.l.b16 %v448
        %v1617 = vunpack.c.l.b16 %v449
        %v1618 = vunpack.c.l.b16 %v450
        %v1619 = vunpack.c.l.b16 %v451
        %v1620 = vunpack.c.l.b16 %v452
        %v1621 = vunpack.c.l.b16 %v453
        %v1622 = vunpack.c.l.b16 %v454
        %v1623 = vunpack.c.l.b16 %v455
        %v1624 = vunpack.c.l.b16 %v456
        %v1625 = vunpack.c.l.b16 %v457
        %v1626 = vunpack.c.l.b16 %v458
        %v1627 = vunpack.c.l.b16 %v459
        %v1628 = vunpack.c.l.b16 %v460
        %v1629 = vunpack.c.l.b16 %v461
        %v1630 = vunpack.c.l.b16 %v462
        %v1631 = vunpack.c.l.b16 %v463
        %v1632 = vunpack.c.l.b16 %v464
        %v1633 = vunpack.c.l.b16 %v465
        %v1634 = vunpack.c.l.b16 %v466
        %v1635 = vunpack.c.l.b16 %v467
        %v1636 = vunpack.c.l.b16 %v468
        %v1637 = vunpack.c.l.b16 %v469
        %v1638 = vunpack.c.l.b16 %v470
        %v1639 = vunpack.c.l.b16 %v471
        %v1640 = vunpack.c.l.b16 %v472
        %v1641 = vunpack.c.l.b16 %v473
        %v1642 = vunpack.c.l.b16 %v474
        %v1643 = vunpack.c.l.b16 %v475
        %v1644 = vunpack.c.l.b16 %v476
        %v1645 = vunpack.c.l.b16 %v477
        %v1646 = vunpack.c.l.b16 %v478
        %v1647 = vunpack.c.l.b16 %v479
        %v1648 = vunpack.c.l.b16 %v480
        %v1649 = vunpack.c.l.b16 %v481
        %v1650 = vunpack.c.l.b16 %v482
        %v1651 = vunpack.c.l.b16 %v483
        %v1652 = vunpack.c.l.b16 %v484
        %v1653 = vunpack.c.l.b16 %v485
        %v1654 = vunpack.c.l.b16 %v486
        %v1655 = vunpack.c.l.b16 %v487
        %v1656 = vunpack.c.l.b16 %v488
        %v1657 = vunpack.c.l.b16 %v489
        %v1658 = vunpack.c.l.b16 %v490
        %v1659 = vunpack.c.l.b16 %v491
        %v1660 = vunpack.c.l.b16 %v492
        %v1661 = vunpack.c.l.b16 %v493
        %v1662 = vunpack.c.l.b16 %v494
        %v1663 = vunpack.c.l.b16 %v495
        %v1664 = vunpack.c.l.b16 %v496
        %v1665 = vunpack.c.l.b16 %v497
        %v1666 = vunpack.c.l.b16 %v498
        %v1667 = vunpack.c.l.b16 %v499
        %v1668 = vunpack.c.l.b16 %v500
        %v1669 = vunpack.c.l.b16 %v501
        %v1670 = vunpack.c.l.b16 %v502
        %v1671 = vunpack.c.l.b16 %v503
        %v1672 = vunpack.c.l.b16 %v504
        %v1673 = vunpack.c.l.b16 %v505
        %v1674 = vunpack.c.l.b16 %v506
        %v1675 = vunpack.c.l.b16 %v507
        %v1676 = vunpack.c.l.b16 %v508
        %v1677 = vunpack.c.l.b16 %v509
        %v1678 = vunpack.c.l.b16 %v510
        %v1679 = vunpack.c.l.b16 %v511
        %v1680 = vunpack.c.l.b16 %v512
        %v1681 = vunpack.c.l.b16 %v513
        %v1682 = vunpack.c.l.b16 %v514
        %v1683 = vunpack.c.l.b16 %v515
        %v1684 = vunpack.c.l.b16 %v516
        %v1685 = vunpack.c.l.b16 %v517
        %v1686 = vunpack.c.l.b16 %v518
        %v1687 = vunpack.c.l.b16 %v519
        %v1688 = vunpack.c.l.b16 %v520
        %v1689 = vunpack.c.l.b16 %v521
        %v1690 = vunpack.c.l.b16 %v522
        %v1691 = vunpack.c.l.b16 %v523
        %v1692 = vunpack.c.l.b16 %v524
        %v1693 = vunpack.c.l.b16 %v525
        %v1694 = vunpack.c.l.b16 %v526
        %v1695 = vunpack.c.l.b16 %v527
        %v1696 = vunpack.c.l.b16 %v528
        %v1697 = vunpack.c.l.b16 %v529
        %v1698 = vunpack.c.l.b16 %v530
        %v1699 = vunpack.c.l.b16 %v531
        %v1700 = vunpack.c.l.b16 %v532
        %v1701 = vunpack.c.l.b16 %v533
        %v1702 = vunpack.c.l.b16 %v534
        %v1703 = vunpack.c.l.b16 %v535
        %v1704 = vunpack.c.l.b16 %v536
        %v1705 = vunpack.c.l.b16 %v537
        %v1706 = vunpack.c.l.b16 %v538
        %v1707 = vunpack.c.l.b16 %v539
        %v1708 = vunpack.c.l.b16 %v540
        %v1709 = vunpack.c.l.b16 %v541
        %v1710 = vunpack.c.l.b16 %v542
        %v1711 = vunpack.c.l.b16 %v543
        %v1712 = vunpack.c.l.b16 %v544
        %v1713 = vunpack.c.l.b16 %v545
        %v1714 = vunpack.c.l.b16 %v546
        %v1715 = vunpack.c.l.b16 %v547
        %v1716 = vunpack.c.l.b16 %v548
        %v1717 = vunpack.c.l.b16 %v549
        %v1718 = vunpack.c.l.b16 %v550
        %v1719 = vunpack.c.l.b16 %v551
        %v1720 = vunpack.c.l.b16 %v552
        %v1721 = vunpack.c.l.b16 %v553
        %v1722 = vunpack.c.l.b16 %v554
        %v1723 = vunpack.c.l.b16 %v555
        %v1724 = vunpack.c.l.b16 %v556
        %v1725 = vunpack.c.l.b16 %v557
        %v1726 = vunpack.c.l.b16 %v558
        %v1727 = vunpack.c.l.b16 %v559
        %v1728 = vunpack.c.l.b16 %v560
        %v1729 = vunpack.c.l.b16 %v561
        %v1730 = vunpack.c.l.b16 %v562
        %v1731 = vunpack.c.l.b16 %v563
        %v1732 = vunpack.c.l.b16 %v564
        %v1733 = vunpack.c.l.b16 %v565
        %v1734 = vunpack.c.l.b16 %v566
        %v1735 = vunpack.c.l.b16 %v567
        %v1736 = vunpack.c.l.b16 %v568
        %v1737 = vunpack.c.l.b16 %v569
        %v1738 = vunpack.c.l.b16 %v570
        %v1739 = vunpack.c.l.b16 %v571
        %v1740 = vunpack.c.l.b16 %v572
        %v1741 = vunpack.c.l.b16 %v573
        %v1742 = vunpack.c.l.b16 %v574
        %v1743 = vunpack.c.l.b16 %v575
        %v1744 = vunpack.c.l.b16 %v576
        %v1745 = vunpack.c.l.b16 %v577
        %v1746 = vunpack.c.l.b16 %v578
        %v1747 = vunpack.c.l.b16 %v579
        %v1748 = vunpack.c.l.b16 %v580
        %v1749 = vunpack.c.l.b16 %v581
        %v1750 = vunpack.c.l.b16 %v582
        %v1751 = vunpack.c.l.b16 %v583
        %v1752 = vunpack.c.l.b16 %v584
        %v1753 = vunpack.c.l.b16 %v585
        %v1754 = vunpack.c.l.b16 %v586
        %v1755 = vunpack.c.l.b16 %v587
        %v1756 = vunpack.c.l.b16 %v588
        %v1757 = vunpack.c.l.b16 %v589
        %v1758 = vunpack.c.l.b16 %v590
        %v1759 = vunpack.c.l.b16 %v591
        %v1760 = vunpack.c.l.b16 %v592
        %v1761 = vunpack.c.l.b16 %v593
        %v1762 = vunpack.c.l.b16 %v594
        %v1763 = vunpack.c.l.b16 %v595
        %v1764 = vunpack.c.l.b16 %v596
        %v1765 = vunpack.c.l.b16 %v597
        %v1766 = vunpack.c.l.b16 %v598
        %v1767 = vunpack.c.l.b16 %v599
        %v1768 = vunpack.c.l.b16 %v600
        %v1769 = vunpack.c.l.b16 %v601
        %v1770 = vunpack.c.l.b16 %v602
        %v1771 = vunpack.c.l.b16 %v603
        %v1772 = vunpack.c.l.b16 %v604
        %v1773 = vunpack.c.l.b16 %v605
        %v1774 = vunpack.c.l.b16 %v606
        %v1775 = vunpack.c.l.b16 %v607
        %v1776 = vunpack.c.l.b16 %v608
        %v1777 = vunpack.c.l.b16 %v609
        %v1778 = vunpack.c.l.b16 %v610
        %v1779 = vunpack.c.l.b16 %v611
        %v1780 = vunpack.c.l.b16 %v612
        %v1781 = vunpack.c.l.b16 %v613
        %v1782 = vunpack.c.l.b16 %v614
        %v1783 = vunpack.c.l.b16 %v615
        %v1784 = vunpack.c.l.b16 %v616
        %v1785 = vunpack.c.l.b16 %v617
        %v1786 = vunpack.c.l.b16 %v618
        %v1787 = vunpack.c.l.b16 %v619
        %v1788 = vunpack.c.l.b16 %v620
        %v1789 = vunpack.c.l.b16 %v621
        %v1790 = vunpack.c.l.b16 %v622
        %v1791 = vunpack.c.l.b16 %v623
        %v1792 = vunpack.c.l.b16 %v624
        %v1793 = vunpack.c.l.b16 %v625
        %v1794 = vunpack.c.l.b16 %v626
        %v1795 = vunpack.c.l.b16 %v627
        %v1796 = vunpack.c.l.b16 %v628
        %v1797 = vunpack.c.l.b16 %v629
        %v1798 = vunpack.c.l.b16 %v630
        %v1799 = vunpack.c.l.b16 %v631
        %v1800 = vunpack.c.l.b16 %v632
        %v1801 = vunpack.c.l.b16 %v633
        %v1802 = vunpack.c.l.b16 %v634
        %v1803 = vunpack.c.l.b16 %v635
        %v1804 = vunpack.c.l.b16 %v636
        %v1805 = vunpack.c.l.b16 %v637
        %v1806 = vunpack.c.l.b16 %v638
        %v1807 = vunpack.c.l.b16 %v639
        %v1808 = vunpack.c.l.b16 %v640
        %v1809 = vunpack.c.l.b16 %v641
        %v1810 = vunpack.c.l.b16 %v642
        %v1811 = vunpack.c.l.b16 %v643
        %v1812 = vunpack.c.l.b16 %v644
        %v1813 = vunpack.c.l.b16 %v645
        %v1814 = vunpack.c.l.b16 %v646
        %v1815 = vunpack.c.l.b16 %v647
        %v1816 = vunpack.c.l.b16 %v648
        %v1817 = vunpack.c.l.b16 %v649
        %v1818 = vunpack.c.l.b16 %v650
        %v1819 = vunpack.c.l.b16 %v651
        %v1820 = vunpack.c.l.b16 %v652
        %v1821 = vunpack.c.l.b16 %v653
        %v1822 = vunpack.c.l.b16 %v654
        %v1823 = vunpack.c.l.b16 %v655
        %v1824 = vunpack.c.l.b16 %v656
        %v1825 = vunpack.c.l.b16 %v657
        %v1826 = vunpack.c.l.b16 %v658
        %v1827 = vunpack.c.l.b16 %v659
        %v1828 = vunpack.c.l.b16 %v660
        %v1829 = vunpack.c.l.b16 %v661
        %v1830 = vunpack.c.l.b16 %v662
        %v1831 = vunpack.c.l.b16 %v663
        %v1832 = vunpack.c.l.b16 %v664
        %v1833 = vunpack.c.l.b16 %v665
        %v1834 = vunpack.c.l.b16 %v666
        %v1835 = vunpack.c.l.b16 %v667
        %v1836 = vunpack.c.l.b16 %v668
        %v1837 = vunpack.c.l.b16 %v669
        %v1838 = vunpack.c.l.b16 %v670
        %v1839 = vunpack.c.l.b16 %v671
        %v1840 = vunpack.c.l.b16 %v672
        %v1841 = vunpack.c.l.b16 %v673
        %v1842 = vunpack.c.l.b16 %v674
        %v1843 = vunpack.c.l.b16 %v675
        %v1844 = vunpack.c.l.b16 %v676
        %v1845 = vunpack.c.l.b16 %v677
        %v1846 = vunpack.c.l.b16 %v678
        %v1847 = vunpack.c.l.b16 %v679
        %v1848 = vunpack.c.l.b16 %v680
        %v1849 = vunpack.c.l.b16 %v681
        %v1850 = vunpack.c.l.b16 %v682
        %v1851 = vunpack.c.l.b16 %v683
        %v1852 = vunpack.c.l.b16 %v684
        %v1853 = vunpack.c.l.b16 %v685
        %v1854 = vunpack.c.l.b16 %v686
        %v1855 = vunpack.c.l.b16 %v687
        %v1856 = vunpack.c.l.b16 %v688
        %v1857 = vunpack.c.l.b16 %v689
        %v1858 = vunpack.c.l.b16 %v690
        %v1859 = vunpack.c.l.b16 %v691
        %v1860 = vunpack.c.l.b16 %v692
        %v1861 = vunpack.c.l.b16 %v693
        %v1862 = vunpack.c.l.b16 %v694
        %v1863 = vunpack.c.l.b16 %v695
        %v1864 = vunpack.c.l.b16 %v696
        %v1865 = vunpack.c.l.b16 %v697
        %v1866 = vunpack.c.l.b16 %v698
        %v1867 = vunpack.c.l.b16 %v699
        %v1868 = vunpack.c.l.b16 %v700
        %v1869 = vunpack.c.l.b16 %v701
        %v1870 = vunpack.c.l.b16 %v702
        %v1871 = vunpack.c.l.b16 %v703
        %v1872 = vunpack.c.l.b16 %v704
        %v1873 = vunpack.c.l.b16 %v705
        %v1874 = vunpack.c.l.b16 %v706
        %v1875 = vunpack.c.l.b16 %v707
        %v1876 = vunpack.c.l.b16 %v708
        %v1877 = vunpack.c.l.b16 %v709
        %v1878 = vunpack.c.l.b16 %v710
        %v1879 = vunpack.c.l.b16 %v711
        %v1880 = vunpack.c.l.b16 %v712
        %v1881 = vunpack.c.l.b16 %v713
        %v1882 = vunpack.c.l.b16 %v714
        %v1883 = vunpack.c.l.b16 %v715
        %v1884 = vunpack.c.l.b16 %v716
        %v1885 = vunpack.c.l.b16 %v717
        %v1886 = vunpack.c.l.b16 %v718
        %v1887 = vunpack.c.l.b16 %v719
        %v1888 = vunpack.c.l.b16 %v720
        %v1889 = vunpack.c.l.b16 %v721
        %v1890 = vunpack.c.l.b16 %v722
        %v1891 = vunpack.c.l.b16 %v723
        %v1892 = vunpack.c.l.b16 %v724
        %v1893 = vunpack.c.l.b16 %v725
        %v1894 = vunpack.c.l.b16 %v726
        %v1895 = vunpack.c.l.b16 %v727
        %v1896 = vunpack.c.l.b16 %v728
        %v1897 = vunpack.c.l.b16 %v729
        %v1898 = vunpack.c.l.b16 %v730
        %v1899 = vunpack.c.l.b16 %v731
        %v1900 = vunpack.c.l.b16 %v732
        %v1901 = vunpack.c.l.b16 %v733
        %v1902 = vunpack.c.l.b16 %v734
        %v1903 = vunpack.c.l.b16 %v735
        %v1904 = vunpack.c.l.b16 %v736
        %v1905 = vunpack.c.l.b16 %v737
        %v1906 = vunpack.c.l.b16 %v738
        %v1907 = vunpack.c.l.b16 %v739
        %v1908 = vunpack.c.l.b16 %v740
        %v1909 = vunpack.c.l.b16 %v741
        %v1910 = vunpack.c.l.b16 %v742
        %v1911 = vunpack.c.l.b16 %v743
        %v1912 = vunpack.c.l.b16 %v744
        %v1913 = vunpack.c.l.b16 %v745
        %v1914 = vunpack.c.l.b16 %v746
        %v1915 = vunpack.c.l.b16 %v747
        %v1916 = vunpack.c.l.b16 %v748
        %v1917 = vunpack.c.l.b16 %v749
        %v1918 = vunpack.c.l.b16 %v750
        %v1919 = vunpack.c.l.b16 %v751
        %v1920 = vunpack.c.l.b16 %v752
        %v1921 = vunpack.c.l.b16 %v753
        %v1922 = vunpack.c.l.b16 %v754
        %v1923 = vunpack.c.l.b16 %v755
        %v1924 = vunpack.c.l.b16 %v756
        %v1925 = vunpack.c.l.b16 %v757
        %v1926 = vunpack.c.l.b16 %v758
        %v1927 = vunpack.c.l.b16 %v759
        %v1928 = vunpack.c.l.b16 %v760
        %v1929 = vunpack.c.l.b16 %v761
        %v1930 = vunpack.c.l.b16 %v762
        %v1931 = vunpack.c.l.b16 %v763
        %v1932 = vpack.c.b16 %v1421, %v1420
        %v1933 = vpack.c.b16 %v1423, %v1422
        %v1934 = vpack.c.b16 %v1425, %v1424
        %v1935 = vpack.c.b16 %v1427, %v1426
        %v1936 = vpack.c.b16 %v1429, %v1428
        %v1937 = vpack.c.b16 %v1431, %v1430
        %v1938 = vpack.c.b16 %v1433, %v1432
        %v1939 = vpack.c.b16 %v1435, %v1434
        %v1940 = vpack.c.b16 %v1437, %v1436
        %v1941 = vpack.c.b16 %v1439, %v1438
        %v1942 = vpack.c.b16 %v1441, %v1440
        %v1943 = vpack.c.b16 %v1443, %v1442
        %v1944 = vpack.c.b16 %v1445, %v1444
        %v1945 = vpack.c.b16 %v1447, %v1446
        %v1946 = vpack.c.b16 %v1449, %v1448
        %v1947 = vpack.c.b16 %v1451, %v1450
        %v1948 = vpack.c.b16 %v1453, %v1452
        %v1949 = vpack.c.b16 %v1455, %v1454
        %v1950 = vpack.c.b16 %v1457, %v1456
        %v1951 = vpack.c.b16 %v1459, %v1458
        %v1952 = vpack.c.b16 %v1461, %v1460
        %v1953 = vpack.c.b16 %v1463, %v1462
        %v1954 = vpack.c.b16 %v1465, %v1464
        %v1955 = vpack.c.b16 %v1467, %v1466
        %v1956 = vpack.c.b16 %v1469, %v1468
        %v1957 = vpack.c.b16 %v1471, %v1470
        %v1958 = vpack.c.b16 %v1473, %v1472
        %v1959 = vpack.c.b16 %v1475, %v1474
        %v1960 = vpack.c.b16 %v1477, %v1476
        %v1961 = vpack.c.b16 %v1479, %v1478
        %v1962 = vpack.c.b16 %v1481, %v1480
        %v1963 = vpack.c.b16 %v1483, %v1482
        %v1964 = vpack.c.b16 %v1485, %v1484
        %v1965 = vpack.c.b16 %v1487, %v1486
        %v1966 = vpack.c.b16 %v1489, %v1488
        %v1967 = vpack.c.b16 %v1491, %v1490
        %v1968 = vpack.c.b16 %v1493, %v1492
        %v1969 = vpack.c.b16 %v1495, %v1494
        %v1970 = vpack.c.b16 %v1497, %v1496
        %v1971 = vpack.c.b16 %v1499, %v1498
        %v1972 = vpack.c.b16 %v1501, %v1500
        %v1973 = vpack.c.b16 %v1503, %v1502
        %v1974 = vpack.c.b16 %v1505, %v1504
        %v1975 = vpack.c.b16 %v1507, %v1506
        %v1976 = vpack.c.b16 %v1509, %v1508
        %v1977 = vpack.c.b16 %v1511, %v1510
        %v1978 = vpack.c.b16 %v1513, %v1512
        %v1979 = vpack.c.b16 %v1515, %v1514
        %v1980 = vpack.c.b16 %v1517, %v1516
        %v1981 = vpack.c.b16 %v1519, %v1518
        %v1982 = vpack.c.b16 %v1521, %v1520
        %v1983 = vpack.c.b16 %v1523, %v1522
        %v1984 = vpack.c.b16 %v1525, %v1524
        %v1985 = vpack.c.b16 %v1527, %v1526
        %v1986 = vpack.c.b16 %v1529, %v1528
        %v1987 = vpack.c.b16 %v1531, %v1530
        %v1988 = vpack.c.b16 %v1533, %v1532
        %v1989 = vpack.c.b16 %v1535, %v1534
        %v1990 = vpack.c.b16 %v1537, %v1536
        %v1991 = vpack.c.b16 %v1539, %v1538
        %v1992 = vpack.c.b16 %v1541, %v1540
        %v1993 = vpack.c.b16 %v1543, %v1542
        %v1994 = vpack.c.b16 %v1545, %v1544
        %v1995 = vpack.c.b16 %v1547, %v1546
        %v1996 = vpack.c.b16 %v1549, %v1548
        %v1997 = vpack.c.b16 %v1551, %v1550
        %v1998 = vpack.c.b16 %v1553, %v1552
        %v1999 = vpack.c.b16 %v1555, %v1554
        %v2000 = vpack.c.b16 %v1557, %v1556
        %v2001 = vpack.c.b16 %v1559, %v1558
        %v2002 = vpack.c.b16 %v1561, %v1560
        %v2003 = vpack.c.b16 %v1563, %v1562
        %v2004 = vpack.c.b16 %v1565, %v1564
        %v2005 = vpack.c.b16 %v1567, %v1566
        %v2006 = vpack.c.b16 %v1569, %v1568
        %v2007 = vpack.c.b16 %v1571, %v1570
        %v2008 = vpack.c.b16 %v1573, %v1572
        %v2009 = vpack.c.b16 %v1575, %v1574
        %v2010 = vpack.c.b16 %v1577, %v1576
        %v2011 = vpack.c.b16 %v1579, %v1578
        %v2012 = vpack.c.b16 %v1581, %v1580
        %v2013 = vpack.c.b16 %v1583, %v1582
        %v2014 = vpack.c.b16 %v1585, %v1584
        %v2015 = vpack.c.b16 %v1587, %v1586
        %v2016 = vpack.c.b16 %v1589, %v1588
        %v2017 = vpack.c.b16 %v1591, %v1590
        %v2018 = vpack.c.b16 %v1593, %v1592
        %v2019 = vpack.c.b16 %v1595, %v1594
        %v2020 = vpack.c.b16 %v1597, %v1596
        %v2021 = vpack.c.b16 %v1599, %v1598
        %v2022 = vpack.c.b16 %v1601, %v1600
        %v2023 = vpack.c.b16 %v1603, %v1602
        %v2024 = vpack.c.b16 %v1605, %v1604
        %v2025 = vpack.c.b16 %v1607, %v1606
        %v2026 = vpack.c.b16 %v1609, %v1608
        %v2027 = vpack.c.b16 %v1611, %v1610
        %v2028 = vpack.c.b16 %v1613, %v1612
        %v2029 = vpack.c.b16 %v1615, %v1614
        %v2030 = vpack.c.b16 %v1617, %v1616
        %v2031 = vpack.c.b16 %v1619, %v1618
        %v2032 = vpack.c.b16 %v1621, %v1620
        %v2033 = vpack.c.b16 %v1623, %v1622
        %v2034 = vpack.c.b16 %v1625, %v1624
        %v2035 = vpack.c.b16 %v1627, %v1626
        %v2036 = vpack.c.b16 %v1629, %v1628
        %v2037 = vpack.c.b16 %v1631, %v1630
        %v2038 = vpack.c.b16 %v1633, %v1632
        %v2039 = vpack.c.b16 %v1635, %v1634
        %v2040 = vpack.c.b16 %v1637, %v1636
        %v2041 = vpack.c.b16 %v1639, %v1638
        %v2042 = vpack.c.b16 %v1641, %v1640
        %v2043 = vpack.c.b16 %v1643, %v1642
        %v2044 = vpack.c.b16 %v1645, %v1644
        %v2045 = vpack.c.b16 %v1647, %v1646
        %v2046 = vpack.c.b16 %v1649, %v1648
        %v2047 = vpack.c.b16 %v1651, %v1650
        %v2048 = vpack.c.b16 %v1653, %v1652
        %v2049 = vpack.c.b16 %v1655, %v1654
        %v2050 = vpack.c.b16 %v1657, %v1656
        %v2051 = vpack.c.b16 %v1659, %v1658
        %v2052 = vpack.c.b16 %v1661, %v1660
        %v2053 = vpack.c.b16 %v1663, %v1662
        %v2054 = vpack.c.b16 %v1665, %v1664
        %v2055 = vpack.c.b16 %v1667, %v1666
        %v2056 = vpack.c.b16 %v1669, %v1668
        %v2057 = vpack.c.b16 %v1671, %v1670
        %v2058 = vpack.c.b16 %v1673, %v1672
        %v2059 = vpack.c.b16 %v1675, %v1674
        %v2060 = vpack.c.b16 %v1677, %v1676
        %v2061 = vpack.c.b16 %v1679, %v1678
        %v2062 = vpack.c.b16 %v1681, %v1680
        %v2063 = vpack.c.b16 %v1683, %v1682
        %v2064 = vpack.c.b16 %v1685, %v1684
        %v2065 = vpack.c.b16 %v1687, %v1686
        %v2066 = vpack.c.b16 %v1689, %v1688
        %v2067 = vpack.c.b16 %v1691, %v1690
        %v2068 = vpack.c.b16 %v1693, %v1692
        %v2069 = vpack.c.b16 %v1695, %v1694
        %v2070 = vpack.c.b16 %v1697, %v1696
        %v2071 = vpack.c.b16 %v1699, %v1698
        %v2072 = vpack.c.b16 %v1701, %v1700
        %v2073 = vpack.c.b16 %v1703, %v1702
        %v2074 = vpack.c.b16 %v1705, %v1704
        %v2075 = vpack.c.b16 %v1707, %v1706
        %v2076 = vpack.c.b16 %v1709, %v1708
        %v2077 = vpack.c.b16 %v1711, %v1710
        %v2078 = vpack.c.b16 %v1713, %v1712
        %v2079 = vpack.c.b16 %v1715, %v1714
        %v2080 = vpack.c.b16 %v1717, %v1716
        %v2081 = vpack.c.b16 %v1719, %v1718
        %v2082 = vpack.c.b16 %v1721, %v1720
        %v2083 = vpack.c.b16 %v1723, %v1722
        %v2084 = vpack.c.b16 %v1725, %v1724
        %v2085 = vpack.c.b16 %v1727, %v1726
        %v2086 = vpack.c.b16 %v1729, %v1728
        %v2087 = vpack.c.b16 %v1731, %v1730
        %v2088 = vpack.c.b16 %v1733, %v1732
        %v2089 = vpack.c.b16 %v1735, %v1734
        %v2090 = vpack.c.b16 %v1737, %v1736
        %v2091 = vpack.c.b16 %v1739, %v1738
        %v2092 = vpack.c.b16 %v1741, %v1740
        %v2093 = vpack.c.b16 %v1743, %v1742
        %v2094 = vpack.c.b16 %v1745, %v1744
        %v2095 = vpack.c.b16 %v1747, %v1746
        %v2096 = vpack.c.b16 %v1749, %v1748
        %v2097 = vpack.c.b16 %v1751, %v1750
        %v2098 = vpack.c.b16 %v1753, %v1752
        %v2099 = vpack.c.b16 %v1755, %v1754
        %v2100 = vpack.c.b16 %v1757, %v1756
        %v2101 = vpack.c.b16 %v1759, %v1758
        %v2102 = vpack.c.b16 %v1761, %v1760
        %v2103 = vpack.c.b16 %v1763, %v1762
        %v2104 = vpack.c.b16 %v1765, %v1764
        %v2105 = vpack.c.b16 %v1767, %v1766
        %v2106 = vpack.c.b16 %v1769, %v1768
        %v2107 = vpack.c.b16 %v1771, %v1770
        %v2108 = vpack.c.b16 %v1773, %v1772
        %v2109 = vpack.c.b16 %v1775, %v1774
        %v2110 = vpack.c.b16 %v1777, %v1776
        %v2111 = vpack.c.b16 %v1779, %v1778
        %v2112 = vpack.c.b16 %v1781, %v1780
        %v2113 = vpack.c.b16 %v1783, %v1782
        %v2114 = vpack.c.b16 %v1785, %v1784
        %v2115 = vpack.c.b16 %v1787, %v1786
        %v2116 = vpack.c.b16 %v1789, %v1788
        %v2117 = vpack.c.b16 %v1791, %v1790
        %v2118 = vpack.c.b16 %v1793, %v1792
        %v2119 = vpack.c.b16 %v1795, %v1794
        %v2120 = vpack.c.b16 %v1797, %v1796
        %v2121 = vpack.c.b16 %v1799, %v1798
        %v2122 = vpack.c.b16 %v1801, %v1800
        %v2123 = vpack.c.b16 %v1803, %v1802
        %v2124 = vpack.c.b16 %v1805, %v1804
        %v2125 = vpack.c.b16 %v1807, %v1806
        %v2126 = vpack.c.b16 %v1809, %v1808
        %v2127 = vpack.c.b16 %v1811, %v1810
        %v2128 = vpack.c.b16 %v1813, %v1812
        %v2129 = vpack.c.b16 %v1815, %v1814
        %v2130 = vpack.c.b16 %v1817, %v1816
        %v2131 = vpack.c.b16 %v1819, %v1818
        %v2132 = vpack.c.b16 %v1821, %v1820
        %v2133 = vpack.c.b16 %v1823, %v1822
        %v2134 = vpack.c.b16 %v1825, %v1824
        %v2135 = vpack.c.b16 %v1827, %v1826
        %v2136 = vpack.c.b16 %v1829, %v1828
        %v2137 = vpack.c.b16 %v1831, %v1830
        %v2138 = vpack.c.b16 %v1833, %v1832
        %v2139 = vpack.c.b16 %v1835, %v1834
        %v2140 = vpack.c.b16 %v1837, %v1836
        %v2141 = vpack.c.b16 %v1839, %v1838
        %v2142 = vpack.c.b16 %v1841, %v1840
        %v2143 = vpack.c.b16 %v1843, %v1842
        %v2144 = vpack.c.b16 %v1845, %v1844
        %v2145 = vpack.c.b16 %v1847, %v1846
        %v2146 = vpack.c.b16 %v1849, %v1848
        %v2147 = vpack.c.b16 %v1851, %v1850
        %v2148 = vpack.c.b16 %v1853, %v1852
        %v2149 = vpack.c.b16 %v1855, %v1854
        %v2150 = vpack.c.b16 %v1857, %v1856
        %v2151 = vpack.c.b16 %v1859, %v1858
        %v2152 = vpack.c.b16 %v1861, %v1860
        %v2153 = vpack.c.b16 %v1863, %v1862
        %v2154 = vpack.c.b16 %v1865, %v1864
        %v2155 = vpack.c.b16 %v1867, %v1866
        %v2156 = vpack.c.b16 %v1869, %v1868
        %v2157 = vpack.c.b16 %v1871, %v1870
        %v2158 = vpack.c.b16 %v1873, %v1872
        %v2159 = vpack.c.b16 %v1875, %v1874
        %v2160 = vpack.c.b16 %v1877, %v1876
        %v2161 = vpack.c.b16 %v1879, %v1878
        %v2162 = vpack.c.b16 %v1881, %v1880
        %v2163 = vpack.c.b16 %v1883, %v1882
        %v2164 = vpack.c.b16 %v1885, %v1884
        %v2165 = vpack.c.b16 %v1887, %v1886
        %v2166 = vpack.c.b16 %v1889, %v1888
        %v2167 = vpack.c.b16 %v1891, %v1890
        %v2168 = vpack.c.b16 %v1893, %v1892
        %v2169 = vpack.c.b16 %v1895, %v1894
        %v2170 = vpack.c.b16 %v1897, %v1896
        %v2171 = vpack.c.b16 %v1899, %v1898
        %v2172 = vpack.c.b16 %v1901, %v1900
        %v2173 = vpack.c.b16 %v1903, %v1902
        %v2174 = vpack.c.b16 %v1905, %v1904
        %v2175 = vpack.c.b16 %v1907, %v1906
        %v2176 = vpack.c.b16 %v1909, %v1908
        %v2177 = vpack.c.b16 %v1911, %v1910
        %v2178 = vpack.c.b16 %v1913, %v1912
        %v2179 = vpack.c.b16 %v1915, %v1914
        %v2180 = vpack.c.b16 %v1917, %v1916
        %v2181 = vpack.c.b16 %v1919, %v1918
        %v2182 = vpack.c.b16 %v1921, %v1920
        %v2183 = vpack.c.b16 %v1923, %v1922
        %v2184 = vpack.c.b16 %v1925, %v1924
        %v2185 = vpack.c.b16 %v1927, %v1926
        %v2186 = vpack.c.b16 %v1929, %v1928
        %v2187 = vpack.c.b16 %v1931, %v1930
        %2444 = vmatpush.bf16.msra.mxu0 %v1939
        %2445 = vmatpush.bf16.msra.mxu0 %v1938
        %2446 = vmatpush.bf16.msra.mxu0 %v1937
        %2447 = vmatpush.bf16.msra.mxu0 %v1936
        %2448 = vmatpush.bf16.msra.mxu0 %v1935
        %2449 = vmatpush.bf16.msra.mxu0 %v1934
        %2450 = vmatpush.bf16.msra.mxu0 %v1933
        %2451 = vmatpush.bf16.msra.mxu0 %v1932
        %2452 = vmatmul.bf16.gmra.mxu0 %v876
        %v2453 = vpop.f32.mrf.mxu0
        %v2454 = vadd.f32 0.0, %v2453
        %v2455 = vpop.f32.mrf.mxu0
        %2456 = vdwg.mxu0
        %2457 = vmatpush.bf16.msra.mxu0 %v1947
        %2458 = vmatpush.bf16.msra.mxu0 %v1946
        %2459 = vmatpush.bf16.msra.mxu0 %v1945
        %2460 = vmatpush.bf16.msra.mxu0 %v1944
        %2461 = vmatpush.bf16.msra.mxu0 %v1943
        %2462 = vmatpush.bf16.msra.mxu0 %v1942
        %2463 = vmatpush.bf16.msra.mxu0 %v1941
        %2464 = vmatpush.bf16.msra.mxu0 %v1940
        %2465 = vmatmul.bf16.gmra.mxu0 %v877
        %v2466 = vpop.f32.mrf.mxu0
        %v2467 = vadd.f32 %v2454, %v2466
        %v2468 = vpop.f32.mrf.mxu0
        %2469 = vdwg.mxu0
        %2470 = vmatpush.bf16.msra.mxu0 %v1955
        %2471 = vmatpush.bf16.msra.mxu0 %v1954
        %2472 = vmatpush.bf16.msra.mxu0 %v1953
        %2473 = vmatpush.bf16.msra.mxu0 %v1952
        %2474 = vmatpush.bf16.msra.mxu0 %v1951
        %2475 = vmatpush.bf16.msra.mxu0 %v1950
        %2476 = vmatpush.bf16.msra.mxu0 %v1949
        %2477 = vmatpush.bf16.msra.mxu0 %v1948
        %2478 = vmatmul.bf16.gmra.mxu0 %v878
        %v2479 = vpop.f32.mrf.mxu0
        %v2480 = vadd.f32 %v2467, %v2479
        %v2481 = vpop.f32.mrf.mxu0
        %2482 = vdwg.mxu0
        %2483 = vmatpush.bf16.msra.mxu0 %v1963
        %2484 = vmatpush.bf16.msra.mxu0 %v1962
        %2485 = vmatpush.bf16.msra.mxu0 %v1961
        %2486 = vmatpush.bf16.msra.mxu0 %v1960
        %2487 = vmatpush.bf16.msra.mxu0 %v1959
        %2488 = vmatpush.bf16.msra.mxu0 %v1958
        %2489 = vmatpush.bf16.msra.mxu0 %v1957
        %2490 = vmatpush.bf16.msra.mxu0 %v1956
        %2491 = vmatmul.bf16.gmra.mxu0 %v879
        %v2492 = vpop.f32.mrf.mxu0
        %v2493 = vadd.f32 %v2480, %v2492
        %v2494 = vpop.f32.mrf.mxu0
        %2495 = vdwg.mxu0
        %2496 = vmatpush.bf16.msra.mxu0 %v1971
        %2497 = vmatpush.bf16.msra.mxu0 %v1970
        %2498 = vmatpush.bf16.msra.mxu0 %v1969
        %2499 = vmatpush.bf16.msra.mxu0 %v1968
        %2500 = vmatpush.bf16.msra.mxu0 %v1967
        %2501 = vmatpush.bf16.msra.mxu0 %v1966
        %2502 = vmatpush.bf16.msra.mxu0 %v1965
        %2503 = vmatpush.bf16.msra.mxu0 %v1964
        %2504 = vmatmul.bf16.gmra.mxu0 %v880
        %v2505 = vpop.f32.mrf.mxu0
        %v2506 = vadd.f32 %v2493, %v2505
        %v2507 = vpop.f32.mrf.mxu0
        %2508 = vdwg.mxu0
        %2509 = vmatpush.bf16.msra.mxu0 %v1979
        %2510 = vmatpush.bf16.msra.mxu0 %v1978
        %2511 = vmatpush.bf16.msra.mxu0 %v1977
        %2512 = vmatpush.bf16.msra.mxu0 %v1976
        %2513 = vmatpush.bf16.msra.mxu0 %v1975
        %2514 = vmatpush.bf16.msra.mxu0 %v1974
        %2515 = vmatpush.bf16.msra.mxu0 %v1973
        %2516 = vmatpush.bf16.msra.mxu0 %v1972
        %2517 = vmatmul.bf16.gmra.mxu0 %v881
        %v2518 = vpop.f32.mrf.mxu0
        %v2519 = vadd.f32 %v2506, %v2518
        %v2520 = vpop.f32.mrf.mxu0
        %2521 = vdwg.mxu0
        %2522 = vmatpush.bf16.msra.mxu0 %v1987
        %2523 = vmatpush.bf16.msra.mxu0 %v1986
        %2524 = vmatpush.bf16.msra.mxu0 %v1985
        %2525 = vmatpush.bf16.msra.mxu0 %v1984
        %2526 = vmatpush.bf16.msra.mxu0 %v1983
        %2527 = vmatpush.bf16.msra.mxu0 %v1982
        %2528 = vmatpush.bf16.msra.mxu0 %v1981
        %2529 = vmatpush.bf16.msra.mxu0 %v1980
        %2530 = vmatmul.bf16.gmra.mxu0 %v882
        %v2531 = vpop.f32.mrf.mxu0
        %v2532 = vadd.f32 %v2519, %v2531
        %v2533 = vpop.f32.mrf.mxu0
        %2534 = vdwg.mxu0
        %2535 = vmatpush.bf16.msra.mxu0 %v1995
        %2536 = vmatpush.bf16.msra.mxu0 %v1994
        %2537 = vmatpush.bf16.msra.mxu0 %v1993
        %2538 = vmatpush.bf16.msra.mxu0 %v1992
        %2539 = vmatpush.bf16.msra.mxu0 %v1991
        %2540 = vmatpush.bf16.msra.mxu0 %v1990
        %2541 = vmatpush.bf16.msra.mxu0 %v1989
        %2542 = vmatpush.bf16.msra.mxu0 %v1988
        %2543 = vmatmul.bf16.gmra.mxu0 %v883
        %v2544 = vpop.f32.mrf.mxu0
        %v2545 = vadd.f32 %v2532, %v2544
        %v2546 = vpop.f32.mrf.mxu0
        %2547 = vdwg.mxu0
        %2548 = vmatpush.bf16.msra.mxu0 %v2003
        %2549 = vmatpush.bf16.msra.mxu0 %v2002
        %2550 = vmatpush.bf16.msra.mxu0 %v2001
        %2551 = vmatpush.bf16.msra.mxu0 %v2000
        %2552 = vmatpush.bf16.msra.mxu0 %v1999
        %2553 = vmatpush.bf16.msra.mxu0 %v1998
        %2554 = vmatpush.bf16.msra.mxu0 %v1997
        %2555 = vmatpush.bf16.msra.mxu0 %v1996
        %2556 = vmatmul.bf16.gmra.mxu0 %v884
        %v2557 = vpop.f32.mrf.mxu0
        %v2558 = vadd.f32 %v2545, %v2557
        %v2559 = vpop.f32.mrf.mxu0
        %2560 = vdwg.mxu0
        %2561 = vmatpush.bf16.msra.mxu0 %v2011
        %2562 = vmatpush.bf16.msra.mxu0 %v2010
        %2563 = vmatpush.bf16.msra.mxu0 %v2009
        %2564 = vmatpush.bf16.msra.mxu0 %v2008
        %2565 = vmatpush.bf16.msra.mxu0 %v2007
        %2566 = vmatpush.bf16.msra.mxu0 %v2006
        %2567 = vmatpush.bf16.msra.mxu0 %v2005
        %2568 = vmatpush.bf16.msra.mxu0 %v2004
        %2569 = vmatmul.bf16.gmra.mxu0 %v885
        %v2570 = vpop.f32.mrf.mxu0
        %v2571 = vadd.f32 %v2558, %v2570
        %v2572 = vpop.f32.mrf.mxu0
        %2573 = vdwg.mxu0
        %2574 = vmatpush.bf16.msra.mxu0 %v2019
        %2575 = vmatpush.bf16.msra.mxu0 %v2018
        %2576 = vmatpush.bf16.msra.mxu0 %v2017
        %2577 = vmatpush.bf16.msra.mxu0 %v2016
        %2578 = vmatpush.bf16.msra.mxu0 %v2015
        %2579 = vmatpush.bf16.msra.mxu0 %v2014
        %2580 = vmatpush.bf16.msra.mxu0 %v2013
        %2581 = vmatpush.bf16.msra.mxu0 %v2012
        %2582 = vmatmul.bf16.gmra.mxu0 %v886
        %v2583 = vpop.f32.mrf.mxu0
        %v2584 = vadd.f32 %v2571, %v2583
        %v2585 = vpop.f32.mrf.mxu0
        %2586 = vdwg.mxu0
        %2587 = vmatpush.bf16.msra.mxu0 %v2027
        %2588 = vmatpush.bf16.msra.mxu0 %v2026
        %2589 = vmatpush.bf16.msra.mxu0 %v2025
        %2590 = vmatpush.bf16.msra.mxu0 %v2024
        %2591 = vmatpush.bf16.msra.mxu0 %v2023
        %2592 = vmatpush.bf16.msra.mxu0 %v2022
        %2593 = vmatpush.bf16.msra.mxu0 %v2021
        %2594 = vmatpush.bf16.msra.mxu0 %v2020
        %2595 = vmatmul.bf16.gmra.mxu0 %v887
        %v2596 = vpop.f32.mrf.mxu0
        %v2597 = vadd.f32 %v2584, %v2596
        %v2598 = vpop.f32.mrf.mxu0
        %2599 = vdwg.mxu0
        %2600 = vmatpush.bf16.msra.mxu0 %v2035
        %2601 = vmatpush.bf16.msra.mxu0 %v2034
        %2602 = vmatpush.bf16.msra.mxu0 %v2033
        %2603 = vmatpush.bf16.msra.mxu0 %v2032
        %2604 = vmatpush.bf16.msra.mxu0 %v2031
        %2605 = vmatpush.bf16.msra.mxu0 %v2030
        %2606 = vmatpush.bf16.msra.mxu0 %v2029
        %2607 = vmatpush.bf16.msra.mxu0 %v2028
        %2608 = vmatmul.bf16.gmra.mxu0 %v888
        %v2609 = vpop.f32.mrf.mxu0
        %v2610 = vadd.f32 %v2597, %v2609
        %v2611 = vpop.f32.mrf.mxu0
        %2612 = vdwg.mxu0
        %2613 = vmatpush.bf16.msra.mxu0 %v2043
        %2614 = vmatpush.bf16.msra.mxu0 %v2042
        %2615 = vmatpush.bf16.msra.mxu0 %v2041
        %2616 = vmatpush.bf16.msra.mxu0 %v2040
        %2617 = vmatpush.bf16.msra.mxu0 %v2039
        %2618 = vmatpush.bf16.msra.mxu0 %v2038
        %2619 = vmatpush.bf16.msra.mxu0 %v2037
        %2620 = vmatpush.bf16.msra.mxu0 %v2036
        %2621 = vmatmul.bf16.gmra.mxu0 %v889
        %v2622 = vpop.f32.mrf.mxu0
        %v2623 = vadd.f32 %v2610, %v2622
        %v2624 = vpop.f32.mrf.mxu0
        %2625 = vdwg.mxu0
        %2626 = vmatpush.bf16.msra.mxu0 %v2051
        %2627 = vmatpush.bf16.msra.mxu0 %v2050
        %2628 = vmatpush.bf16.msra.mxu0 %v2049
        %2629 = vmatpush.bf16.msra.mxu0 %v2048
        %2630 = vmatpush.bf16.msra.mxu0 %v2047
        %2631 = vmatpush.bf16.msra.mxu0 %v2046
        %2632 = vmatpush.bf16.msra.mxu0 %v2045
        %2633 = vmatpush.bf16.msra.mxu0 %v2044
        %2634 = vmatmul.bf16.gmra.mxu0 %v890
        %v2635 = vpop.f32.mrf.mxu0
        %v2636 = vadd.f32 %v2623, %v2635
        %v2637 = vpop.f32.mrf.mxu0
        %2638 = vdwg.mxu0
        %2639 = vmatpush.bf16.msra.mxu0 %v2059
        %2640 = vmatpush.bf16.msra.mxu0 %v2058
        %2641 = vmatpush.bf16.msra.mxu0 %v2057
        %2642 = vmatpush.bf16.msra.mxu0 %v2056
        %2643 = vmatpush.bf16.msra.mxu0 %v2055
        %2644 = vmatpush.bf16.msra.mxu0 %v2054
        %2645 = vmatpush.bf16.msra.mxu0 %v2053
        %2646 = vmatpush.bf16.msra.mxu0 %v2052
        %2647 = vmatmul.bf16.gmra.mxu0 %v891
        %v2648 = vpop.f32.mrf.mxu0
        %v2649 = vadd.f32 %v2636, %v2648
        %v2650 = vpop.f32.mrf.mxu0
        %2651 = vdwg.mxu0
        %2652 = vmatpush.bf16.msra.mxu0 %v2067
        %2653 = vmatpush.bf16.msra.mxu0 %v2066
        %2654 = vmatpush.bf16.msra.mxu0 %v2065
        %2655 = vmatpush.bf16.msra.mxu0 %v2064
        %2656 = vmatpush.bf16.msra.mxu0 %v2063
        %2657 = vmatpush.bf16.msra.mxu0 %v2062
        %2658 = vmatpush.bf16.msra.mxu0 %v2061
        %2659 = vmatpush.bf16.msra.mxu0 %v2060
        %2660 = vmatmul.bf16.gmra.mxu0 %v892
        %v2661 = vpop.f32.mrf.mxu0
        %v2662 = vadd.f32 %v2649, %v2661
        %v2663 = vpop.f32.mrf.mxu0
        %2664 = vdwg.mxu0
        %2665 = vmatpush.bf16.msra.mxu0 %v2075
        %2666 = vmatpush.bf16.msra.mxu0 %v2074
        %2667 = vmatpush.bf16.msra.mxu0 %v2073
        %2668 = vmatpush.bf16.msra.mxu0 %v2072
        %2669 = vmatpush.bf16.msra.mxu0 %v2071
        %2670 = vmatpush.bf16.msra.mxu0 %v2070
        %2671 = vmatpush.bf16.msra.mxu0 %v2069
        %2672 = vmatpush.bf16.msra.mxu0 %v2068
        %2673 = vmatmul.bf16.gmra.mxu0 %v893
        %v2674 = vpop.f32.mrf.mxu0
        %v2675 = vadd.f32 %v2662, %v2674
        %v2676 = vpop.f32.mrf.mxu0
        %2677 = vdwg.mxu0
        %2678 = vmatpush.bf16.msra.mxu0 %v2083
        %2679 = vmatpush.bf16.msra.mxu0 %v2082
        %2680 = vmatpush.bf16.msra.mxu0 %v2081
        %2681 = vmatpush.bf16.msra.mxu0 %v2080
        %2682 = vmatpush.bf16.msra.mxu0 %v2079
        %2683 = vmatpush.bf16.msra.mxu0 %v2078
        %2684 = vmatpush.bf16.msra.mxu0 %v2077
        %2685 = vmatpush.bf16.msra.mxu0 %v2076
        %2686 = vmatmul.bf16.gmra.mxu0 %v894
        %v2687 = vpop.f32.mrf.mxu0
        %v2688 = vadd.f32 %v2675, %v2687
        %v2689 = vpop.f32.mrf.mxu0
        %2690 = vdwg.mxu0
        %2691 = vmatpush.bf16.msra.mxu0 %v2091
        %2692 = vmatpush.bf16.msra.mxu0 %v2090
        %2693 = vmatpush.bf16.msra.mxu0 %v2089
        %2694 = vmatpush.bf16.msra.mxu0 %v2088
        %2695 = vmatpush.bf16.msra.mxu0 %v2087
        %2696 = vmatpush.bf16.msra.mxu0 %v2086
        %2697 = vmatpush.bf16.msra.mxu0 %v2085
        %2698 = vmatpush.bf16.msra.mxu0 %v2084
        %2699 = vmatmul.bf16.gmra.mxu0 %v895
        %v2700 = vpop.f32.mrf.mxu0
        %v2701 = vadd.f32 %v2688, %v2700
        %v2702 = vpop.f32.mrf.mxu0
        %2703 = vdwg.mxu0
        %2704 = vmatpush.bf16.msra.mxu0 %v2099
        %2705 = vmatpush.bf16.msra.mxu0 %v2098
        %2706 = vmatpush.bf16.msra.mxu0 %v2097
        %2707 = vmatpush.bf16.msra.mxu0 %v2096
        %2708 = vmatpush.bf16.msra.mxu0 %v2095
        %2709 = vmatpush.bf16.msra.mxu0 %v2094
        %2710 = vmatpush.bf16.msra.mxu0 %v2093
        %2711 = vmatpush.bf16.msra.mxu0 %v2092
        %2712 = vmatmul.bf16.gmra.mxu0 %v896
        %v2713 = vpop.f32.mrf.mxu0
        %v2714 = vadd.f32 %v2701, %v2713
        %v2715 = vpop.f32.mrf.mxu0
        %2716 = vdwg.mxu0
        %2717 = vmatpush.bf16.msra.mxu0 %v2107
        %2718 = vmatpush.bf16.msra.mxu0 %v2106
        %2719 = vmatpush.bf16.msra.mxu0 %v2105
        %2720 = vmatpush.bf16.msra.mxu0 %v2104
        %2721 = vmatpush.bf16.msra.mxu0 %v2103
        %2722 = vmatpush.bf16.msra.mxu0 %v2102
        %2723 = vmatpush.bf16.msra.mxu0 %v2101
        %2724 = vmatpush.bf16.msra.mxu0 %v2100
        %2725 = vmatmul.bf16.gmra.mxu0 %v897
        %v2726 = vpop.f32.mrf.mxu0
        %v2727 = vadd.f32 %v2714, %v2726
        %v2728 = vpop.f32.mrf.mxu0
        %2729 = vdwg.mxu0
        %2730 = vmatpush.bf16.msra.mxu0 %v2115
        %2731 = vmatpush.bf16.msra.mxu0 %v2114
        %2732 = vmatpush.bf16.msra.mxu0 %v2113
        %2733 = vmatpush.bf16.msra.mxu0 %v2112
        %2734 = vmatpush.bf16.msra.mxu0 %v2111
        %2735 = vmatpush.bf16.msra.mxu0 %v2110
        %2736 = vmatpush.bf16.msra.mxu0 %v2109
        %2737 = vmatpush.bf16.msra.mxu0 %v2108
        %2738 = vmatmul.bf16.gmra.mxu0 %v898
        %v2739 = vpop.f32.mrf.mxu0
        %v2740 = vadd.f32 %v2727, %v2739
        %v2741 = vpop.f32.mrf.mxu0
        %2742 = vdwg.mxu0
        %2743 = vmatpush.bf16.msra.mxu0 %v2123
        %2744 = vmatpush.bf16.msra.mxu0 %v2122
        %2745 = vmatpush.bf16.msra.mxu0 %v2121
        %2746 = vmatpush.bf16.msra.mxu0 %v2120
        %2747 = vmatpush.bf16.msra.mxu0 %v2119
        %2748 = vmatpush.bf16.msra.mxu0 %v2118
        %2749 = vmatpush.bf16.msra.mxu0 %v2117
        %2750 = vmatpush.bf16.msra.mxu0 %v2116
        %2751 = vmatmul.bf16.gmra.mxu0 %v899
        %v2752 = vpop.f32.mrf.mxu0
        %v2753 = vadd.f32 %v2740, %v2752
        %v2754 = vpop.f32.mrf.mxu0
        %2755 = vdwg.mxu0
        %2756 = vmatpush.bf16.msra.mxu0 %v2131
        %2757 = vmatpush.bf16.msra.mxu0 %v2130
        %2758 = vmatpush.bf16.msra.mxu0 %v2129
        %2759 = vmatpush.bf16.msra.mxu0 %v2128
        %2760 = vmatpush.bf16.msra.mxu0 %v2127
        %2761 = vmatpush.bf16.msra.mxu0 %v2126
        %2762 = vmatpush.bf16.msra.mxu0 %v2125
        %2763 = vmatpush.bf16.msra.mxu0 %v2124
        %2764 = vmatmul.bf16.gmra.mxu0 %v900
        %v2765 = vpop.f32.mrf.mxu0
        %v2766 = vadd.f32 %v2753, %v2765
        %v2767 = vpop.f32.mrf.mxu0
        %2768 = vdwg.mxu0
        %2769 = vmatpush.bf16.msra.mxu0 %v2139
        %2770 = vmatpush.bf16.msra.mxu0 %v2138
        %2771 = vmatpush.bf16.msra.mxu0 %v2137
        %2772 = vmatpush.bf16.msra.mxu0 %v2136
        %2773 = vmatpush.bf16.msra.mxu0 %v2135
        %2774 = vmatpush.bf16.msra.mxu0 %v2134
        %2775 = vmatpush.bf16.msra.mxu0 %v2133
        %2776 = vmatpush.bf16.msra.mxu0 %v2132
        %2777 = vmatmul.bf16.gmra.mxu0 %v901
        %v2778 = vpop.f32.mrf.mxu0
        %v2779 = vadd.f32 %v2766, %v2778
        %v2780 = vpop.f32.mrf.mxu0
        %2781 = vdwg.mxu0
        %2782 = vmatpush.bf16.msra.mxu0 %v2147
        %2783 = vmatpush.bf16.msra.mxu0 %v2146
        %2784 = vmatpush.bf16.msra.mxu0 %v2145
        %2785 = vmatpush.bf16.msra.mxu0 %v2144
        %2786 = vmatpush.bf16.msra.mxu0 %v2143
        %2787 = vmatpush.bf16.msra.mxu0 %v2142
        %2788 = vmatpush.bf16.msra.mxu0 %v2141
        %2789 = vmatpush.bf16.msra.mxu0 %v2140
        %2790 = vmatmul.bf16.gmra.mxu0 %v902
        %v2791 = vpop.f32.mrf.mxu0
        %v2792 = vadd.f32 %v2779, %v2791
        %v2793 = vpop.f32.mrf.mxu0
        %2794 = vdwg.mxu0
        %2795 = vmatpush.bf16.msra.mxu0 %v2155
        %2796 = vmatpush.bf16.msra.mxu0 %v2154
        %2797 = vmatpush.bf16.msra.mxu0 %v2153
        %2798 = vmatpush.bf16.msra.mxu0 %v2152
        %2799 = vmatpush.bf16.msra.mxu0 %v2151
        %2800 = vmatpush.bf16.msra.mxu0 %v2150
        %2801 = vmatpush.bf16.msra.mxu0 %v2149
        %2802 = vmatpush.bf16.msra.mxu0 %v2148
        %2803 = vmatmul.bf16.gmra.mxu0 %v903
        %v2804 = vpop.f32.mrf.mxu0
        %v2805 = vadd.f32 %v2792, %v2804
        %v2806 = vpop.f32.mrf.mxu0
        %2807 = vdwg.mxu0
        %2808 = vmatpush.bf16.msra.mxu0 %v2163
        %2809 = vmatpush.bf16.msra.mxu0 %v2162
        %2810 = vmatpush.bf16.msra.mxu0 %v2161
        %2811 = vmatpush.bf16.msra.mxu0 %v2160
        %2812 = vmatpush.bf16.msra.mxu0 %v2159
        %2813 = vmatpush.bf16.msra.mxu0 %v2158
        %2814 = vmatpush.bf16.msra.mxu0 %v2157
        %2815 = vmatpush.bf16.msra.mxu0 %v2156
        %2816 = vmatmul.bf16.gmra.mxu0 %v904
        %v2817 = vpop.f32.mrf.mxu0
        %v2818 = vadd.f32 %v2805, %v2817
        %v2819 = vpop.f32.mrf.mxu0
        %2820 = vdwg.mxu0
        %2821 = vmatpush.bf16.msra.mxu0 %v2171
        %2822 = vmatpush.bf16.msra.mxu0 %v2170
        %2823 = vmatpush.bf16.msra.mxu0 %v2169
        %2824 = vmatpush.bf16.msra.mxu0 %v2168
        %2825 = vmatpush.bf16.msra.mxu0 %v2167
        %2826 = vmatpush.bf16.msra.mxu0 %v2166
        %2827 = vmatpush.bf16.msra.mxu0 %v2165
        %2828 = vmatpush.bf16.msra.mxu0 %v2164
        %2829 = vmatmul.bf16.gmra.mxu0 %v905
        %v2830 = vpop.f32.mrf.mxu0
        %v2831 = vadd.f32 %v2818, %v2830
        %v2832 = vpop.f32.mrf.mxu0
        %2833 = vdwg.mxu0
        %2834 = vmatpush.bf16.msra.mxu0 %v2179
        %2835 = vmatpush.bf16.msra.mxu0 %v2178
        %2836 = vmatpush.bf16.msra.mxu0 %v2177
        %2837 = vmatpush.bf16.msra.mxu0 %v2176
        %2838 = vmatpush.bf16.msra.mxu0 %v2175
        %2839 = vmatpush.bf16.msra.mxu0 %v2174
        %2840 = vmatpush.bf16.msra.mxu0 %v2173
        %2841 = vmatpush.bf16.msra.mxu0 %v2172
        %2842 = vmatmul.bf16.gmra.mxu0 %v906
        %v2843 = vpop.f32.mrf.mxu0
        %v2844 = vadd.f32 %v2831, %v2843
        %v2845 = vpop.f32.mrf.mxu0
        %2846 = vdwg.mxu0
        %2847 = vmatpush.bf16.msra.mxu0 %v2187
        %2848 = vmatpush.bf16.msra.mxu0 %v2186
        %2849 = vmatpush.bf16.msra.mxu0 %v2185
        %2850 = vmatpush.bf16.msra.mxu0 %v2184
        %2851 = vmatpush.bf16.msra.mxu0 %v2183
        %2852 = vmatpush.bf16.msra.mxu0 %v2182
        %2853 = vmatpush.bf16.msra.mxu0 %v2181
        %2854 = vmatpush.bf16.msra.mxu0 %v2180
        %2855 = vmatmul.bf16.gmra.mxu0 %v907
        %v2856 = vpop.f32.mrf.mxu0
        %v2857 = vadd.f32 %v2844, %v2856
        %v2858 = vpop.f32.mrf.mxu0
        %2859 = vdwg.mxu0
        %v2876 = vunpack.c.l.b16 %v796
        %v2877 = vunpack.c.h.b16 %v796
        %v2878 = vunpack.c.l.b16 %v797
        %v2879 = vunpack.c.h.b16 %v797
        %v2880 = vunpack.c.l.b16 %v798
        %v2881 = vunpack.c.h.b16 %v798
        %v2882 = vunpack.c.l.b16 %v799
        %v2883 = vunpack.c.h.b16 %v799
        %v2884 = vunpack.c.l.b16 %v800
        %v2885 = vunpack.c.h.b16 %v800
        %v2886 = vunpack.c.l.b16 %v801
        %v2887 = vunpack.c.h.b16 %v801
        %v2888 = vunpack.c.l.b16 %v802
        %v2889 = vunpack.c.h.b16 %v802
        %v2890 = vunpack.c.l.b16 %v803
        %v2891 = vunpack.c.h.b16 %v803
        %v2892 = vunpack.c.l.b16 %v804
        %v2893 = vunpack.c.h.b16 %v804
        %v2894 = vunpack.c.l.b16 %v805
        %v2895 = vunpack.c.h.b16 %v805
        %v2896 = vunpack.c.l.b16 %v806
        %v2897 = vunpack.c.h.b16 %v806
        %v2898 = vunpack.c.l.b16 %v807
        %v2899 = vunpack.c.h.b16 %v807
        %v2900 = vunpack.c.l.b16 %v808
        %v2901 = vunpack.c.h.b16 %v808
        %v2902 = vunpack.c.l.b16 %v809
        %v2903 = vunpack.c.h.b16 %v809
        %v2904 = vunpack.c.l.b16 %v810
        %v2905 = vunpack.c.h.b16 %v810
        %v2906 = vunpack.c.l.b16 %v811
        %v2907 = vunpack.c.h.b16 %v811
        %v2908 = vpack.c.b16 %v2876, %v2876
        %v2909 = vpack.c.b16 %v2877, %v2877
        %v2910 = vpack.c.b16 %v2878, %v2878
        %v2911 = vpack.c.b16 %v2879, %v2879
        %v2912 = vpack.c.b16 %v2880, %v2880
        %v2913 = vpack.c.b16 %v2881, %v2881
        %v2914 = vpack.c.b16 %v2882, %v2882
        %v2915 = vpack.c.b16 %v2883, %v2883
        %v2916 = vpack.c.b16 %v2884, %v2884
        %v2917 = vpack.c.b16 %v2885, %v2885
        %v2918 = vpack.c.b16 %v2886, %v2886
        %v2919 = vpack.c.b16 %v2887, %v2887
        %v2920 = vpack.c.b16 %v2888, %v2888
        %v2921 = vpack.c.b16 %v2889, %v2889
        %v2922 = vpack.c.b16 %v2890, %v2890
        %v2923 = vpack.c.b16 %v2891, %v2891
        %v2924 = vpack.c.b16 %v2892, %v2892
        %v2925 = vpack.c.b16 %v2893, %v2893
        %v2926 = vpack.c.b16 %v2894, %v2894
        %v2927 = vpack.c.b16 %v2895, %v2895
        %v2928 = vpack.c.b16 %v2896, %v2896
        %v2929 = vpack.c.b16 %v2897, %v2897
        %v2930 = vpack.c.b16 %v2898, %v2898
        %v2931 = vpack.c.b16 %v2899, %v2899
        %v2932 = vpack.c.b16 %v2900, %v2900
        %v2933 = vpack.c.b16 %v2901, %v2901
        %v2934 = vpack.c.b16 %v2902, %v2902
        %v2935 = vpack.c.b16 %v2903, %v2903
        %v2936 = vpack.c.b16 %v2904, %v2904
        %v2937 = vpack.c.b16 %v2905, %v2905
        %v2938 = vpack.c.b16 %v2906, %v2906
        %v2939 = vpack.c.b16 %v2907, %v2907
        %2972 = vmatpush.bf16.msra.mxu0 %v1939
        %2973 = vmatpush.bf16.msra.mxu0 %v1938
        %2974 = vmatpush.bf16.msra.mxu0 %v1937
        %2975 = vmatpush.bf16.msra.mxu0 %v1936
        %2976 = vmatpush.bf16.msra.mxu0 %v1935
        %2977 = vmatpush.bf16.msra.mxu0 %v1934
        %2978 = vmatpush.bf16.msra.mxu0 %v1933
        %2979 = vmatpush.bf16.msra.mxu0 %v1932
        %2980 = vmatmul.bf16.gmra.mxu0 %v2908
        %v2981 = vpop.f32.mrf.mxu0
        %v2982 = vadd.f32 %v2857, %v2981
        %v2983 = vpop.f32.mrf.mxu0
        %2984 = vdwg.mxu0
        %2985 = vmatpush.bf16.msra.mxu0 %v1947
        %2986 = vmatpush.bf16.msra.mxu0 %v1946
        %2987 = vmatpush.bf16.msra.mxu0 %v1945
        %2988 = vmatpush.bf16.msra.mxu0 %v1944
        %2989 = vmatpush.bf16.msra.mxu0 %v1943
        %2990 = vmatpush.bf16.msra.mxu0 %v1942
        %2991 = vmatpush.bf16.msra.mxu0 %v1941
        %2992 = vmatpush.bf16.msra.mxu0 %v1940
        %2993 = vmatmul.bf16.gmra.mxu0 %v2909
        %v2994 = vpop.f32.mrf.mxu0
        %v2995 = vadd.f32 %v2982, %v2994
        %v2996 = vpop.f32.mrf.mxu0
        %2997 = vdwg.mxu0
        %2998 = vmatpush.bf16.msra.mxu0 %v1955
        %2999 = vmatpush.bf16.msra.mxu0 %v1954
        %3000 = vmatpush.bf16.msra.mxu0 %v1953
        %3001 = vmatpush.bf16.msra.mxu0 %v1952
        %3002 = vmatpush.bf16.msra.mxu0 %v1951
        %3003 = vmatpush.bf16.msra.mxu0 %v1950
        %3004 = vmatpush.bf16.msra.mxu0 %v1949
        %3005 = vmatpush.bf16.msra.mxu0 %v1948
        %3006 = vmatmul.bf16.gmra.mxu0 %v2910
        %v3007 = vpop.f32.mrf.mxu0
        %v3008 = vadd.f32 %v2995, %v3007
        %v3009 = vpop.f32.mrf.mxu0
        %3010 = vdwg.mxu0
        %3011 = vmatpush.bf16.msra.mxu0 %v1963
        %3012 = vmatpush.bf16.msra.mxu0 %v1962
        %3013 = vmatpush.bf16.msra.mxu0 %v1961
        %3014 = vmatpush.bf16.msra.mxu0 %v1960
        %3015 = vmatpush.bf16.msra.mxu0 %v1959
        %3016 = vmatpush.bf16.msra.mxu0 %v1958
        %3017 = vmatpush.bf16.msra.mxu0 %v1957
        %3018 = vmatpush.bf16.msra.mxu0 %v1956
        %3019 = vmatmul.bf16.gmra.mxu0 %v2911
        %v3020 = vpop.f32.mrf.mxu0
        %v3021 = vadd.f32 %v3008, %v3020
        %v3022 = vpop.f32.mrf.mxu0
        %3023 = vdwg.mxu0
        %3024 = vmatpush.bf16.msra.mxu0 %v1971
        %3025 = vmatpush.bf16.msra.mxu0 %v1970
        %3026 = vmatpush.bf16.msra.mxu0 %v1969
        %3027 = vmatpush.bf16.msra.mxu0 %v1968
        %3028 = vmatpush.bf16.msra.mxu0 %v1967
        %3029 = vmatpush.bf16.msra.mxu0 %v1966
        %3030 = vmatpush.bf16.msra.mxu0 %v1965
        %3031 = vmatpush.bf16.msra.mxu0 %v1964
        %3032 = vmatmul.bf16.gmra.mxu0 %v2912
        %v3033 = vpop.f32.mrf.mxu0
        %v3034 = vadd.f32 %v3021, %v3033
        %v3035 = vpop.f32.mrf.mxu0
        %3036 = vdwg.mxu0
        %3037 = vmatpush.bf16.msra.mxu0 %v1979
        %3038 = vmatpush.bf16.msra.mxu0 %v1978
        %3039 = vmatpush.bf16.msra.mxu0 %v1977
        %3040 = vmatpush.bf16.msra.mxu0 %v1976
        %3041 = vmatpush.bf16.msra.mxu0 %v1975
        %3042 = vmatpush.bf16.msra.mxu0 %v1974
        %3043 = vmatpush.bf16.msra.mxu0 %v1973
        %3044 = vmatpush.bf16.msra.mxu0 %v1972
        %3045 = vmatmul.bf16.gmra.mxu0 %v2913
        %v3046 = vpop.f32.mrf.mxu0
        %v3047 = vadd.f32 %v3034, %v3046
        %v3048 = vpop.f32.mrf.mxu0
        %3049 = vdwg.mxu0
        %3050 = vmatpush.bf16.msra.mxu0 %v1987
        %3051 = vmatpush.bf16.msra.mxu0 %v1986
        %3052 = vmatpush.bf16.msra.mxu0 %v1985
        %3053 = vmatpush.bf16.msra.mxu0 %v1984
        %3054 = vmatpush.bf16.msra.mxu0 %v1983
        %3055 = vmatpush.bf16.msra.mxu0 %v1982
        %3056 = vmatpush.bf16.msra.mxu0 %v1981
        %3057 = vmatpush.bf16.msra.mxu0 %v1980
        %3058 = vmatmul.bf16.gmra.mxu0 %v2914
        %v3059 = vpop.f32.mrf.mxu0
        %v3060 = vadd.f32 %v3047, %v3059
        %v3061 = vpop.f32.mrf.mxu0
        %3062 = vdwg.mxu0
        %3063 = vmatpush.bf16.msra.mxu0 %v1995
        %3064 = vmatpush.bf16.msra.mxu0 %v1994
        %3065 = vmatpush.bf16.msra.mxu0 %v1993
        %3066 = vmatpush.bf16.msra.mxu0 %v1992
        %3067 = vmatpush.bf16.msra.mxu0 %v1991
        %3068 = vmatpush.bf16.msra.mxu0 %v1990
        %3069 = vmatpush.bf16.msra.mxu0 %v1989
        %3070 = vmatpush.bf16.msra.mxu0 %v1988
        %3071 = vmatmul.bf16.gmra.mxu0 %v2915
        %v3072 = vpop.f32.mrf.mxu0
        %v3073 = vadd.f32 %v3060, %v3072
        %v3074 = vpop.f32.mrf.mxu0
        %3075 = vdwg.mxu0
        %3076 = vmatpush.bf16.msra.mxu0 %v2003
        %3077 = vmatpush.bf16.msra.mxu0 %v2002
        %3078 = vmatpush.bf16.msra.mxu0 %v2001
        %3079 = vmatpush.bf16.msra.mxu0 %v2000
        %3080 = vmatpush.bf16.msra.mxu0 %v1999
        %3081 = vmatpush.bf16.msra.mxu0 %v1998
        %3082 = vmatpush.bf16.msra.mxu0 %v1997
        %3083 = vmatpush.bf16.msra.mxu0 %v1996
        %3084 = vmatmul.bf16.gmra.mxu0 %v2916
        %v3085 = vpop.f32.mrf.mxu0
        %v3086 = vadd.f32 %v3073, %v3085
        %v3087 = vpop.f32.mrf.mxu0
        %3088 = vdwg.mxu0
        %3089 = vmatpush.bf16.msra.mxu0 %v2011
        %3090 = vmatpush.bf16.msra.mxu0 %v2010
        %3091 = vmatpush.bf16.msra.mxu0 %v2009
        %3092 = vmatpush.bf16.msra.mxu0 %v2008
        %3093 = vmatpush.bf16.msra.mxu0 %v2007
        %3094 = vmatpush.bf16.msra.mxu0 %v2006
        %3095 = vmatpush.bf16.msra.mxu0 %v2005
        %3096 = vmatpush.bf16.msra.mxu0 %v2004
        %3097 = vmatmul.bf16.gmra.mxu0 %v2917
        %v3098 = vpop.f32.mrf.mxu0
        %v3099 = vadd.f32 %v3086, %v3098
        %v3100 = vpop.f32.mrf.mxu0
        %3101 = vdwg.mxu0
        %3102 = vmatpush.bf16.msra.mxu0 %v2019
        %3103 = vmatpush.bf16.msra.mxu0 %v2018
        %3104 = vmatpush.bf16.msra.mxu0 %v2017
        %3105 = vmatpush.bf16.msra.mxu0 %v2016
        %3106 = vmatpush.bf16.msra.mxu0 %v2015
        %3107 = vmatpush.bf16.msra.mxu0 %v2014
        %3108 = vmatpush.bf16.msra.mxu0 %v2013
        %3109 = vmatpush.bf16.msra.mxu0 %v2012
        %3110 = vmatmul.bf16.gmra.mxu0 %v2918
        %v3111 = vpop.f32.mrf.mxu0
        %v3112 = vadd.f32 %v3099, %v3111
        %v3113 = vpop.f32.mrf.mxu0
        %3114 = vdwg.mxu0
        %3115 = vmatpush.bf16.msra.mxu0 %v2027
        %3116 = vmatpush.bf16.msra.mxu0 %v2026
        %3117 = vmatpush.bf16.msra.mxu0 %v2025
        %3118 = vmatpush.bf16.msra.mxu0 %v2024
        %3119 = vmatpush.bf16.msra.mxu0 %v2023
        %3120 = vmatpush.bf16.msra.mxu0 %v2022
        %3121 = vmatpush.bf16.msra.mxu0 %v2021
        %3122 = vmatpush.bf16.msra.mxu0 %v2020
        %3123 = vmatmul.bf16.gmra.mxu0 %v2919
        %v3124 = vpop.f32.mrf.mxu0
        %v3125 = vadd.f32 %v3112, %v3124
        %v3126 = vpop.f32.mrf.mxu0
        %3127 = vdwg.mxu0
        %3128 = vmatpush.bf16.msra.mxu0 %v2035
        %3129 = vmatpush.bf16.msra.mxu0 %v2034
        %3130 = vmatpush.bf16.msra.mxu0 %v2033
        %3131 = vmatpush.bf16.msra.mxu0 %v2032
        %3132 = vmatpush.bf16.msra.mxu0 %v2031
        %3133 = vmatpush.bf16.msra.mxu0 %v2030
        %3134 = vmatpush.bf16.msra.mxu0 %v2029
        %3135 = vmatpush.bf16.msra.mxu0 %v2028
        %3136 = vmatmul.bf16.gmra.mxu0 %v2920
        %v3137 = vpop.f32.mrf.mxu0
        %v3138 = vadd.f32 %v3125, %v3137
        %v3139 = vpop.f32.mrf.mxu0
        %3140 = vdwg.mxu0
        %3141 = vmatpush.bf16.msra.mxu0 %v2043
        %3142 = vmatpush.bf16.msra.mxu0 %v2042
        %3143 = vmatpush.bf16.msra.mxu0 %v2041
        %3144 = vmatpush.bf16.msra.mxu0 %v2040
        %3145 = vmatpush.bf16.msra.mxu0 %v2039
        %3146 = vmatpush.bf16.msra.mxu0 %v2038
        %3147 = vmatpush.bf16.msra.mxu0 %v2037
        %3148 = vmatpush.bf16.msra.mxu0 %v2036
        %3149 = vmatmul.bf16.gmra.mxu0 %v2921
        %v3150 = vpop.f32.mrf.mxu0
        %v3151 = vadd.f32 %v3138, %v3150
        %v3152 = vpop.f32.mrf.mxu0
        %3153 = vdwg.mxu0
        %3154 = vmatpush.bf16.msra.mxu0 %v2051
        %3155 = vmatpush.bf16.msra.mxu0 %v2050
        %3156 = vmatpush.bf16.msra.mxu0 %v2049
        %3157 = vmatpush.bf16.msra.mxu0 %v2048
        %3158 = vmatpush.bf16.msra.mxu0 %v2047
        %3159 = vmatpush.bf16.msra.mxu0 %v2046
        %3160 = vmatpush.bf16.msra.mxu0 %v2045
        %3161 = vmatpush.bf16.msra.mxu0 %v2044
        %3162 = vmatmul.bf16.gmra.mxu0 %v2922
        %v3163 = vpop.f32.mrf.mxu0
        %v3164 = vadd.f32 %v3151, %v3163
        %v3165 = vpop.f32.mrf.mxu0
        %3166 = vdwg.mxu0
        %3167 = vmatpush.bf16.msra.mxu0 %v2059
        %3168 = vmatpush.bf16.msra.mxu0 %v2058
        %3169 = vmatpush.bf16.msra.mxu0 %v2057
        %3170 = vmatpush.bf16.msra.mxu0 %v2056
        %3171 = vmatpush.bf16.msra.mxu0 %v2055
        %3172 = vmatpush.bf16.msra.mxu0 %v2054
        %3173 = vmatpush.bf16.msra.mxu0 %v2053
        %3174 = vmatpush.bf16.msra.mxu0 %v2052
        %3175 = vmatmul.bf16.gmra.mxu0 %v2923
        %v3176 = vpop.f32.mrf.mxu0
        %v3177 = vadd.f32 %v3164, %v3176
        %v3178 = vpop.f32.mrf.mxu0
        %3179 = vdwg.mxu0
        %3180 = vmatpush.bf16.msra.mxu0 %v2067
        %3181 = vmatpush.bf16.msra.mxu0 %v2066
        %3182 = vmatpush.bf16.msra.mxu0 %v2065
        %3183 = vmatpush.bf16.msra.mxu0 %v2064
        %3184 = vmatpush.bf16.msra.mxu0 %v2063
        %3185 = vmatpush.bf16.msra.mxu0 %v2062
        %3186 = vmatpush.bf16.msra.mxu0 %v2061
        %3187 = vmatpush.bf16.msra.mxu0 %v2060
        %3188 = vmatmul.bf16.gmra.mxu0 %v2924
        %v3189 = vpop.f32.mrf.mxu0
        %v3190 = vadd.f32 %v3177, %v3189
        %v3191 = vpop.f32.mrf.mxu0
        %3192 = vdwg.mxu0
        %3193 = vmatpush.bf16.msra.mxu0 %v2075
        %3194 = vmatpush.bf16.msra.mxu0 %v2074
        %3195 = vmatpush.bf16.msra.mxu0 %v2073
        %3196 = vmatpush.bf16.msra.mxu0 %v2072
        %3197 = vmatpush.bf16.msra.mxu0 %v2071
        %3198 = vmatpush.bf16.msra.mxu0 %v2070
        %3199 = vmatpush.bf16.msra.mxu0 %v2069
        %3200 = vmatpush.bf16.msra.mxu0 %v2068
        %3201 = vmatmul.bf16.gmra.mxu0 %v2925
        %v3202 = vpop.f32.mrf.mxu0
        %v3203 = vadd.f32 %v3190, %v3202
        %v3204 = vpop.f32.mrf.mxu0
        %3205 = vdwg.mxu0
        %3206 = vmatpush.bf16.msra.mxu0 %v2083
        %3207 = vmatpush.bf16.msra.mxu0 %v2082
        %3208 = vmatpush.bf16.msra.mxu0 %v2081
        %3209 = vmatpush.bf16.msra.mxu0 %v2080
        %3210 = vmatpush.bf16.msra.mxu0 %v2079
        %3211 = vmatpush.bf16.msra.mxu0 %v2078
        %3212 = vmatpush.bf16.msra.mxu0 %v2077
        %3213 = vmatpush.bf16.msra.mxu0 %v2076
        %3214 = vmatmul.bf16.gmra.mxu0 %v2926
        %v3215 = vpop.f32.mrf.mxu0
        %v3216 = vadd.f32 %v3203, %v3215
        %v3217 = vpop.f32.mrf.mxu0
        %3218 = vdwg.mxu0
        %3219 = vmatpush.bf16.msra.mxu0 %v2091
        %3220 = vmatpush.bf16.msra.mxu0 %v2090
        %3221 = vmatpush.bf16.msra.mxu0 %v2089
        %3222 = vmatpush.bf16.msra.mxu0 %v2088
        %3223 = vmatpush.bf16.msra.mxu0 %v2087
        %3224 = vmatpush.bf16.msra.mxu0 %v2086
        %3225 = vmatpush.bf16.msra.mxu0 %v2085
        %3226 = vmatpush.bf16.msra.mxu0 %v2084
        %3227 = vmatmul.bf16.gmra.mxu0 %v2927
        %v3228 = vpop.f32.mrf.mxu0
        %v3229 = vadd.f32 %v3216, %v3228
        %v3230 = vpop.f32.mrf.mxu0
        %3231 = vdwg.mxu0
        %3232 = vmatpush.bf16.msra.mxu0 %v2099
        %3233 = vmatpush.bf16.msra.mxu0 %v2098
        %3234 = vmatpush.bf16.msra.mxu0 %v2097
        %3235 = vmatpush.bf16.msra.mxu0 %v2096
        %3236 = vmatpush.bf16.msra.mxu0 %v2095
        %3237 = vmatpush.bf16.msra.mxu0 %v2094
        %3238 = vmatpush.bf16.msra.mxu0 %v2093
        %3239 = vmatpush.bf16.msra.mxu0 %v2092
        %3240 = vmatmul.bf16.gmra.mxu0 %v2928
        %v3241 = vpop.f32.mrf.mxu0
        %v3242 = vadd.f32 %v3229, %v3241
        %v3243 = vpop.f32.mrf.mxu0
        %3244 = vdwg.mxu0
        %3245 = vmatpush.bf16.msra.mxu0 %v2107
        %3246 = vmatpush.bf16.msra.mxu0 %v2106
        %3247 = vmatpush.bf16.msra.mxu0 %v2105
        %3248 = vmatpush.bf16.msra.mxu0 %v2104
        %3249 = vmatpush.bf16.msra.mxu0 %v2103
        %3250 = vmatpush.bf16.msra.mxu0 %v2102
        %3251 = vmatpush.bf16.msra.mxu0 %v2101
        %3252 = vmatpush.bf16.msra.mxu0 %v2100
        %3253 = vmatmul.bf16.gmra.mxu0 %v2929
        %v3254 = vpop.f32.mrf.mxu0
        %v3255 = vadd.f32 %v3242, %v3254
        %v3256 = vpop.f32.mrf.mxu0
        %3257 = vdwg.mxu0
        %3258 = vmatpush.bf16.msra.mxu0 %v2115
        %3259 = vmatpush.bf16.msra.mxu0 %v2114
        %3260 = vmatpush.bf16.msra.mxu0 %v2113
        %3261 = vmatpush.bf16.msra.mxu0 %v2112
        %3262 = vmatpush.bf16.msra.mxu0 %v2111
        %3263 = vmatpush.bf16.msra.mxu0 %v2110
        %3264 = vmatpush.bf16.msra.mxu0 %v2109
        %3265 = vmatpush.bf16.msra.mxu0 %v2108
        %3266 = vmatmul.bf16.gmra.mxu0 %v2930
        %v3267 = vpop.f32.mrf.mxu0
        %v3268 = vadd.f32 %v3255, %v3267
        %v3269 = vpop.f32.mrf.mxu0
        %3270 = vdwg.mxu0
        %3271 = vmatpush.bf16.msra.mxu0 %v2123
        %3272 = vmatpush.bf16.msra.mxu0 %v2122
        %3273 = vmatpush.bf16.msra.mxu0 %v2121
        %3274 = vmatpush.bf16.msra.mxu0 %v2120
        %3275 = vmatpush.bf16.msra.mxu0 %v2119
        %3276 = vmatpush.bf16.msra.mxu0 %v2118
        %3277 = vmatpush.bf16.msra.mxu0 %v2117
        %3278 = vmatpush.bf16.msra.mxu0 %v2116
        %3279 = vmatmul.bf16.gmra.mxu0 %v2931
        %v3280 = vpop.f32.mrf.mxu0
        %v3281 = vadd.f32 %v3268, %v3280
        %v3282 = vpop.f32.mrf.mxu0
        %3283 = vdwg.mxu0
        %3284 = vmatpush.bf16.msra.mxu0 %v2131
        %3285 = vmatpush.bf16.msra.mxu0 %v2130
        %3286 = vmatpush.bf16.msra.mxu0 %v2129
        %3287 = vmatpush.bf16.msra.mxu0 %v2128
        %3288 = vmatpush.bf16.msra.mxu0 %v2127
        %3289 = vmatpush.bf16.msra.mxu0 %v2126
        %3290 = vmatpush.bf16.msra.mxu0 %v2125
        %3291 = vmatpush.bf16.msra.mxu0 %v2124
        %3292 = vmatmul.bf16.gmra.mxu0 %v2932
        %v3293 = vpop.f32.mrf.mxu0
        %v3294 = vadd.f32 %v3281, %v3293
        %v3295 = vpop.f32.mrf.mxu0
        %3296 = vdwg.mxu0
        %3297 = vmatpush.bf16.msra.mxu0 %v2139
        %3298 = vmatpush.bf16.msra.mxu0 %v2138
        %3299 = vmatpush.bf16.msra.mxu0 %v2137
        %3300 = vmatpush.bf16.msra.mxu0 %v2136
        %3301 = vmatpush.bf16.msra.mxu0 %v2135
        %3302 = vmatpush.bf16.msra.mxu0 %v2134
        %3303 = vmatpush.bf16.msra.mxu0 %v2133
        %3304 = vmatpush.bf16.msra.mxu0 %v2132
        %3305 = vmatmul.bf16.gmra.mxu0 %v2933
        %v3306 = vpop.f32.mrf.mxu0
        %v3307 = vadd.f32 %v3294, %v3306
        %v3308 = vpop.f32.mrf.mxu0
        %3309 = vdwg.mxu0
        %3310 = vmatpush.bf16.msra.mxu0 %v2147
        %3311 = vmatpush.bf16.msra.mxu0 %v2146
        %3312 = vmatpush.bf16.msra.mxu0 %v2145
        %3313 = vmatpush.bf16.msra.mxu0 %v2144
        %3314 = vmatpush.bf16.msra.mxu0 %v2143
        %3315 = vmatpush.bf16.msra.mxu0 %v2142
        %3316 = vmatpush.bf16.msra.mxu0 %v2141
        %3317 = vmatpush.bf16.msra.mxu0 %v2140
        %3318 = vmatmul.bf16.gmra.mxu0 %v2934
        %v3319 = vpop.f32.mrf.mxu0
        %v3320 = vadd.f32 %v3307, %v3319
        %v3321 = vpop.f32.mrf.mxu0
        %3322 = vdwg.mxu0
        %3323 = vmatpush.bf16.msra.mxu0 %v2155
        %3324 = vmatpush.bf16.msra.mxu0 %v2154
        %3325 = vmatpush.bf16.msra.mxu0 %v2153
        %3326 = vmatpush.bf16.msra.mxu0 %v2152
        %3327 = vmatpush.bf16.msra.mxu0 %v2151
        %3328 = vmatpush.bf16.msra.mxu0 %v2150
        %3329 = vmatpush.bf16.msra.mxu0 %v2149
        %3330 = vmatpush.bf16.msra.mxu0 %v2148
        %3331 = vmatmul.bf16.gmra.mxu0 %v2935
        %v3332 = vpop.f32.mrf.mxu0
        %v3333 = vadd.f32 %v3320, %v3332
        %v3334 = vpop.f32.mrf.mxu0
        %3335 = vdwg.mxu0
        %3336 = vmatpush.bf16.msra.mxu0 %v2163
        %3337 = vmatpush.bf16.msra.mxu0 %v2162
        %3338 = vmatpush.bf16.msra.mxu0 %v2161
        %3339 = vmatpush.bf16.msra.mxu0 %v2160
        %3340 = vmatpush.bf16.msra.mxu0 %v2159
        %3341 = vmatpush.bf16.msra.mxu0 %v2158
        %3342 = vmatpush.bf16.msra.mxu0 %v2157
        %3343 = vmatpush.bf16.msra.mxu0 %v2156
        %3344 = vmatmul.bf16.gmra.mxu0 %v2936
        %v3345 = vpop.f32.mrf.mxu0
        %v3346 = vadd.f32 %v3333, %v3345
        %v3347 = vpop.f32.mrf.mxu0
        %3348 = vdwg.mxu0
        %3349 = vmatpush.bf16.msra.mxu0 %v2171
        %3350 = vmatpush.bf16.msra.mxu0 %v2170
        %3351 = vmatpush.bf16.msra.mxu0 %v2169
        %3352 = vmatpush.bf16.msra.mxu0 %v2168
        %3353 = vmatpush.bf16.msra.mxu0 %v2167
        %3354 = vmatpush.bf16.msra.mxu0 %v2166
        %3355 = vmatpush.bf16.msra.mxu0 %v2165
        %3356 = vmatpush.bf16.msra.mxu0 %v2164
        %3357 = vmatmul.bf16.gmra.mxu0 %v2937
        %v3358 = vpop.f32.mrf.mxu0
        %v3359 = vadd.f32 %v3346, %v3358
        %v3360 = vpop.f32.mrf.mxu0
        %3361 = vdwg.mxu0
        %3362 = vmatpush.bf16.msra.mxu0 %v2179
        %3363 = vmatpush.bf16.msra.mxu0 %v2178
        %3364 = vmatpush.bf16.msra.mxu0 %v2177
        %3365 = vmatpush.bf16.msra.mxu0 %v2176
        %3366 = vmatpush.bf16.msra.mxu0 %v2175
        %3367 = vmatpush.bf16.msra.mxu0 %v2174
        %3368 = vmatpush.bf16.msra.mxu0 %v2173
        %3369 = vmatpush.bf16.msra.mxu0 %v2172
        %3370 = vmatmul.bf16.gmra.mxu0 %v2938
        %v3371 = vpop.f32.mrf.mxu0
        %v3372 = vadd.f32 %v3359, %v3371
        %v3373 = vpop.f32.mrf.mxu0
        %3374 = vdwg.mxu0
        %3375 = vmatpush.bf16.msra.mxu0 %v2187
        %3376 = vmatpush.bf16.msra.mxu0 %v2186
        %3377 = vmatpush.bf16.msra.mxu0 %v2185
        %3378 = vmatpush.bf16.msra.mxu0 %v2184
        %3379 = vmatpush.bf16.msra.mxu0 %v2183
        %3380 = vmatpush.bf16.msra.mxu0 %v2182
        %3381 = vmatpush.bf16.msra.mxu0 %v2181
        %3382 = vmatpush.bf16.msra.mxu0 %v2180
        %3383 = vmatmul.bf16.gmra.mxu0 %v2939
        %v3384 = vpop.f32.mrf.mxu0
        %v3385 = vadd.f32 %v3372, %v3384
        %v3386 = vpop.f32.mrf.mxu0
        %3387 = vdwg.mxu0
        %v3388 = vld [vmem:[%s4] sm:$0xff]
        %v3389 = vld [vmem:[%s5] sm:$0xff]
        %v3390 = vld [vmem:[%s5 + $0x8] sm:$0xff]
        %v3391 = vld [vmem:[%s5 + $0x10] sm:$0xff]
        %v3392 = vld [vmem:[%s5 + $0x18] sm:$0xff]
        %v3393 = vld [vmem:[%s5 + $0x20] sm:$0xff]
        %v3394 = vld [vmem:[%s5 + $0x28] sm:$0xff]
        %v3395 = vld [vmem:[%s5 + $0x30] sm:$0xff]
        %v3396 = vld [vmem:[%s5 + $0x38] sm:$0xff]
        %v3397 = vld [vmem:[%s5 + $0x40] sm:$0xff]
        %v3398 = vld [vmem:[%s5 + $0x48] sm:$0xff]
        %v3399 = vld [vmem:[%s5 + $0x50] sm:$0xff]
        %v3400 = vld [vmem:[%s5 + $0x58] sm:$0xff]
        %v3401 = vld [vmem:[%s5 + $0x60] sm:$0xff]
        %v3402 = vld [vmem:[%s5 + $0x68] sm:$0xff]
        %v3403 = vld [vmem:[%s5 + $0x70] sm:$0xff]
        %v3404 = vld [vmem:[%s5 + $0x78] sm:$0xff]
        %v3405 = vld [vmem:[%s5 + $0x80] sm:$0xff]
        %v3406 = vld [vmem:[%s5 + $0x88] sm:$0xff]
        %v3407 = vld [vmem:[%s5 + $0x90] sm:$0xff]
        %v3408 = vld [vmem:[%s5 + $0x98] sm:$0xff]
        %v3409 = vld [vmem:[%s5 + $0xa0] sm:$0xff]
        %v3410 = vld [vmem:[%s5 + $0xa8] sm:$0xff]
        %v3411 = vld [vmem:[%s5 + $0xb0] sm:$0xff]
        %v3412 = vld [vmem:[%s5 + $0xb8] sm:$0xff]
        %v3413 = vld [vmem:[%s5 + $0xc0] sm:$0xff]
        %v3414 = vld [vmem:[%s5 + $0xc8] sm:$0xff]
        %v3415 = vld [vmem:[%s5 + $0xd0] sm:$0xff]
        %v3416 = vld [vmem:[%s5 + $0xd8] sm:$0xff]
        %v3417 = vld [vmem:[%s5 + $0xe0] sm:$0xff]
        %v3418 = vld [vmem:[%s5 + $0xe8] sm:$0xff]
        %v3419 = vld [vmem:[%s5 + $0xf0] sm:$0xff]
        %v3420 = vld [vmem:[%s5 + $0xf8] sm:$0xff]
        %3422 = vrot.lane.b32.xlu0 %v3385, 1
        %v3423 = vpop.permute.xlu0 %3422
        %vm3425 = vcmask 7168
        %v3426 = vsel %vm3425, 0.0, %v3423
        %vm3427 = vcmask 531456
        %v3428 = vsel %vm3427, %v3426, 0.0
        %3430 = vrot.lane.b32.xlu0 %v3428, 127
        %v3431 = vpop.permute.xlu0 %3430
        %3433 = vrot.lane.b32.xlu0 %v3428, 126
        %v3434 = vpop.permute.xlu0 %3433
        %3436 = vrot.lane.b32.xlu0 %v3428, 125
        %v3437 = vpop.permute.xlu0 %3436
        %vm3439 = vcmask 261120
        %v3441 = vsel %vm3439, %v3388, 0
        %3443 = vmatpush.msra.mxu0 0.0
        %3444 = vmatpush.msra.mxu0 0.0
        %3445 = vmatpush.msra.mxu0 0.0
        %3446 = vmatpush.msra.mxu0 0.0
        %3447 = vmatpush.msra.mxu0 0.0
        %3448 = vmatpush.msra.mxu0 0.0
        %3449 = vmatpush.msra.mxu0 0.0
        %3450 = vmatpush.msra.mxu0 0.0
        %3451 = vmatpush.msra.mxu0 0.0
        %3452 = vmatpush.msra.mxu0 0.0
        %3453 = vmatpush.msra.mxu0 0.0
        %3454 = vmatpush.msra.mxu0 0.0
        %3455 = vmatpush.msra.mxu0 %v3437
        %3456 = vmatpush.msra.mxu0 %v3434
        %3457 = vmatpush.msra.mxu0 %v3431
        %3458 = vmatpush.msra.mxu0 %v3428
        %3459 = vmatmul.f32.gmra.mxu0 %v3441
        %v3460 = vpop.f32.mrf.mxu0
        %v3461 = vadd.f32 0.0, %v3460
        %3462 = vdwg.mxu0
        %v3463 = vrot.slane %v3385, 7
        %vm3465 = vcmask 1040384
        %v3466 = vsel %vm3465, 0.0, %v3463
        %v3467 = vsel %vm3465, %v3463, 0.0
        %vm3470 = vcmask 1046528
        %v3471 = vrot.slane %v3466, 1
        %v3472 = vrot.slane %v3467, 1
        %v3473 = vsel %vm3470, %v3471, %v3472
        %3474 = vrot.lane.b32.xlu0 %v3473, 64
        %v3475 = vpop.permute.xlu0 %3474
        %vm3477 = vcmask 1045504
        %v3478 = vrot.slane %v3466, 2
        %v3479 = vrot.slane %v3467, 2
        %v3480 = vsel %vm3477, %v3478, %v3479
        %vm3482 = vcmask 1044480
        %v3483 = vrot.slane %v3466, 3
        %v3484 = vrot.slane %v3467, 3
        %v3485 = vsel %vm3482, %v3483, %v3484
        %3486 = vrot.lane.b32.xlu0 %v3485, 64
        %v3487 = vpop.permute.xlu0 %3486
        %vm3489 = vcmask 523264
        %v3490 = vsel %vm3489, %v3466, %v3475
        %v3491 = vsel %vm3489, %v3480, %v3487
        %3492 = vmatpush.msra.mxu0 %v3404
        %3493 = vmatpush.msra.mxu0 %v3403
        %3494 = vmatpush.msra.mxu0 %v3402
        %3495 = vmatpush.msra.mxu0 %v3401
        %3496 = vmatpush.msra.mxu0 %v3400
        %3497 = vmatpush.msra.mxu0 %v3399
        %3498 = vmatpush.msra.mxu0 %v3398
        %3499 = vmatpush.msra.mxu0 %v3397
        %3500 = vmatpush.msra.mxu0 %v3396
        %3501 = vmatpush.msra.mxu0 %v3395
        %3502 = vmatpush.msra.mxu0 %v3394
        %3503 = vmatpush.msra.mxu0 %v3393
        %3504 = vmatpush.msra.mxu0 %v3392
        %3505 = vmatpush.msra.mxu0 %v3391
        %3506 = vmatpush.msra.mxu0 %v3390
        %3507 = vmatpush.msra.mxu0 %v3389
        %3508 = vmatmul.f32.gmra.mxu0 %v3490
        %v3509 = vpop.f32.mrf.mxu0
        %v3510 = vadd.f32 0.0, %v3509
        %3511 = vdwg.mxu0
        %3512 = vmatpush.msra.mxu0 %v3420
        %3513 = vmatpush.msra.mxu0 %v3419
        %3514 = vmatpush.msra.mxu0 %v3418
        %3515 = vmatpush.msra.mxu0 %v3417
        %3516 = vmatpush.msra.mxu0 %v3416
        %3517 = vmatpush.msra.mxu0 %v3415
        %3518 = vmatpush.msra.mxu0 %v3414
        %3519 = vmatpush.msra.mxu0 %v3413
        %3520 = vmatpush.msra.mxu0 %v3412
        %3521 = vmatpush.msra.mxu0 %v3411
        %3522 = vmatpush.msra.mxu0 %v3410
        %3523 = vmatpush.msra.mxu0 %v3409
        %3524 = vmatpush.msra.mxu0 %v3408
        %3525 = vmatpush.msra.mxu0 %v3407
        %3526 = vmatpush.msra.mxu0 %v3406
        %3527 = vmatpush.msra.mxu0 %v3405
        %3528 = vmatmul.f32.gmra.mxu0 %v3491
        %v3529 = vpop.f32.mrf.mxu0
        %v3530 = vadd.f32 %v3510, %v3529
        %3531 = vdwg.mxu0
        %v3532 = vxor.u32 %v3461, 2147483648
        %v3533 = vmul.f32 %v3532, 1.442695
        %v3534 = vpow.pop %v3533
        %v3535 = vadd.f32 %v3534, 1.0
        %v3536 = vrcp.pop %v3535
        %v3537 = vmul.f32 %v3535, %v3536
        %v3538 = vsub.f32 1.0, %v3537
        %v3539 = vmul.f32 %v3536, %v3538
        %v3540 = vadd.f32 %v3536, %v3539
        %vm3541 = vweird.f32 %v3535
        %vm3542 = vweird.f32 %v3536
        %vm3543 = vmor %vm3541, %vm3542
        %v3544 = vsel %vm3543, %v3536, %v3540
        %v3545 = vand.u32 2147483647, %v3535
        %vm3546 = vcmp.eq.f32.partialorder %v3545, 8.507059e+37
        %v3547 = vand.u32 %v3535, 2147483648
        %v3548 = vor.u32 1.1754944e-38, %v3547
        %v3549 = vsel %vm3546, %v3548, %v3544
        %v3550 = vmul.f32 1.0, %v3549
        %v3551 = vxor.u32 %v3530, 2147483648
        %v3552 = vmul.f32 %v3551, 1.442695
        %v3553 = vpow.pop %v3552
        %v3554 = vadd.f32 %v3553, 1.0
        %v3555 = vrcp.pop %v3554
        %v3556 = vmul.f32 %v3554, %v3555
        %v3557 = vsub.f32 1.0, %v3556
        %v3558 = vmul.f32 %v3555, %v3557
        %v3559 = vadd.f32 %v3555, %v3558
        %vm3560 = vweird.f32 %v3554
        %vm3561 = vweird.f32 %v3555
        %vm3562 = vmor %vm3560, %vm3561
        %v3563 = vsel %vm3562, %v3555, %v3559
        %v3564 = vand.u32 2147483647, %v3554
        %vm3565 = vcmp.eq.f32.partialorder %v3564, 8.507059e+37
        %v3566 = vand.u32 %v3554, 2147483648
        %v3567 = vor.u32 1.1754944e-38, %v3566
        %v3568 = vsel %vm3565, %v3567, %v3563
        %v3569 = vmul.f32 1.0, %v3568
        %v3570 = vmul.f32 %v3550, %v3569
        %s3571 = sld [smem:[#allocation2]]
        %v3572 = vstv %s3571
        %v3573 = vmul.f32 %v3570, %v3572
        %v3574 = vld [vmem:[%s3] sm:$0xff]
        %v3575 = vld [vmem:[%s3 + $0x8] sm:$0xff]
        %v3576 = vld [vmem:[%s3 + $0x10] sm:$0xff]
        %v3577 = vld [vmem:[%s3 + $0x18] sm:$0xff]
        %v3578 = vld [vmem:[%s3 + $0x20] sm:$0xff]
        %v3579 = vld [vmem:[%s3 + $0x28] sm:$0xff]
        %v3580 = vld [vmem:[%s3 + $0x30] sm:$0xff]
        %v3581 = vld [vmem:[%s3 + $0x38] sm:$0xff]
        %v3582 = vld [vmem:[%s3 + $0x40] sm:$0xff]
        %v3583 = vld [vmem:[%s3 + $0x48] sm:$0xff]
        %v3584 = vld [vmem:[%s3 + $0x50] sm:$0xff]
        %v3585 = vld [vmem:[%s3 + $0x58] sm:$0xff]
        %v3586 = vld [vmem:[%s3 + $0x60] sm:$0xff]
        %v3587 = vld [vmem:[%s3 + $0x68] sm:$0xff]
        %v3588 = vld [vmem:[%s3 + $0x70] sm:$0xff]
        %v3589 = vld [vmem:[%s3 + $0x78] sm:$0xff]
        %v3590 = vld [vmem:[%s3 + $0x80] sm:$0xff]
        %v3591 = vld [vmem:[%s3 + $0x88] sm:$0xff]
        %v3592 = vld [vmem:[%s3 + $0x90] sm:$0xff]
        %v3593 = vld [vmem:[%s3 + $0x98] sm:$0xff]
        %v3594 = vld [vmem:[%s3 + $0xa0] sm:$0xff]
        %v3595 = vld [vmem:[%s3 + $0xa8] sm:$0xff]
        %v3596 = vld [vmem:[%s3 + $0xb0] sm:$0xff]
        %v3597 = vld [vmem:[%s3 + $0xb8] sm:$0xff]
        %v3598 = vld [vmem:[%s3 + $0xc0] sm:$0xff]
        %v3599 = vld [vmem:[%s3 + $0xc8] sm:$0xff]
        %v3600 = vld [vmem:[%s3 + $0xd0] sm:$0xff]
        %v3601 = vld [vmem:[%s3 + $0xd8] sm:$0xff]
        %v3602 = vld [vmem:[%s3 + $0xe0] sm:$0xff]
        %v3603 = vld [vmem:[%s3 + $0xe8] sm:$0xff]
        %v3604 = vld [vmem:[%s3 + $0xf0] sm:$0xff]
        %v3605 = vld [vmem:[%s3 + $0xf8] sm:$0xff]
        %v3606 = vld [vmem:[%s3 + $0x100] sm:$0xff]
        %v3607 = vld [vmem:[%s3 + $0x108] sm:$0xff]
        %v3608 = vld [vmem:[%s3 + $0x110] sm:$0xff]
        %v3609 = vld [vmem:[%s3 + $0x118] sm:$0xff]
        %v3610 = vld [vmem:[%s3 + $0x120] sm:$0xff]
        %v3611 = vld [vmem:[%s3 + $0x128] sm:$0xff]
        %v3612 = vld [vmem:[%s3 + $0x130] sm:$0xff]
        %v3613 = vld [vmem:[%s3 + $0x138] sm:$0xff]
        %v3614 = vld [vmem:[%s3 + $0x140] sm:$0xff]
        %v3615 = vld [vmem:[%s3 + $0x148] sm:$0xff]
        %v3616 = vld [vmem:[%s3 + $0x150] sm:$0xff]
        %v3617 = vld [vmem:[%s3 + $0x158] sm:$0xff]
        %v3618 = vld [vmem:[%s3 + $0x160] sm:$0xff]
        %v3619 = vld [vmem:[%s3 + $0x168] sm:$0xff]
        %v3620 = vld [vmem:[%s3 + $0x170] sm:$0xff]
        %v3621 = vld [vmem:[%s3 + $0x178] sm:$0xff]
        %v3622 = vld [vmem:[%s3 + $0x180] sm:$0xff]
        %v3623 = vld [vmem:[%s3 + $0x188] sm:$0xff]
        %v3624 = vld [vmem:[%s3 + $0x190] sm:$0xff]
        %v3625 = vld [vmem:[%s3 + $0x198] sm:$0xff]
        %v3626 = vld [vmem:[%s3 + $0x1a0] sm:$0xff]
        %v3627 = vld [vmem:[%s3 + $0x1a8] sm:$0xff]
        %v3628 = vld [vmem:[%s3 + $0x1b0] sm:$0xff]
        %v3629 = vld [vmem:[%s3 + $0x1b8] sm:$0xff]
        %v3630 = vld [vmem:[%s3 + $0x1c0] sm:$0xff]
        %v3631 = vld [vmem:[%s3 + $0x1c8] sm:$0xff]
        %v3632 = vld [vmem:[%s3 + $0x1d0] sm:$0xff]
        %v3633 = vld [vmem:[%s3 + $0x1d8] sm:$0xff]
        %v3634 = vld [vmem:[%s3 + $0x1e0] sm:$0xff]
        %v3635 = vld [vmem:[%s3 + $0x1e8] sm:$0xff]
        %v3636 = vld [vmem:[%s3 + $0x1f0] sm:$0xff]
        %v3637 = vld [vmem:[%s3 + $0x1f8] sm:$0xff]
        %v3638 = vld [vmem:[%s3 + $0x200] sm:$0xff]
        %v3639 = vld [vmem:[%s3 + $0x208] sm:$0xff]
        %v3640 = vld [vmem:[%s3 + $0x210] sm:$0xff]
        %v3641 = vld [vmem:[%s3 + $0x218] sm:$0xff]
        %v3642 = vld [vmem:[%s3 + $0x220] sm:$0xff]
        %v3643 = vld [vmem:[%s3 + $0x228] sm:$0xff]
        %v3644 = vld [vmem:[%s3 + $0x230] sm:$0xff]
        %v3645 = vld [vmem:[%s3 + $0x238] sm:$0xff]
        %v3646 = vld [vmem:[%s3 + $0x240] sm:$0xff]
        %v3647 = vld [vmem:[%s3 + $0x248] sm:$0xff]
        %v3648 = vld [vmem:[%s3 + $0x250] sm:$0xff]
        %v3649 = vld [vmem:[%s3 + $0x258] sm:$0xff]
        %v3650 = vld [vmem:[%s3 + $0x260] sm:$0xff]
        %v3651 = vld [vmem:[%s3 + $0x268] sm:$0xff]
        %v3652 = vld [vmem:[%s3 + $0x270] sm:$0xff]
        %v3653 = vld [vmem:[%s3 + $0x278] sm:$0xff]
        %v3654 = vld [vmem:[%s3 + $0x280] sm:$0xff]
        %v3655 = vld [vmem:[%s3 + $0x288] sm:$0xff]
        %v3656 = vld [vmem:[%s3 + $0x290] sm:$0xff]
        %v3657 = vld [vmem:[%s3 + $0x298] sm:$0xff]
        %v3658 = vld [vmem:[%s3 + $0x2a0] sm:$0xff]
        %v3659 = vld [vmem:[%s3 + $0x2a8] sm:$0xff]
        %v3660 = vld [vmem:[%s3 + $0x2b0] sm:$0xff]
        %v3661 = vld [vmem:[%s3 + $0x2b8] sm:$0xff]
        %v3662 = vld [vmem:[%s3 + $0x2c0] sm:$0xff]
        %v3663 = vld [vmem:[%s3 + $0x2c8] sm:$0xff]
        %v3664 = vld [vmem:[%s3 + $0x2d0] sm:$0xff]
        %v3665 = vld [vmem:[%s3 + $0x2d8] sm:$0xff]
        %v3666 = vld [vmem:[%s3 + $0x2e0] sm:$0xff]
        %v3667 = vld [vmem:[%s3 + $0x2e8] sm:$0xff]
        %v3668 = vld [vmem:[%s3 + $0x2f0] sm:$0xff]
        %v3669 = vld [vmem:[%s3 + $0x2f8] sm:$0xff]
        %v3670 = vld [vmem:[%s3 + $0x300] sm:$0xff]
        %v3671 = vld [vmem:[%s3 + $0x308] sm:$0xff]
        %v3672 = vld [vmem:[%s3 + $0x310] sm:$0xff]
        %v3673 = vld [vmem:[%s3 + $0x318] sm:$0xff]
        %v3674 = vld [vmem:[%s3 + $0x320] sm:$0xff]
        %v3675 = vld [vmem:[%s3 + $0x328] sm:$0xff]
        %v3676 = vld [vmem:[%s3 + $0x330] sm:$0xff]
        %v3677 = vld [vmem:[%s3 + $0x338] sm:$0xff]
        %v3678 = vld [vmem:[%s3 + $0x340] sm:$0xff]
        %v3679 = vld [vmem:[%s3 + $0x348] sm:$0xff]
        %v3680 = vld [vmem:[%s3 + $0x350] sm:$0xff]
        %v3681 = vld [vmem:[%s3 + $0x358] sm:$0xff]
        %v3682 = vld [vmem:[%s3 + $0x360] sm:$0xff]
        %v3683 = vld [vmem:[%s3 + $0x368] sm:$0xff]
        %v3684 = vld [vmem:[%s3 + $0x370] sm:$0xff]
        %v3685 = vld [vmem:[%s3 + $0x378] sm:$0xff]
        %v3686 = vld [vmem:[%s3 + $0x380] sm:$0xff]
        %v3687 = vld [vmem:[%s3 + $0x388] sm:$0xff]
        %v3688 = vld [vmem:[%s3 + $0x390] sm:$0xff]
        %v3689 = vld [vmem:[%s3 + $0x398] sm:$0xff]
        %v3690 = vld [vmem:[%s3 + $0x3a0] sm:$0xff]
        %v3691 = vld [vmem:[%s3 + $0x3a8] sm:$0xff]
        %v3692 = vld [vmem:[%s3 + $0x3b0] sm:$0xff]
        %v3693 = vld [vmem:[%s3 + $0x3b8] sm:$0xff]
        %v3694 = vld [vmem:[%s3 + $0x3c0] sm:$0xff]
        %v3695 = vld [vmem:[%s3 + $0x3c8] sm:$0xff]
        %v3696 = vld [vmem:[%s3 + $0x3d0] sm:$0xff]
        %v3697 = vld [vmem:[%s3 + $0x3d8] sm:$0xff]
        %v3698 = vld [vmem:[%s3 + $0x3e0] sm:$0xff]
        %v3699 = vld [vmem:[%s3 + $0x3e8] sm:$0xff]
        %v3700 = vld [vmem:[%s3 + $0x3f0] sm:$0xff]
        %v3701 = vld [vmem:[%s3 + $0x3f8] sm:$0xff]
        %v3702 = vpack.c.bf16 %v3573, %v3573
        %v3703 = vunpack.c.l.bf16 %v3702
        %v3704 = vsub.f32 %v3573, %v3703
        %v3705 = vpack.c.bf16 %v3704, %v3704
        %v3834 = vunpack.c.l.b16 %v3574
        %v3835 = vunpack.c.h.b16 %v3574
        %v3836 = vunpack.c.l.b16 %v3575
        %v3837 = vunpack.c.h.b16 %v3575
        %v3838 = vunpack.c.l.b16 %v3576
        %v3839 = vunpack.c.h.b16 %v3576
        %v3840 = vunpack.c.l.b16 %v3577
        %v3841 = vunpack.c.h.b16 %v3577
        %v3842 = vunpack.c.l.b16 %v3578
        %v3843 = vunpack.c.h.b16 %v3578
        %v3844 = vunpack.c.l.b16 %v3579
        %v3845 = vunpack.c.h.b16 %v3579
        %v3846 = vunpack.c.l.b16 %v3580
        %v3847 = vunpack.c.h.b16 %v3580
        %v3848 = vunpack.c.l.b16 %v3581
        %v3849 = vunpack.c.h.b16 %v3581
        %v3850 = vunpack.c.l.b16 %v3582
        %v3851 = vunpack.c.h.b16 %v3582
        %v3852 = vunpack.c.l.b16 %v3583
        %v3853 = vunpack.c.h.b16 %v3583
        %v3854 = vunpack.c.l.b16 %v3584
        %v3855 = vunpack.c.h.b16 %v3584
        %v3856 = vunpack.c.l.b16 %v3585
        %v3857 = vunpack.c.h.b16 %v3585
        %v3858 = vunpack.c.l.b16 %v3586
        %v3859 = vunpack.c.h.b16 %v3586
        %v3860 = vunpack.c.l.b16 %v3587
        %v3861 = vunpack.c.h.b16 %v3587
        %v3862 = vunpack.c.l.b16 %v3588
        %v3863 = vunpack.c.h.b16 %v3588
        %v3864 = vunpack.c.l.b16 %v3589
        %v3865 = vunpack.c.h.b16 %v3589
        %v3866 = vunpack.c.l.b16 %v3590
        %v3867 = vunpack.c.h.b16 %v3590
        %v3868 = vunpack.c.l.b16 %v3591
        %v3869 = vunpack.c.h.b16 %v3591
        %v3870 = vunpack.c.l.b16 %v3592
        %v3871 = vunpack.c.h.b16 %v3592
        %v3872 = vunpack.c.l.b16 %v3593
        %v3873 = vunpack.c.h.b16 %v3593
        %v3874 = vunpack.c.l.b16 %v3594
        %v3875 = vunpack.c.h.b16 %v3594
        %v3876 = vunpack.c.l.b16 %v3595
        %v3877 = vunpack.c.h.b16 %v3595
        %v3878 = vunpack.c.l.b16 %v3596
        %v3879 = vunpack.c.h.b16 %v3596
        %v3880 = vunpack.c.l.b16 %v3597
        %v3881 = vunpack.c.h.b16 %v3597
        %v3882 = vunpack.c.l.b16 %v3598
        %v3883 = vunpack.c.h.b16 %v3598
        %v3884 = vunpack.c.l.b16 %v3599
        %v3885 = vunpack.c.h.b16 %v3599
        %v3886 = vunpack.c.l.b16 %v3600
        %v3887 = vunpack.c.h.b16 %v3600
        %v3888 = vunpack.c.l.b16 %v3601
        %v3889 = vunpack.c.h.b16 %v3601
        %v3890 = vunpack.c.l.b16 %v3602
        %v3891 = vunpack.c.h.b16 %v3602
        %v3892 = vunpack.c.l.b16 %v3603
        %v3893 = vunpack.c.h.b16 %v3603
        %v3894 = vunpack.c.l.b16 %v3604
        %v3895 = vunpack.c.h.b16 %v3604
        %v3896 = vunpack.c.l.b16 %v3605
        %v3897 = vunpack.c.h.b16 %v3605
        %v3898 = vunpack.c.l.b16 %v3606
        %v3899 = vunpack.c.h.b16 %v3606
        %v3900 = vunpack.c.l.b16 %v3607
        %v3901 = vunpack.c.h.b16 %v3607
        %v3902 = vunpack.c.l.b16 %v3608
        %v3903 = vunpack.c.h.b16 %v3608
        %v3904 = vunpack.c.l.b16 %v3609
        %v3905 = vunpack.c.h.b16 %v3609
        %v3906 = vunpack.c.l.b16 %v3610
        %v3907 = vunpack.c.h.b16 %v3610
        %v3908 = vunpack.c.l.b16 %v3611
        %v3909 = vunpack.c.h.b16 %v3611
        %v3910 = vunpack.c.l.b16 %v3612
        %v3911 = vunpack.c.h.b16 %v3612
        %v3912 = vunpack.c.l.b16 %v3613
        %v3913 = vunpack.c.h.b16 %v3613
        %v3914 = vunpack.c.l.b16 %v3614
        %v3915 = vunpack.c.h.b16 %v3614
        %v3916 = vunpack.c.l.b16 %v3615
        %v3917 = vunpack.c.h.b16 %v3615
        %v3918 = vunpack.c.l.b16 %v3616
        %v3919 = vunpack.c.h.b16 %v3616
        %v3920 = vunpack.c.l.b16 %v3617
        %v3921 = vunpack.c.h.b16 %v3617
        %v3922 = vunpack.c.l.b16 %v3618
        %v3923 = vunpack.c.h.b16 %v3618
        %v3924 = vunpack.c.l.b16 %v3619
        %v3925 = vunpack.c.h.b16 %v3619
        %v3926 = vunpack.c.l.b16 %v3620
        %v3927 = vunpack.c.h.b16 %v3620
        %v3928 = vunpack.c.l.b16 %v3621
        %v3929 = vunpack.c.h.b16 %v3621
        %v3930 = vunpack.c.l.b16 %v3622
        %v3931 = vunpack.c.h.b16 %v3622
        %v3932 = vunpack.c.l.b16 %v3623
        %v3933 = vunpack.c.h.b16 %v3623
        %v3934 = vunpack.c.l.b16 %v3624
        %v3935 = vunpack.c.h.b16 %v3624
        %v3936 = vunpack.c.l.b16 %v3625
        %v3937 = vunpack.c.h.b16 %v3625
        %v3938 = vunpack.c.l.b16 %v3626
        %v3939 = vunpack.c.h.b16 %v3626
        %v3940 = vunpack.c.l.b16 %v3627
        %v3941 = vunpack.c.h.b16 %v3627
        %v3942 = vunpack.c.l.b16 %v3628
        %v3943 = vunpack.c.h.b16 %v3628
        %v3944 = vunpack.c.l.b16 %v3629
        %v3945 = vunpack.c.h.b16 %v3629
        %v3946 = vunpack.c.l.b16 %v3630
        %v3947 = vunpack.c.h.b16 %v3630
        %v3948 = vunpack.c.l.b16 %v3631
        %v3949 = vunpack.c.h.b16 %v3631
        %v3950 = vunpack.c.l.b16 %v3632
        %v3951 = vunpack.c.h.b16 %v3632
        %v3952 = vunpack.c.l.b16 %v3633
        %v3953 = vunpack.c.h.b16 %v3633
        %v3954 = vunpack.c.l.b16 %v3634
        %v3955 = vunpack.c.h.b16 %v3634
        %v3956 = vunpack.c.l.b16 %v3635
        %v3957 = vunpack.c.h.b16 %v3635
        %v3958 = vunpack.c.l.b16 %v3636
        %v3959 = vunpack.c.h.b16 %v3636
        %v3960 = vunpack.c.l.b16 %v3637
        %v3961 = vunpack.c.h.b16 %v3637
        %v3962 = vunpack.c.l.b16 %v3638
        %v3963 = vunpack.c.h.b16 %v3638
        %v3964 = vunpack.c.l.b16 %v3639
        %v3965 = vunpack.c.h.b16 %v3639
        %v3966 = vunpack.c.l.b16 %v3640
        %v3967 = vunpack.c.h.b16 %v3640
        %v3968 = vunpack.c.l.b16 %v3641
        %v3969 = vunpack.c.h.b16 %v3641
        %v3970 = vunpack.c.l.b16 %v3642
        %v3971 = vunpack.c.h.b16 %v3642
        %v3972 = vunpack.c.l.b16 %v3643
        %v3973 = vunpack.c.h.b16 %v3643
        %v3974 = vunpack.c.l.b16 %v3644
        %v3975 = vunpack.c.h.b16 %v3644
        %v3976 = vunpack.c.l.b16 %v3645
        %v3977 = vunpack.c.h.b16 %v3645
        %v3978 = vunpack.c.l.b16 %v3646
        %v3979 = vunpack.c.h.b16 %v3646
        %v3980 = vunpack.c.l.b16 %v3647
        %v3981 = vunpack.c.h.b16 %v3647
        %v3982 = vunpack.c.l.b16 %v3648
        %v3983 = vunpack.c.h.b16 %v3648
        %v3984 = vunpack.c.l.b16 %v3649
        %v3985 = vunpack.c.h.b16 %v3649
        %v3986 = vunpack.c.l.b16 %v3650
        %v3987 = vunpack.c.h.b16 %v3650
        %v3988 = vunpack.c.l.b16 %v3651
        %v3989 = vunpack.c.h.b16 %v3651
        %v3990 = vunpack.c.l.b16 %v3652
        %v3991 = vunpack.c.h.b16 %v3652
        %v3992 = vunpack.c.l.b16 %v3653
        %v3993 = vunpack.c.h.b16 %v3653
        %v3994 = vunpack.c.l.b16 %v3654
        %v3995 = vunpack.c.h.b16 %v3654
        %v3996 = vunpack.c.l.b16 %v3655
        %v3997 = vunpack.c.h.b16 %v3655
        %v3998 = vunpack.c.l.b16 %v3656
        %v3999 = vunpack.c.h.b16 %v3656
        %v4000 = vunpack.c.l.b16 %v3657
        %v4001 = vunpack.c.h.b16 %v3657
        %v4002 = vunpack.c.l.b16 %v3658
        %v4003 = vunpack.c.h.b16 %v3658
        %v4004 = vunpack.c.l.b16 %v3659
        %v4005 = vunpack.c.h.b16 %v3659
        %v4006 = vunpack.c.l.b16 %v3660
        %v4007 = vunpack.c.h.b16 %v3660
        %v4008 = vunpack.c.l.b16 %v3661
        %v4009 = vunpack.c.h.b16 %v3661
        %v4010 = vunpack.c.l.b16 %v3662
        %v4011 = vunpack.c.h.b16 %v3662
        %v4012 = vunpack.c.l.b16 %v3663
        %v4013 = vunpack.c.h.b16 %v3663
        %v4014 = vunpack.c.l.b16 %v3664
        %v4015 = vunpack.c.h.b16 %v3664
        %v4016 = vunpack.c.l.b16 %v3665
        %v4017 = vunpack.c.h.b16 %v3665
        %v4018 = vunpack.c.l.b16 %v3666
        %v4019 = vunpack.c.h.b16 %v3666
        %v4020 = vunpack.c.l.b16 %v3667
        %v4021 = vunpack.c.h.b16 %v3667
        %v4022 = vunpack.c.l.b16 %v3668
        %v4023 = vunpack.c.h.b16 %v3668
        %v4024 = vunpack.c.l.b16 %v3669
        %v4025 = vunpack.c.h.b16 %v3669
        %v4026 = vunpack.c.l.b16 %v3670
        %v4027 = vunpack.c.h.b16 %v3670
        %v4028 = vunpack.c.l.b16 %v3671
        %v4029 = vunpack.c.h.b16 %v3671
        %v4030 = vunpack.c.l.b16 %v3672
        %v4031 = vunpack.c.h.b16 %v3672
        %v4032 = vunpack.c.l.b16 %v3673
        %v4033 = vunpack.c.h.b16 %v3673
        %v4034 = vunpack.c.l.b16 %v3674
        %v4035 = vunpack.c.h.b16 %v3674
        %v4036 = vunpack.c.l.b16 %v3675
        %v4037 = vunpack.c.h.b16 %v3675
        %v4038 = vunpack.c.l.b16 %v3676
        %v4039 = vunpack.c.h.b16 %v3676
        %v4040 = vunpack.c.l.b16 %v3677
        %v4041 = vunpack.c.h.b16 %v3677
        %v4042 = vunpack.c.l.b16 %v3678
        %v4043 = vunpack.c.h.b16 %v3678
        %v4044 = vunpack.c.l.b16 %v3679
        %v4045 = vunpack.c.h.b16 %v3679
        %v4046 = vunpack.c.l.b16 %v3680
        %v4047 = vunpack.c.h.b16 %v3680
        %v4048 = vunpack.c.l.b16 %v3681
        %v4049 = vunpack.c.h.b16 %v3681
        %v4050 = vunpack.c.l.b16 %v3682
        %v4051 = vunpack.c.h.b16 %v3682
        %v4052 = vunpack.c.l.b16 %v3683
        %v4053 = vunpack.c.h.b16 %v3683
        %v4054 = vunpack.c.l.b16 %v3684
        %v4055 = vunpack.c.h.b16 %v3684
        %v4056 = vunpack.c.l.b16 %v3685
        %v4057 = vunpack.c.h.b16 %v3685
        %v4058 = vunpack.c.l.b16 %v3686
        %v4059 = vunpack.c.h.b16 %v3686
        %v4060 = vunpack.c.l.b16 %v3687
        %v4061 = vunpack.c.h.b16 %v3687
        %v4062 = vunpack.c.l.b16 %v3688
        %v4063 = vunpack.c.h.b16 %v3688
        %v4064 = vunpack.c.l.b16 %v3689
        %v4065 = vunpack.c.h.b16 %v3689
        %v4066 = vunpack.c.l.b16 %v3690
        %v4067 = vunpack.c.h.b16 %v3690
        %v4068 = vunpack.c.l.b16 %v3691
        %v4069 = vunpack.c.h.b16 %v3691
        %v4070 = vunpack.c.l.b16 %v3692
        %v4071 = vunpack.c.h.b16 %v3692
        %v4072 = vunpack.c.l.b16 %v3693
        %v4073 = vunpack.c.h.b16 %v3693
        %v4074 = vunpack.c.l.b16 %v3694
        %v4075 = vunpack.c.h.b16 %v3694
        %v4076 = vunpack.c.l.b16 %v3695
        %v4077 = vunpack.c.h.b16 %v3695
        %v4078 = vunpack.c.l.b16 %v3696
        %v4079 = vunpack.c.h.b16 %v3696
        %v4080 = vunpack.c.l.b16 %v3697
        %v4081 = vunpack.c.h.b16 %v3697
        %v4082 = vunpack.c.l.b16 %v3698
        %v4083 = vunpack.c.h.b16 %v3698
        %v4084 = vunpack.c.l.b16 %v3699
        %v4085 = vunpack.c.h.b16 %v3699
        %v4086 = vunpack.c.l.b16 %v3700
        %v4087 = vunpack.c.h.b16 %v3700
        %v4088 = vunpack.c.l.b16 %v3701
        %v4089 = vunpack.c.h.b16 %v3701
        %v4090 = vpack.c.b16 %v3866, %v3834
        %v4091 = vpack.c.b16 %v3867, %v3835
        %v4092 = vpack.c.b16 %v3868, %v3836
        %v4093 = vpack.c.b16 %v3869, %v3837
        %v4094 = vpack.c.b16 %v3870, %v3838
        %v4095 = vpack.c.b16 %v3871, %v3839
        %v4096 = vpack.c.b16 %v3872, %v3840
        %v4097 = vpack.c.b16 %v3873, %v3841
        %v4098 = vpack.c.b16 %v3874, %v3842
        %v4099 = vpack.c.b16 %v3875, %v3843
        %v4100 = vpack.c.b16 %v3876, %v3844
        %v4101 = vpack.c.b16 %v3877, %v3845
        %v4102 = vpack.c.b16 %v3878, %v3846
        %v4103 = vpack.c.b16 %v3879, %v3847
        %v4104 = vpack.c.b16 %v3880, %v3848
        %v4105 = vpack.c.b16 %v3881, %v3849
        %v4106 = vpack.c.b16 %v3882, %v3850
        %v4107 = vpack.c.b16 %v3883, %v3851
        %v4108 = vpack.c.b16 %v3884, %v3852
        %v4109 = vpack.c.b16 %v3885, %v3853
        %v4110 = vpack.c.b16 %v3886, %v3854
        %v4111 = vpack.c.b16 %v3887, %v3855
        %v4112 = vpack.c.b16 %v3888, %v3856
        %v4113 = vpack.c.b16 %v3889, %v3857
        %v4114 = vpack.c.b16 %v3890, %v3858
        %v4115 = vpack.c.b16 %v3891, %v3859
        %v4116 = vpack.c.b16 %v3892, %v3860
        %v4117 = vpack.c.b16 %v3893, %v3861
        %v4118 = vpack.c.b16 %v3894, %v3862
        %v4119 = vpack.c.b16 %v3895, %v3863
        %v4120 = vpack.c.b16 %v3896, %v3864
        %v4121 = vpack.c.b16 %v3897, %v3865
        %v4122 = vpack.c.b16 %v3930, %v3898
        %v4123 = vpack.c.b16 %v3931, %v3899
        %v4124 = vpack.c.b16 %v3932, %v3900
        %v4125 = vpack.c.b16 %v3933, %v3901
        %v4126 = vpack.c.b16 %v3934, %v3902
        %v4127 = vpack.c.b16 %v3935, %v3903
        %v4128 = vpack.c.b16 %v3936, %v3904
        %v4129 = vpack.c.b16 %v3937, %v3905
        %v4130 = vpack.c.b16 %v3938, %v3906
        %v4131 = vpack.c.b16 %v3939, %v3907
        %v4132 = vpack.c.b16 %v3940, %v3908
        %v4133 = vpack.c.b16 %v3941, %v3909
        %v4134 = vpack.c.b16 %v3942, %v3910
        %v4135 = vpack.c.b16 %v3943, %v3911
        %v4136 = vpack.c.b16 %v3944, %v3912
        %v4137 = vpack.c.b16 %v3945, %v3913
        %v4138 = vpack.c.b16 %v3946, %v3914
        %v4139 = vpack.c.b16 %v3947, %v3915
        %v4140 = vpack.c.b16 %v3948, %v3916
        %v4141 = vpack.c.b16 %v3949, %v3917
        %v4142 = vpack.c.b16 %v3950, %v3918
        %v4143 = vpack.c.b16 %v3951, %v3919
        %v4144 = vpack.c.b16 %v3952, %v3920
        %v4145 = vpack.c.b16 %v3953, %v3921
        %v4146 = vpack.c.b16 %v3954, %v3922
        %v4147 = vpack.c.b16 %v3955, %v3923
        %v4148 = vpack.c.b16 %v3956, %v3924
        %v4149 = vpack.c.b16 %v3957, %v3925
        %v4150 = vpack.c.b16 %v3958, %v3926
        %v4151 = vpack.c.b16 %v3959, %v3927
        %v4152 = vpack.c.b16 %v3960, %v3928
        %v4153 = vpack.c.b16 %v3961, %v3929
        %v4154 = vpack.c.b16 %v3994, %v3962
        %v4155 = vpack.c.b16 %v3995, %v3963
        %v4156 = vpack.c.b16 %v3996, %v3964
        %v4157 = vpack.c.b16 %v3997, %v3965
        %v4158 = vpack.c.b16 %v3998, %v3966
        %v4159 = vpack.c.b16 %v3999, %v3967
        %v4160 = vpack.c.b16 %v4000, %v3968
        %v4161 = vpack.c.b16 %v4001, %v3969
        %v4162 = vpack.c.b16 %v4002, %v3970
        %v4163 = vpack.c.b16 %v4003, %v3971
        %v4164 = vpack.c.b16 %v4004, %v3972
        %v4165 = vpack.c.b16 %v4005, %v3973
        %v4166 = vpack.c.b16 %v4006, %v3974
        %v4167 = vpack.c.b16 %v4007, %v3975
        %v4168 = vpack.c.b16 %v4008, %v3976
        %v4169 = vpack.c.b16 %v4009, %v3977
        %v4170 = vpack.c.b16 %v4010, %v3978
        %v4171 = vpack.c.b16 %v4011, %v3979
        %v4172 = vpack.c.b16 %v4012, %v3980
        %v4173 = vpack.c.b16 %v4013, %v3981
        %v4174 = vpack.c.b16 %v4014, %v3982
        %v4175 = vpack.c.b16 %v4015, %v3983
        %v4176 = vpack.c.b16 %v4016, %v3984
        %v4177 = vpack.c.b16 %v4017, %v3985
        %v4178 = vpack.c.b16 %v4018, %v3986
        %v4179 = vpack.c.b16 %v4019, %v3987
        %v4180 = vpack.c.b16 %v4020, %v3988
        %v4181 = vpack.c.b16 %v4021, %v3989
        %v4182 = vpack.c.b16 %v4022, %v3990
        %v4183 = vpack.c.b16 %v4023, %v3991
        %v4184 = vpack.c.b16 %v4024, %v3992
        %v4185 = vpack.c.b16 %v4025, %v3993
        %v4186 = vpack.c.b16 %v4058, %v4026
        %v4187 = vpack.c.b16 %v4059, %v4027
        %v4188 = vpack.c.b16 %v4060, %v4028
        %v4189 = vpack.c.b16 %v4061, %v4029
        %v4190 = vpack.c.b16 %v4062, %v4030
        %v4191 = vpack.c.b16 %v4063, %v4031
        %v4192 = vpack.c.b16 %v4064, %v4032
        %v4193 = vpack.c.b16 %v4065, %v4033
        %v4194 = vpack.c.b16 %v4066, %v4034
        %v4195 = vpack.c.b16 %v4067, %v4035
        %v4196 = vpack.c.b16 %v4068, %v4036
        %v4197 = vpack.c.b16 %v4069, %v4037
        %v4198 = vpack.c.b16 %v4070, %v4038
        %v4199 = vpack.c.b16 %v4071, %v4039
        %v4200 = vpack.c.b16 %v4072, %v4040
        %v4201 = vpack.c.b16 %v4073, %v4041
        %v4202 = vpack.c.b16 %v4074, %v4042
        %v4203 = vpack.c.b16 %v4075, %v4043
        %v4204 = vpack.c.b16 %v4076, %v4044
        %v4205 = vpack.c.b16 %v4077, %v4045
        %v4206 = vpack.c.b16 %v4078, %v4046
        %v4207 = vpack.c.b16 %v4079, %v4047
        %v4208 = vpack.c.b16 %v4080, %v4048
        %v4209 = vpack.c.b16 %v4081, %v4049
        %v4210 = vpack.c.b16 %v4082, %v4050
        %v4211 = vpack.c.b16 %v4083, %v4051
        %v4212 = vpack.c.b16 %v4084, %v4052
        %v4213 = vpack.c.b16 %v4085, %v4053
        %v4214 = vpack.c.b16 %v4086, %v4054
        %v4215 = vpack.c.b16 %v4087, %v4055
        %v4216 = vpack.c.b16 %v4088, %v4056
        %v4217 = vpack.c.b16 %v4089, %v4057
        %v4347 = vsel %vm3489, %v3705, 0
        %4349 = vmatpush.bf16.msra.mxu0 0
        %4350 = vmatpush.bf16.msra.mxu0 0
        %4351 = vmatpush.bf16.msra.mxu0 0
        %4352 = vmatpush.bf16.msra.mxu0 0
        %4353 = vmatpush.bf16.msra.mxu0 %v4186
        %4354 = vmatpush.bf16.msra.mxu0 %v4154
        %4355 = vmatpush.bf16.msra.mxu0 %v4122
        %4356 = vmatpush.bf16.msra.mxu0 %v4090
        %4357 = vmatmul.bf16.gmra.mxu0 %v4347
        %v4358 = vpop.f32.mrf.mxu0
        %v4359 = vadd.f32 0.0, %v4358
        %v4360 = vpop.f32.mrf.mxu0
        %4361 = vdwg.mxu0
        %4362 = vmatpush.bf16.msra.mxu0 0
        %4363 = vmatpush.bf16.msra.mxu0 0
        %4364 = vmatpush.bf16.msra.mxu0 0
        %4365 = vmatpush.bf16.msra.mxu0 0
        %4366 = vmatpush.bf16.msra.mxu0 %v4187
        %4367 = vmatpush.bf16.msra.mxu0 %v4155
        %4368 = vmatpush.bf16.msra.mxu0 %v4123
        %4369 = vmatpush.bf16.msra.mxu0 %v4091
        %4370 = vmatmul.bf16.gmra.mxu0 %v4347
        %v4371 = vpop.f32.mrf.mxu0
        %v4372 = vadd.f32 0.0, %v4371
        %v4373 = vpop.f32.mrf.mxu0
        %4374 = vdwg.mxu0
        %4375 = vmatpush.bf16.msra.mxu0 0
        %4376 = vmatpush.bf16.msra.mxu0 0
        %4377 = vmatpush.bf16.msra.mxu0 0
        %4378 = vmatpush.bf16.msra.mxu0 0
        %4379 = vmatpush.bf16.msra.mxu0 %v4188
        %4380 = vmatpush.bf16.msra.mxu0 %v4156
        %4381 = vmatpush.bf16.msra.mxu0 %v4124
        %4382 = vmatpush.bf16.msra.mxu0 %v4092
        %4383 = vmatmul.bf16.gmra.mxu0 %v4347
        %v4384 = vpop.f32.mrf.mxu0
        %v4385 = vadd.f32 0.0, %v4384
        %v4386 = vpop.f32.mrf.mxu0
        %4387 = vdwg.mxu0
        %4388 = vmatpush.bf16.msra.mxu0 0
        %4389 = vmatpush.bf16.msra.mxu0 0
        %4390 = vmatpush.bf16.msra.mxu0 0
        %4391 = vmatpush.bf16.msra.mxu0 0
        %4392 = vmatpush.bf16.msra.mxu0 %v4189
        %4393 = vmatpush.bf16.msra.mxu0 %v4157
        %4394 = vmatpush.bf16.msra.mxu0 %v4125
        %4395 = vmatpush.bf16.msra.mxu0 %v4093
        %4396 = vmatmul.bf16.gmra.mxu0 %v4347
        %v4397 = vpop.f32.mrf.mxu0
        %v4398 = vadd.f32 0.0, %v4397
        %v4399 = vpop.f32.mrf.mxu0
        %4400 = vdwg.mxu0
        %4401 = vmatpush.bf16.msra.mxu0 0
        %4402 = vmatpush.bf16.msra.mxu0 0
        %4403 = vmatpush.bf16.msra.mxu0 0
        %4404 = vmatpush.bf16.msra.mxu0 0
        %4405 = vmatpush.bf16.msra.mxu0 %v4190
        %4406 = vmatpush.bf16.msra.mxu0 %v4158
        %4407 = vmatpush.bf16.msra.mxu0 %v4126
        %4408 = vmatpush.bf16.msra.mxu0 %v4094
        %4409 = vmatmul.bf16.gmra.mxu0 %v4347
        %v4410 = vpop.f32.mrf.mxu0
        %v4411 = vadd.f32 0.0, %v4410
        %v4412 = vpop.f32.mrf.mxu0
        %4413 = vdwg.mxu0
        %4414 = vmatpush.bf16.msra.mxu0 0
        %4415 = vmatpush.bf16.msra.mxu0 0
        %4416 = vmatpush.bf16.msra.mxu0 0
        %4417 = vmatpush.bf16.msra.mxu0 0
        %4418 = vmatpush.bf16.msra.mxu0 %v4191
        %4419 = vmatpush.bf16.msra.mxu0 %v4159
        %4420 = vmatpush.bf16.msra.mxu0 %v4127
        %4421 = vmatpush.bf16.msra.mxu0 %v4095
        %4422 = vmatmul.bf16.gmra.mxu0 %v4347
        %v4423 = vpop.f32.mrf.mxu0
        %v4424 = vadd.f32 0.0, %v4423
        %v4425 = vpop.f32.mrf.mxu0
        %4426 = vdwg.mxu0
        %4427 = vmatpush.bf16.msra.mxu0 0
        %4428 = vmatpush.bf16.msra.mxu0 0
        %4429 = vmatpush.bf16.msra.mxu0 0
        %4430 = vmatpush.bf16.msra.mxu0 0
        %4431 = vmatpush.bf16.msra.mxu0 %v4192
        %4432 = vmatpush.bf16.msra.mxu0 %v4160
        %4433 = vmatpush.bf16.msra.mxu0 %v4128
        %4434 = vmatpush.bf16.msra.mxu0 %v4096
        %4435 = vmatmul.bf16.gmra.mxu0 %v4347
        %v4436 = vpop.f32.mrf.mxu0
        %v4437 = vadd.f32 0.0, %v4436
        %v4438 = vpop.f32.mrf.mxu0
        %4439 = vdwg.mxu0
        %4440 = vmatpush.bf16.msra.mxu0 0
        %4441 = vmatpush.bf16.msra.mxu0 0
        %4442 = vmatpush.bf16.msra.mxu0 0
        %4443 = vmatpush.bf16.msra.mxu0 0
        %4444 = vmatpush.bf16.msra.mxu0 %v4193
        %4445 = vmatpush.bf16.msra.mxu0 %v4161
        %4446 = vmatpush.bf16.msra.mxu0 %v4129
        %4447 = vmatpush.bf16.msra.mxu0 %v4097
        %4448 = vmatmul.bf16.gmra.mxu0 %v4347
        %v4449 = vpop.f32.mrf.mxu0
        %v4450 = vadd.f32 0.0, %v4449
        %v4451 = vpop.f32.mrf.mxu0
        %4452 = vdwg.mxu0
        %4453 = vmatpush.bf16.msra.mxu0 0
        %4454 = vmatpush.bf16.msra.mxu0 0
        %4455 = vmatpush.bf16.msra.mxu0 0
        %4456 = vmatpush.bf16.msra.mxu0 0
        %4457 = vmatpush.bf16.msra.mxu0 %v4194
        %4458 = vmatpush.bf16.msra.mxu0 %v4162
        %4459 = vmatpush.bf16.msra.mxu0 %v4130
        %4460 = vmatpush.bf16.msra.mxu0 %v4098
        %4461 = vmatmul.bf16.gmra.mxu0 %v4347
        %v4462 = vpop.f32.mrf.mxu0
        %v4463 = vadd.f32 0.0, %v4462
        %v4464 = vpop.f32.mrf.mxu0
        %4465 = vdwg.mxu0
        %4466 = vmatpush.bf16.msra.mxu0 0
        %4467 = vmatpush.bf16.msra.mxu0 0
        %4468 = vmatpush.bf16.msra.mxu0 0
        %4469 = vmatpush.bf16.msra.mxu0 0
        %4470 = vmatpush.bf16.msra.mxu0 %v4195
        %4471 = vmatpush.bf16.msra.mxu0 %v4163
        %4472 = vmatpush.bf16.msra.mxu0 %v4131
        %4473 = vmatpush.bf16.msra.mxu0 %v4099
        %4474 = vmatmul.bf16.gmra.mxu0 %v4347
        %v4475 = vpop.f32.mrf.mxu0
        %v4476 = vadd.f32 0.0, %v4475
        %v4477 = vpop.f32.mrf.mxu0
        %4478 = vdwg.mxu0
        %4479 = vmatpush.bf16.msra.mxu0 0
        %4480 = vmatpush.bf16.msra.mxu0 0
        %4481 = vmatpush.bf16.msra.mxu0 0
        %4482 = vmatpush.bf16.msra.mxu0 0
        %4483 = vmatpush.bf16.msra.mxu0 %v4196
        %4484 = vmatpush.bf16.msra.mxu0 %v4164
        %4485 = vmatpush.bf16.msra.mxu0 %v4132
        %4486 = vmatpush.bf16.msra.mxu0 %v4100
        %4487 = vmatmul.bf16.gmra.mxu0 %v4347
        %v4488 = vpop.f32.mrf.mxu0
        %v4489 = vadd.f32 0.0, %v4488
        %v4490 = vpop.f32.mrf.mxu0
        %4491 = vdwg.mxu0
        %4492 = vmatpush.bf16.msra.mxu0 0
        %4493 = vmatpush.bf16.msra.mxu0 0
        %4494 = vmatpush.bf16.msra.mxu0 0
        %4495 = vmatpush.bf16.msra.mxu0 0
        %4496 = vmatpush.bf16.msra.mxu0 %v4197
        %4497 = vmatpush.bf16.msra.mxu0 %v4165
        %4498 = vmatpush.bf16.msra.mxu0 %v4133
        %4499 = vmatpush.bf16.msra.mxu0 %v4101
        %4500 = vmatmul.bf16.gmra.mxu0 %v4347
        %v4501 = vpop.f32.mrf.mxu0
        %v4502 = vadd.f32 0.0, %v4501
        %v4503 = vpop.f32.mrf.mxu0
        %4504 = vdwg.mxu0
        %4505 = vmatpush.bf16.msra.mxu0 0
        %4506 = vmatpush.bf16.msra.mxu0 0
        %4507 = vmatpush.bf16.msra.mxu0 0
        %4508 = vmatpush.bf16.msra.mxu0 0
        %4509 = vmatpush.bf16.msra.mxu0 %v4198
        %4510 = vmatpush.bf16.msra.mxu0 %v4166
        %4511 = vmatpush.bf16.msra.mxu0 %v4134
        %4512 = vmatpush.bf16.msra.mxu0 %v4102
        %4513 = vmatmul.bf16.gmra.mxu0 %v4347
        %v4514 = vpop.f32.mrf.mxu0
        %v4515 = vadd.f32 0.0, %v4514
        %v4516 = vpop.f32.mrf.mxu0
        %4517 = vdwg.mxu0
        %4518 = vmatpush.bf16.msra.mxu0 0
        %4519 = vmatpush.bf16.msra.mxu0 0
        %4520 = vmatpush.bf16.msra.mxu0 0
        %4521 = vmatpush.bf16.msra.mxu0 0
        %4522 = vmatpush.bf16.msra.mxu0 %v4199
        %4523 = vmatpush.bf16.msra.mxu0 %v4167
        %4524 = vmatpush.bf16.msra.mxu0 %v4135
        %4525 = vmatpush.bf16.msra.mxu0 %v4103
        %4526 = vmatmul.bf16.gmra.mxu0 %v4347
        %v4527 = vpop.f32.mrf.mxu0
        %v4528 = vadd.f32 0.0, %v4527
        %v4529 = vpop.f32.mrf.mxu0
        %4530 = vdwg.mxu0
        %4531 = vmatpush.bf16.msra.mxu0 0
        %4532 = vmatpush.bf16.msra.mxu0 0
        %4533 = vmatpush.bf16.msra.mxu0 0
        %4534 = vmatpush.bf16.msra.mxu0 0
        %4535 = vmatpush.bf16.msra.mxu0 %v4200
        %4536 = vmatpush.bf16.msra.mxu0 %v4168
        %4537 = vmatpush.bf16.msra.mxu0 %v4136
        %4538 = vmatpush.bf16.msra.mxu0 %v4104
        %4539 = vmatmul.bf16.gmra.mxu0 %v4347
        %v4540 = vpop.f32.mrf.mxu0
        %v4541 = vadd.f32 0.0, %v4540
        %v4542 = vpop.f32.mrf.mxu0
        %4543 = vdwg.mxu0
        %4544 = vmatpush.bf16.msra.mxu0 0
        %4545 = vmatpush.bf16.msra.mxu0 0
        %4546 = vmatpush.bf16.msra.mxu0 0
        %4547 = vmatpush.bf16.msra.mxu0 0
        %4548 = vmatpush.bf16.msra.mxu0 %v4201
        %4549 = vmatpush.bf16.msra.mxu0 %v4169
        %4550 = vmatpush.bf16.msra.mxu0 %v4137
        %4551 = vmatpush.bf16.msra.mxu0 %v4105
        %4552 = vmatmul.bf16.gmra.mxu0 %v4347
        %v4553 = vpop.f32.mrf.mxu0
        %v4554 = vadd.f32 0.0, %v4553
        %v4555 = vpop.f32.mrf.mxu0
        %4556 = vdwg.mxu0
        %4557 = vmatpush.bf16.msra.mxu0 0
        %4558 = vmatpush.bf16.msra.mxu0 0
        %4559 = vmatpush.bf16.msra.mxu0 0
        %4560 = vmatpush.bf16.msra.mxu0 0
        %4561 = vmatpush.bf16.msra.mxu0 %v4202
        %4562 = vmatpush.bf16.msra.mxu0 %v4170
        %4563 = vmatpush.bf16.msra.mxu0 %v4138
        %4564 = vmatpush.bf16.msra.mxu0 %v4106
        %4565 = vmatmul.bf16.gmra.mxu0 %v4347
        %v4566 = vpop.f32.mrf.mxu0
        %v4567 = vadd.f32 0.0, %v4566
        %v4568 = vpop.f32.mrf.mxu0
        %4569 = vdwg.mxu0
        %4570 = vmatpush.bf16.msra.mxu0 0
        %4571 = vmatpush.bf16.msra.mxu0 0
        %4572 = vmatpush.bf16.msra.mxu0 0
        %4573 = vmatpush.bf16.msra.mxu0 0
        %4574 = vmatpush.bf16.msra.mxu0 %v4203
        %4575 = vmatpush.bf16.msra.mxu0 %v4171
        %4576 = vmatpush.bf16.msra.mxu0 %v4139
        %4577 = vmatpush.bf16.msra.mxu0 %v4107
        %4578 = vmatmul.bf16.gmra.mxu0 %v4347
        %v4579 = vpop.f32.mrf.mxu0
        %v4580 = vadd.f32 0.0, %v4579
        %v4581 = vpop.f32.mrf.mxu0
        %4582 = vdwg.mxu0
        %4583 = vmatpush.bf16.msra.mxu0 0
        %4584 = vmatpush.bf16.msra.mxu0 0
        %4585 = vmatpush.bf16.msra.mxu0 0
        %4586 = vmatpush.bf16.msra.mxu0 0
        %4587 = vmatpush.bf16.msra.mxu0 %v4204
        %4588 = vmatpush.bf16.msra.mxu0 %v4172
        %4589 = vmatpush.bf16.msra.mxu0 %v4140
        %4590 = vmatpush.bf16.msra.mxu0 %v4108
        %4591 = vmatmul.bf16.gmra.mxu0 %v4347
        %v4592 = vpop.f32.mrf.mxu0
        %v4593 = vadd.f32 0.0, %v4592
        %v4594 = vpop.f32.mrf.mxu0
        %4595 = vdwg.mxu0
        %4596 = vmatpush.bf16.msra.mxu0 0
        %4597 = vmatpush.bf16.msra.mxu0 0
        %4598 = vmatpush.bf16.msra.mxu0 0
        %4599 = vmatpush.bf16.msra.mxu0 0
        %4600 = vmatpush.bf16.msra.mxu0 %v4205
        %4601 = vmatpush.bf16.msra.mxu0 %v4173
        %4602 = vmatpush.bf16.msra.mxu0 %v4141
        %4603 = vmatpush.bf16.msra.mxu0 %v4109
        %4604 = vmatmul.bf16.gmra.mxu0 %v4347
        %v4605 = vpop.f32.mrf.mxu0
        %v4606 = vadd.f32 0.0, %v4605
        %v4607 = vpop.f32.mrf.mxu0
        %4608 = vdwg.mxu0
        %4609 = vmatpush.bf16.msra.mxu0 0
        %4610 = vmatpush.bf16.msra.mxu0 0
        %4611 = vmatpush.bf16.msra.mxu0 0
        %4612 = vmatpush.bf16.msra.mxu0 0
        %4613 = vmatpush.bf16.msra.mxu0 %v4206
        %4614 = vmatpush.bf16.msra.mxu0 %v4174
        %4615 = vmatpush.bf16.msra.mxu0 %v4142
        %4616 = vmatpush.bf16.msra.mxu0 %v4110
        %4617 = vmatmul.bf16.gmra.mxu0 %v4347
        %v4618 = vpop.f32.mrf.mxu0
        %v4619 = vadd.f32 0.0, %v4618
        %v4620 = vpop.f32.mrf.mxu0
        %4621 = vdwg.mxu0
        %4622 = vmatpush.bf16.msra.mxu0 0
        %4623 = vmatpush.bf16.msra.mxu0 0
        %4624 = vmatpush.bf16.msra.mxu0 0
        %4625 = vmatpush.bf16.msra.mxu0 0
        %4626 = vmatpush.bf16.msra.mxu0 %v4207
        %4627 = vmatpush.bf16.msra.mxu0 %v4175
        %4628 = vmatpush.bf16.msra.mxu0 %v4143
        %4629 = vmatpush.bf16.msra.mxu0 %v4111
        %4630 = vmatmul.bf16.gmra.mxu0 %v4347
        %v4631 = vpop.f32.mrf.mxu0
        %v4632 = vadd.f32 0.0, %v4631
        %v4633 = vpop.f32.mrf.mxu0
        %4634 = vdwg.mxu0
        %4635 = vmatpush.bf16.msra.mxu0 0
        %4636 = vmatpush.bf16.msra.mxu0 0
        %4637 = vmatpush.bf16.msra.mxu0 0
        %4638 = vmatpush.bf16.msra.mxu0 0
        %4639 = vmatpush.bf16.msra.mxu0 %v4208
        %4640 = vmatpush.bf16.msra.mxu0 %v4176
        %4641 = vmatpush.bf16.msra.mxu0 %v4144
        %4642 = vmatpush.bf16.msra.mxu0 %v4112
        %4643 = vmatmul.bf16.gmra.mxu0 %v4347
        %v4644 = vpop.f32.mrf.mxu0
        %v4645 = vadd.f32 0.0, %v4644
        %v4646 = vpop.f32.mrf.mxu0
        %4647 = vdwg.mxu0
        %4648 = vmatpush.bf16.msra.mxu0 0
        %4649 = vmatpush.bf16.msra.mxu0 0
        %4650 = vmatpush.bf16.msra.mxu0 0
        %4651 = vmatpush.bf16.msra.mxu0 0
        %4652 = vmatpush.bf16.msra.mxu0 %v4209
        %4653 = vmatpush.bf16.msra.mxu0 %v4177
        %4654 = vmatpush.bf16.msra.mxu0 %v4145
        %4655 = vmatpush.bf16.msra.mxu0 %v4113
        %4656 = vmatmul.bf16.gmra.mxu0 %v4347
        %v4657 = vpop.f32.mrf.mxu0
        %v4658 = vadd.f32 0.0, %v4657
        %v4659 = vpop.f32.mrf.mxu0
        %4660 = vdwg.mxu0
        %4661 = vmatpush.bf16.msra.mxu0 0
        %4662 = vmatpush.bf16.msra.mxu0 0
        %4663 = vmatpush.bf16.msra.mxu0 0
        %4664 = vmatpush.bf16.msra.mxu0 0
        %4665 = vmatpush.bf16.msra.mxu0 %v4210
        %4666 = vmatpush.bf16.msra.mxu0 %v4178
        %4667 = vmatpush.bf16.msra.mxu0 %v4146
        %4668 = vmatpush.bf16.msra.mxu0 %v4114
        %4669 = vmatmul.bf16.gmra.mxu0 %v4347
        %v4670 = vpop.f32.mrf.mxu0
        %v4671 = vadd.f32 0.0, %v4670
        %v4672 = vpop.f32.mrf.mxu0
        %4673 = vdwg.mxu0
        %4674 = vmatpush.bf16.msra.mxu0 0
        %4675 = vmatpush.bf16.msra.mxu0 0
        %4676 = vmatpush.bf16.msra.mxu0 0
        %4677 = vmatpush.bf16.msra.mxu0 0
        %4678 = vmatpush.bf16.msra.mxu0 %v4211
        %4679 = vmatpush.bf16.msra.mxu0 %v4179
        %4680 = vmatpush.bf16.msra.mxu0 %v4147
        %4681 = vmatpush.bf16.msra.mxu0 %v4115
        %4682 = vmatmul.bf16.gmra.mxu0 %v4347
        %v4683 = vpop.f32.mrf.mxu0
        %v4684 = vadd.f32 0.0, %v4683
        %v4685 = vpop.f32.mrf.mxu0
        %4686 = vdwg.mxu0
        %4687 = vmatpush.bf16.msra.mxu0 0
        %4688 = vmatpush.bf16.msra.mxu0 0
        %4689 = vmatpush.bf16.msra.mxu0 0
        %4690 = vmatpush.bf16.msra.mxu0 0
        %4691 = vmatpush.bf16.msra.mxu0 %v4212
        %4692 = vmatpush.bf16.msra.mxu0 %v4180
        %4693 = vmatpush.bf16.msra.mxu0 %v4148
        %4694 = vmatpush.bf16.msra.mxu0 %v4116
        %4695 = vmatmul.bf16.gmra.mxu0 %v4347
        %v4696 = vpop.f32.mrf.mxu0
        %v4697 = vadd.f32 0.0, %v4696
        %v4698 = vpop.f32.mrf.mxu0
        %4699 = vdwg.mxu0
        %4700 = vmatpush.bf16.msra.mxu0 0
        %4701 = vmatpush.bf16.msra.mxu0 0
        %4702 = vmatpush.bf16.msra.mxu0 0
        %4703 = vmatpush.bf16.msra.mxu0 0
        %4704 = vmatpush.bf16.msra.mxu0 %v4213
        %4705 = vmatpush.bf16.msra.mxu0 %v4181
        %4706 = vmatpush.bf16.msra.mxu0 %v4149
        %4707 = vmatpush.bf16.msra.mxu0 %v4117
        %4708 = vmatmul.bf16.gmra.mxu0 %v4347
        %v4709 = vpop.f32.mrf.mxu0
        %v4710 = vadd.f32 0.0, %v4709
        %v4711 = vpop.f32.mrf.mxu0
        %4712 = vdwg.mxu0
        %4713 = vmatpush.bf16.msra.mxu0 0
        %4714 = vmatpush.bf16.msra.mxu0 0
        %4715 = vmatpush.bf16.msra.mxu0 0
        %4716 = vmatpush.bf16.msra.mxu0 0
        %4717 = vmatpush.bf16.msra.mxu0 %v4214
        %4718 = vmatpush.bf16.msra.mxu0 %v4182
        %4719 = vmatpush.bf16.msra.mxu0 %v4150
        %4720 = vmatpush.bf16.msra.mxu0 %v4118
        %4721 = vmatmul.bf16.gmra.mxu0 %v4347
        %v4722 = vpop.f32.mrf.mxu0
        %v4723 = vadd.f32 0.0, %v4722
        %v4724 = vpop.f32.mrf.mxu0
        %4725 = vdwg.mxu0
        %4726 = vmatpush.bf16.msra.mxu0 0
        %4727 = vmatpush.bf16.msra.mxu0 0
        %4728 = vmatpush.bf16.msra.mxu0 0
        %4729 = vmatpush.bf16.msra.mxu0 0
        %4730 = vmatpush.bf16.msra.mxu0 %v4215
        %4731 = vmatpush.bf16.msra.mxu0 %v4183
        %4732 = vmatpush.bf16.msra.mxu0 %v4151
        %4733 = vmatpush.bf16.msra.mxu0 %v4119
        %4734 = vmatmul.bf16.gmra.mxu0 %v4347
        %v4735 = vpop.f32.mrf.mxu0
        %v4736 = vadd.f32 0.0, %v4735
        %v4737 = vpop.f32.mrf.mxu0
        %4738 = vdwg.mxu0
        %4739 = vmatpush.bf16.msra.mxu0 0
        %4740 = vmatpush.bf16.msra.mxu0 0
        %4741 = vmatpush.bf16.msra.mxu0 0
        %4742 = vmatpush.bf16.msra.mxu0 0
        %4743 = vmatpush.bf16.msra.mxu0 %v4216
        %4744 = vmatpush.bf16.msra.mxu0 %v4184
        %4745 = vmatpush.bf16.msra.mxu0 %v4152
        %4746 = vmatpush.bf16.msra.mxu0 %v4120
        %4747 = vmatmul.bf16.gmra.mxu0 %v4347
        %v4748 = vpop.f32.mrf.mxu0
        %v4749 = vadd.f32 0.0, %v4748
        %v4750 = vpop.f32.mrf.mxu0
        %4751 = vdwg.mxu0
        %4752 = vmatpush.bf16.msra.mxu0 0
        %4753 = vmatpush.bf16.msra.mxu0 0
        %4754 = vmatpush.bf16.msra.mxu0 0
        %4755 = vmatpush.bf16.msra.mxu0 0
        %4756 = vmatpush.bf16.msra.mxu0 %v4217
        %4757 = vmatpush.bf16.msra.mxu0 %v4185
        %4758 = vmatpush.bf16.msra.mxu0 %v4153
        %4759 = vmatpush.bf16.msra.mxu0 %v4121
        %4760 = vmatmul.bf16.gmra.mxu0 %v4347
        %v4761 = vpop.f32.mrf.mxu0
        %v4762 = vadd.f32 0.0, %v4761
        %v4763 = vpop.f32.mrf.mxu0
        %4764 = vdwg.mxu0
        %v4766 = vsel %vm3489, %v3702, 0
        %4768 = vmatpush.bf16.msra.mxu0 0
        %4769 = vmatpush.bf16.msra.mxu0 0
        %4770 = vmatpush.bf16.msra.mxu0 0
        %4771 = vmatpush.bf16.msra.mxu0 0
        %4772 = vmatpush.bf16.msra.mxu0 %v4186
        %4773 = vmatpush.bf16.msra.mxu0 %v4154
        %4774 = vmatpush.bf16.msra.mxu0 %v4122
        %4775 = vmatpush.bf16.msra.mxu0 %v4090
        %4776 = vmatmul.bf16.gmra.mxu0 %v4766
        %v4777 = vpop.f32.mrf.mxu0
        %v4778 = vadd.f32 %v4359, %v4777
        %v4779 = vpop.f32.mrf.mxu0
        %4780 = vdwg.mxu0
        %4781 = vmatpush.bf16.msra.mxu0 0
        %4782 = vmatpush.bf16.msra.mxu0 0
        %4783 = vmatpush.bf16.msra.mxu0 0
        %4784 = vmatpush.bf16.msra.mxu0 0
        %4785 = vmatpush.bf16.msra.mxu0 %v4187
        %4786 = vmatpush.bf16.msra.mxu0 %v4155
        %4787 = vmatpush.bf16.msra.mxu0 %v4123
        %4788 = vmatpush.bf16.msra.mxu0 %v4091
        %4789 = vmatmul.bf16.gmra.mxu0 %v4766
        %v4790 = vpop.f32.mrf.mxu0
        %v4791 = vadd.f32 %v4372, %v4790
        %v4792 = vpop.f32.mrf.mxu0
        %4793 = vdwg.mxu0
        %4794 = vmatpush.bf16.msra.mxu0 0
        %4795 = vmatpush.bf16.msra.mxu0 0
        %4796 = vmatpush.bf16.msra.mxu0 0
        %4797 = vmatpush.bf16.msra.mxu0 0
        %4798 = vmatpush.bf16.msra.mxu0 %v4188
        %4799 = vmatpush.bf16.msra.mxu0 %v4156
        %4800 = vmatpush.bf16.msra.mxu0 %v4124
        %4801 = vmatpush.bf16.msra.mxu0 %v4092
        %4802 = vmatmul.bf16.gmra.mxu0 %v4766
        %v4803 = vpop.f32.mrf.mxu0
        %v4804 = vadd.f32 %v4385, %v4803
        %v4805 = vpop.f32.mrf.mxu0
        %4806 = vdwg.mxu0
        %4807 = vmatpush.bf16.msra.mxu0 0
        %4808 = vmatpush.bf16.msra.mxu0 0
        %4809 = vmatpush.bf16.msra.mxu0 0
        %4810 = vmatpush.bf16.msra.mxu0 0
        %4811 = vmatpush.bf16.msra.mxu0 %v4189
        %4812 = vmatpush.bf16.msra.mxu0 %v4157
        %4813 = vmatpush.bf16.msra.mxu0 %v4125
        %4814 = vmatpush.bf16.msra.mxu0 %v4093
        %4815 = vmatmul.bf16.gmra.mxu0 %v4766
        %v4816 = vpop.f32.mrf.mxu0
        %v4817 = vadd.f32 %v4398, %v4816
        %v4818 = vpop.f32.mrf.mxu0
        %4819 = vdwg.mxu0
        %4820 = vmatpush.bf16.msra.mxu0 0
        %4821 = vmatpush.bf16.msra.mxu0 0
        %4822 = vmatpush.bf16.msra.mxu0 0
        %4823 = vmatpush.bf16.msra.mxu0 0
        %4824 = vmatpush.bf16.msra.mxu0 %v4190
        %4825 = vmatpush.bf16.msra.mxu0 %v4158
        %4826 = vmatpush.bf16.msra.mxu0 %v4126
        %4827 = vmatpush.bf16.msra.mxu0 %v4094
        %4828 = vmatmul.bf16.gmra.mxu0 %v4766
        %v4829 = vpop.f32.mrf.mxu0
        %v4830 = vadd.f32 %v4411, %v4829
        %v4831 = vpop.f32.mrf.mxu0
        %4832 = vdwg.mxu0
        %4833 = vmatpush.bf16.msra.mxu0 0
        %4834 = vmatpush.bf16.msra.mxu0 0
        %4835 = vmatpush.bf16.msra.mxu0 0
        %4836 = vmatpush.bf16.msra.mxu0 0
        %4837 = vmatpush.bf16.msra.mxu0 %v4191
        %4838 = vmatpush.bf16.msra.mxu0 %v4159
        %4839 = vmatpush.bf16.msra.mxu0 %v4127
        %4840 = vmatpush.bf16.msra.mxu0 %v4095
        %4841 = vmatmul.bf16.gmra.mxu0 %v4766
        %v4842 = vpop.f32.mrf.mxu0
        %v4843 = vadd.f32 %v4424, %v4842
        %v4844 = vpop.f32.mrf.mxu0
        %4845 = vdwg.mxu0
        %4846 = vmatpush.bf16.msra.mxu0 0
        %4847 = vmatpush.bf16.msra.mxu0 0
        %4848 = vmatpush.bf16.msra.mxu0 0
        %4849 = vmatpush.bf16.msra.mxu0 0
        %4850 = vmatpush.bf16.msra.mxu0 %v4192
        %4851 = vmatpush.bf16.msra.mxu0 %v4160
        %4852 = vmatpush.bf16.msra.mxu0 %v4128
        %4853 = vmatpush.bf16.msra.mxu0 %v4096
        %4854 = vmatmul.bf16.gmra.mxu0 %v4766
        %v4855 = vpop.f32.mrf.mxu0
        %v4856 = vadd.f32 %v4437, %v4855
        %v4857 = vpop.f32.mrf.mxu0
        %4858 = vdwg.mxu0
        %4859 = vmatpush.bf16.msra.mxu0 0
        %4860 = vmatpush.bf16.msra.mxu0 0
        %4861 = vmatpush.bf16.msra.mxu0 0
        %4862 = vmatpush.bf16.msra.mxu0 0
        %4863 = vmatpush.bf16.msra.mxu0 %v4193
        %4864 = vmatpush.bf16.msra.mxu0 %v4161
        %4865 = vmatpush.bf16.msra.mxu0 %v4129
        %4866 = vmatpush.bf16.msra.mxu0 %v4097
        %4867 = vmatmul.bf16.gmra.mxu0 %v4766
        %v4868 = vpop.f32.mrf.mxu0
        %v4869 = vadd.f32 %v4450, %v4868
        %v4870 = vpop.f32.mrf.mxu0
        %4871 = vdwg.mxu0
        %4872 = vmatpush.bf16.msra.mxu0 0
        %4873 = vmatpush.bf16.msra.mxu0 0
        %4874 = vmatpush.bf16.msra.mxu0 0
        %4875 = vmatpush.bf16.msra.mxu0 0
        %4876 = vmatpush.bf16.msra.mxu0 %v4194
        %4877 = vmatpush.bf16.msra.mxu0 %v4162
        %4878 = vmatpush.bf16.msra.mxu0 %v4130
        %4879 = vmatpush.bf16.msra.mxu0 %v4098
        %4880 = vmatmul.bf16.gmra.mxu0 %v4766
        %v4881 = vpop.f32.mrf.mxu0
        %v4882 = vadd.f32 %v4463, %v4881
        %v4883 = vpop.f32.mrf.mxu0
        %4884 = vdwg.mxu0
        %4885 = vmatpush.bf16.msra.mxu0 0
        %4886 = vmatpush.bf16.msra.mxu0 0
        %4887 = vmatpush.bf16.msra.mxu0 0
        %4888 = vmatpush.bf16.msra.mxu0 0
        %4889 = vmatpush.bf16.msra.mxu0 %v4195
        %4890 = vmatpush.bf16.msra.mxu0 %v4163
        %4891 = vmatpush.bf16.msra.mxu0 %v4131
        %4892 = vmatpush.bf16.msra.mxu0 %v4099
        %4893 = vmatmul.bf16.gmra.mxu0 %v4766
        %v4894 = vpop.f32.mrf.mxu0
        %v4895 = vadd.f32 %v4476, %v4894
        %v4896 = vpop.f32.mrf.mxu0
        %4897 = vdwg.mxu0
        %4898 = vmatpush.bf16.msra.mxu0 0
        %4899 = vmatpush.bf16.msra.mxu0 0
        %4900 = vmatpush.bf16.msra.mxu0 0
        %4901 = vmatpush.bf16.msra.mxu0 0
        %4902 = vmatpush.bf16.msra.mxu0 %v4196
        %4903 = vmatpush.bf16.msra.mxu0 %v4164
        %4904 = vmatpush.bf16.msra.mxu0 %v4132
        %4905 = vmatpush.bf16.msra.mxu0 %v4100
        %4906 = vmatmul.bf16.gmra.mxu0 %v4766
        %v4907 = vpop.f32.mrf.mxu0
        %v4908 = vadd.f32 %v4489, %v4907
        %v4909 = vpop.f32.mrf.mxu0
        %4910 = vdwg.mxu0
        %4911 = vmatpush.bf16.msra.mxu0 0
        %4912 = vmatpush.bf16.msra.mxu0 0
        %4913 = vmatpush.bf16.msra.mxu0 0
        %4914 = vmatpush.bf16.msra.mxu0 0
        %4915 = vmatpush.bf16.msra.mxu0 %v4197
        %4916 = vmatpush.bf16.msra.mxu0 %v4165
        %4917 = vmatpush.bf16.msra.mxu0 %v4133
        %4918 = vmatpush.bf16.msra.mxu0 %v4101
        %4919 = vmatmul.bf16.gmra.mxu0 %v4766
        %v4920 = vpop.f32.mrf.mxu0
        %v4921 = vadd.f32 %v4502, %v4920
        %v4922 = vpop.f32.mrf.mxu0
        %4923 = vdwg.mxu0
        %4924 = vmatpush.bf16.msra.mxu0 0
        %4925 = vmatpush.bf16.msra.mxu0 0
        %4926 = vmatpush.bf16.msra.mxu0 0
        %4927 = vmatpush.bf16.msra.mxu0 0
        %4928 = vmatpush.bf16.msra.mxu0 %v4198
        %4929 = vmatpush.bf16.msra.mxu0 %v4166
        %4930 = vmatpush.bf16.msra.mxu0 %v4134
        %4931 = vmatpush.bf16.msra.mxu0 %v4102
        %4932 = vmatmul.bf16.gmra.mxu0 %v4766
        %v4933 = vpop.f32.mrf.mxu0
        %v4934 = vadd.f32 %v4515, %v4933
        %v4935 = vpop.f32.mrf.mxu0
        %4936 = vdwg.mxu0
        %4937 = vmatpush.bf16.msra.mxu0 0
        %4938 = vmatpush.bf16.msra.mxu0 0
        %4939 = vmatpush.bf16.msra.mxu0 0
        %4940 = vmatpush.bf16.msra.mxu0 0
        %4941 = vmatpush.bf16.msra.mxu0 %v4199
        %4942 = vmatpush.bf16.msra.mxu0 %v4167
        %4943 = vmatpush.bf16.msra.mxu0 %v4135
        %4944 = vmatpush.bf16.msra.mxu0 %v4103
        %4945 = vmatmul.bf16.gmra.mxu0 %v4766
        %v4946 = vpop.f32.mrf.mxu0
        %v4947 = vadd.f32 %v4528, %v4946
        %v4948 = vpop.f32.mrf.mxu0
        %4949 = vdwg.mxu0
        %4950 = vmatpush.bf16.msra.mxu0 0
        %4951 = vmatpush.bf16.msra.mxu0 0
        %4952 = vmatpush.bf16.msra.mxu0 0
        %4953 = vmatpush.bf16.msra.mxu0 0
        %4954 = vmatpush.bf16.msra.mxu0 %v4200
        %4955 = vmatpush.bf16.msra.mxu0 %v4168
        %4956 = vmatpush.bf16.msra.mxu0 %v4136
        %4957 = vmatpush.bf16.msra.mxu0 %v4104
        %4958 = vmatmul.bf16.gmra.mxu0 %v4766
        %v4959 = vpop.f32.mrf.mxu0
        %v4960 = vadd.f32 %v4541, %v4959
        %v4961 = vpop.f32.mrf.mxu0
        %4962 = vdwg.mxu0
        %4963 = vmatpush.bf16.msra.mxu0 0
        %4964 = vmatpush.bf16.msra.mxu0 0
        %4965 = vmatpush.bf16.msra.mxu0 0
        %4966 = vmatpush.bf16.msra.mxu0 0
        %4967 = vmatpush.bf16.msra.mxu0 %v4201
        %4968 = vmatpush.bf16.msra.mxu0 %v4169
        %4969 = vmatpush.bf16.msra.mxu0 %v4137
        %4970 = vmatpush.bf16.msra.mxu0 %v4105
        %4971 = vmatmul.bf16.gmra.mxu0 %v4766
        %v4972 = vpop.f32.mrf.mxu0
        %v4973 = vadd.f32 %v4554, %v4972
        %v4974 = vpop.f32.mrf.mxu0
        %4975 = vdwg.mxu0
        %4976 = vmatpush.bf16.msra.mxu0 0
        %4977 = vmatpush.bf16.msra.mxu0 0
        %4978 = vmatpush.bf16.msra.mxu0 0
        %4979 = vmatpush.bf16.msra.mxu0 0
        %4980 = vmatpush.bf16.msra.mxu0 %v4202
        %4981 = vmatpush.bf16.msra.mxu0 %v4170
        %4982 = vmatpush.bf16.msra.mxu0 %v4138
        %4983 = vmatpush.bf16.msra.mxu0 %v4106
        %4984 = vmatmul.bf16.gmra.mxu0 %v4766
        %v4985 = vpop.f32.mrf.mxu0
        %v4986 = vadd.f32 %v4567, %v4985
        %v4987 = vpop.f32.mrf.mxu0
        %4988 = vdwg.mxu0
        %4989 = vmatpush.bf16.msra.mxu0 0
        %4990 = vmatpush.bf16.msra.mxu0 0
        %4991 = vmatpush.bf16.msra.mxu0 0
        %4992 = vmatpush.bf16.msra.mxu0 0
        %4993 = vmatpush.bf16.msra.mxu0 %v4203
        %4994 = vmatpush.bf16.msra.mxu0 %v4171
        %4995 = vmatpush.bf16.msra.mxu0 %v4139
        %4996 = vmatpush.bf16.msra.mxu0 %v4107
        %4997 = vmatmul.bf16.gmra.mxu0 %v4766
        %v4998 = vpop.f32.mrf.mxu0
        %v4999 = vadd.f32 %v4580, %v4998
        %v5000 = vpop.f32.mrf.mxu0
        %5001 = vdwg.mxu0
        %5002 = vmatpush.bf16.msra.mxu0 0
        %5003 = vmatpush.bf16.msra.mxu0 0
        %5004 = vmatpush.bf16.msra.mxu0 0
        %5005 = vmatpush.bf16.msra.mxu0 0
        %5006 = vmatpush.bf16.msra.mxu0 %v4204
        %5007 = vmatpush.bf16.msra.mxu0 %v4172
        %5008 = vmatpush.bf16.msra.mxu0 %v4140
        %5009 = vmatpush.bf16.msra.mxu0 %v4108
        %5010 = vmatmul.bf16.gmra.mxu0 %v4766
        %v5011 = vpop.f32.mrf.mxu0
        %v5012 = vadd.f32 %v4593, %v5011
        %v5013 = vpop.f32.mrf.mxu0
        %5014 = vdwg.mxu0
        %5015 = vmatpush.bf16.msra.mxu0 0
        %5016 = vmatpush.bf16.msra.mxu0 0
        %5017 = vmatpush.bf16.msra.mxu0 0
        %5018 = vmatpush.bf16.msra.mxu0 0
        %5019 = vmatpush.bf16.msra.mxu0 %v4205
        %5020 = vmatpush.bf16.msra.mxu0 %v4173
        %5021 = vmatpush.bf16.msra.mxu0 %v4141
        %5022 = vmatpush.bf16.msra.mxu0 %v4109
        %5023 = vmatmul.bf16.gmra.mxu0 %v4766
        %v5024 = vpop.f32.mrf.mxu0
        %v5025 = vadd.f32 %v4606, %v5024
        %v5026 = vpop.f32.mrf.mxu0
        %5027 = vdwg.mxu0
        %5028 = vmatpush.bf16.msra.mxu0 0
        %5029 = vmatpush.bf16.msra.mxu0 0
        %5030 = vmatpush.bf16.msra.mxu0 0
        %5031 = vmatpush.bf16.msra.mxu0 0
        %5032 = vmatpush.bf16.msra.mxu0 %v4206
        %5033 = vmatpush.bf16.msra.mxu0 %v4174
        %5034 = vmatpush.bf16.msra.mxu0 %v4142
        %5035 = vmatpush.bf16.msra.mxu0 %v4110
        %5036 = vmatmul.bf16.gmra.mxu0 %v4766
        %v5037 = vpop.f32.mrf.mxu0
        %v5038 = vadd.f32 %v4619, %v5037
        %v5039 = vpop.f32.mrf.mxu0
        %5040 = vdwg.mxu0
        %5041 = vmatpush.bf16.msra.mxu0 0
        %5042 = vmatpush.bf16.msra.mxu0 0
        %5043 = vmatpush.bf16.msra.mxu0 0
        %5044 = vmatpush.bf16.msra.mxu0 0
        %5045 = vmatpush.bf16.msra.mxu0 %v4207
        %5046 = vmatpush.bf16.msra.mxu0 %v4175
        %5047 = vmatpush.bf16.msra.mxu0 %v4143
        %5048 = vmatpush.bf16.msra.mxu0 %v4111
        %5049 = vmatmul.bf16.gmra.mxu0 %v4766
        %v5050 = vpop.f32.mrf.mxu0
        %v5051 = vadd.f32 %v4632, %v5050
        %v5052 = vpop.f32.mrf.mxu0
        %5053 = vdwg.mxu0
        %5054 = vmatpush.bf16.msra.mxu0 0
        %5055 = vmatpush.bf16.msra.mxu0 0
        %5056 = vmatpush.bf16.msra.mxu0 0
        %5057 = vmatpush.bf16.msra.mxu0 0
        %5058 = vmatpush.bf16.msra.mxu0 %v4208
        %5059 = vmatpush.bf16.msra.mxu0 %v4176
        %5060 = vmatpush.bf16.msra.mxu0 %v4144
        %5061 = vmatpush.bf16.msra.mxu0 %v4112
        %5062 = vmatmul.bf16.gmra.mxu0 %v4766
        %v5063 = vpop.f32.mrf.mxu0
        %v5064 = vadd.f32 %v4645, %v5063
        %v5065 = vpop.f32.mrf.mxu0
        %5066 = vdwg.mxu0
        %5067 = vmatpush.bf16.msra.mxu0 0
        %5068 = vmatpush.bf16.msra.mxu0 0
        %5069 = vmatpush.bf16.msra.mxu0 0
        %5070 = vmatpush.bf16.msra.mxu0 0
        %5071 = vmatpush.bf16.msra.mxu0 %v4209
        %5072 = vmatpush.bf16.msra.mxu0 %v4177
        %5073 = vmatpush.bf16.msra.mxu0 %v4145
        %5074 = vmatpush.bf16.msra.mxu0 %v4113
        %5075 = vmatmul.bf16.gmra.mxu0 %v4766
        %v5076 = vpop.f32.mrf.mxu0
        %v5077 = vadd.f32 %v4658, %v5076
        %v5078 = vpop.f32.mrf.mxu0
        %5079 = vdwg.mxu0
        %5080 = vmatpush.bf16.msra.mxu0 0
        %5081 = vmatpush.bf16.msra.mxu0 0
        %5082 = vmatpush.bf16.msra.mxu0 0
        %5083 = vmatpush.bf16.msra.mxu0 0
        %5084 = vmatpush.bf16.msra.mxu0 %v4210
        %5085 = vmatpush.bf16.msra.mxu0 %v4178
        %5086 = vmatpush.bf16.msra.mxu0 %v4146
        %5087 = vmatpush.bf16.msra.mxu0 %v4114
        %5088 = vmatmul.bf16.gmra.mxu0 %v4766
        %v5089 = vpop.f32.mrf.mxu0
        %v5090 = vadd.f32 %v4671, %v5089
        %v5091 = vpop.f32.mrf.mxu0
        %5092 = vdwg.mxu0
        %5093 = vmatpush.bf16.msra.mxu0 0
        %5094 = vmatpush.bf16.msra.mxu0 0
        %5095 = vmatpush.bf16.msra.mxu0 0
        %5096 = vmatpush.bf16.msra.mxu0 0
        %5097 = vmatpush.bf16.msra.mxu0 %v4211
        %5098 = vmatpush.bf16.msra.mxu0 %v4179
        %5099 = vmatpush.bf16.msra.mxu0 %v4147
        %5100 = vmatpush.bf16.msra.mxu0 %v4115
        %5101 = vmatmul.bf16.gmra.mxu0 %v4766
        %v5102 = vpop.f32.mrf.mxu0
        %v5103 = vadd.f32 %v4684, %v5102
        %v5104 = vpop.f32.mrf.mxu0
        %5105 = vdwg.mxu0
        %5106 = vmatpush.bf16.msra.mxu0 0
        %5107 = vmatpush.bf16.msra.mxu0 0
        %5108 = vmatpush.bf16.msra.mxu0 0
        %5109 = vmatpush.bf16.msra.mxu0 0
        %5110 = vmatpush.bf16.msra.mxu0 %v4212
        %5111 = vmatpush.bf16.msra.mxu0 %v4180
        %5112 = vmatpush.bf16.msra.mxu0 %v4148
        %5113 = vmatpush.bf16.msra.mxu0 %v4116
        %5114 = vmatmul.bf16.gmra.mxu0 %v4766
        %v5115 = vpop.f32.mrf.mxu0
        %v5116 = vadd.f32 %v4697, %v5115
        %v5117 = vpop.f32.mrf.mxu0
        %5118 = vdwg.mxu0
        %5119 = vmatpush.bf16.msra.mxu0 0
        %5120 = vmatpush.bf16.msra.mxu0 0
        %5121 = vmatpush.bf16.msra.mxu0 0
        %5122 = vmatpush.bf16.msra.mxu0 0
        %5123 = vmatpush.bf16.msra.mxu0 %v4213
        %5124 = vmatpush.bf16.msra.mxu0 %v4181
        %5125 = vmatpush.bf16.msra.mxu0 %v4149
        %5126 = vmatpush.bf16.msra.mxu0 %v4117
        %5127 = vmatmul.bf16.gmra.mxu0 %v4766
        %v5128 = vpop.f32.mrf.mxu0
        %v5129 = vadd.f32 %v4710, %v5128
        %v5130 = vpop.f32.mrf.mxu0
        %5131 = vdwg.mxu0
        %5132 = vmatpush.bf16.msra.mxu0 0
        %5133 = vmatpush.bf16.msra.mxu0 0
        %5134 = vmatpush.bf16.msra.mxu0 0
        %5135 = vmatpush.bf16.msra.mxu0 0
        %5136 = vmatpush.bf16.msra.mxu0 %v4214
        %5137 = vmatpush.bf16.msra.mxu0 %v4182
        %5138 = vmatpush.bf16.msra.mxu0 %v4150
        %5139 = vmatpush.bf16.msra.mxu0 %v4118
        %5140 = vmatmul.bf16.gmra.mxu0 %v4766
        %v5141 = vpop.f32.mrf.mxu0
        %v5142 = vadd.f32 %v4723, %v5141
        %v5143 = vpop.f32.mrf.mxu0
        %5144 = vdwg.mxu0
        %5145 = vmatpush.bf16.msra.mxu0 0
        %5146 = vmatpush.bf16.msra.mxu0 0
        %5147 = vmatpush.bf16.msra.mxu0 0
        %5148 = vmatpush.bf16.msra.mxu0 0
        %5149 = vmatpush.bf16.msra.mxu0 %v4215
        %5150 = vmatpush.bf16.msra.mxu0 %v4183
        %5151 = vmatpush.bf16.msra.mxu0 %v4151
        %5152 = vmatpush.bf16.msra.mxu0 %v4119
        %5153 = vmatmul.bf16.gmra.mxu0 %v4766
        %v5154 = vpop.f32.mrf.mxu0
        %v5155 = vadd.f32 %v4736, %v5154
        %v5156 = vpop.f32.mrf.mxu0
        %5157 = vdwg.mxu0
        %5158 = vmatpush.bf16.msra.mxu0 0
        %5159 = vmatpush.bf16.msra.mxu0 0
        %5160 = vmatpush.bf16.msra.mxu0 0
        %5161 = vmatpush.bf16.msra.mxu0 0
        %5162 = vmatpush.bf16.msra.mxu0 %v4216
        %5163 = vmatpush.bf16.msra.mxu0 %v4184
        %5164 = vmatpush.bf16.msra.mxu0 %v4152
        %5165 = vmatpush.bf16.msra.mxu0 %v4120
        %5166 = vmatmul.bf16.gmra.mxu0 %v4766
        %v5167 = vpop.f32.mrf.mxu0
        %v5168 = vadd.f32 %v4749, %v5167
        %v5169 = vpop.f32.mrf.mxu0
        %5170 = vdwg.mxu0
        %5171 = vmatpush.bf16.msra.mxu0 0
        %5172 = vmatpush.bf16.msra.mxu0 0
        %5173 = vmatpush.bf16.msra.mxu0 0
        %5174 = vmatpush.bf16.msra.mxu0 0
        %5175 = vmatpush.bf16.msra.mxu0 %v4217
        %5176 = vmatpush.bf16.msra.mxu0 %v4185
        %5177 = vmatpush.bf16.msra.mxu0 %v4153
        %5178 = vmatpush.bf16.msra.mxu0 %v4121
        %5179 = vmatmul.bf16.gmra.mxu0 %v4766
        %v5180 = vpop.f32.mrf.mxu0
        %v5181 = vadd.f32 %v4762, %v5180
        %v5182 = vpop.f32.mrf.mxu0
        %5183 = vdwg.mxu0
        %v5184 = vmul.f32 %v764, %v4778
        %v5185 = vmul.f32 %v765, %v4791
        %v5186 = vmul.f32 %v766, %v4804
        %v5187 = vmul.f32 %v767, %v4817
        %v5188 = vmul.f32 %v768, %v4830
        %v5189 = vmul.f32 %v769, %v4843
        %v5190 = vmul.f32 %v770, %v4856
        %v5191 = vmul.f32 %v771, %v4869
        %v5192 = vmul.f32 %v772, %v4882
        %v5193 = vmul.f32 %v773, %v4895
        %v5194 = vmul.f32 %v774, %v4908
        %v5195 = vmul.f32 %v775, %v4921
        %v5196 = vmul.f32 %v776, %v4934
        %v5197 = vmul.f32 %v777, %v4947
        %v5198 = vmul.f32 %v778, %v4960
        %v5199 = vmul.f32 %v779, %v4973
        %v5200 = vmul.f32 %v780, %v4986
        %v5201 = vmul.f32 %v781, %v4999
        %v5202 = vmul.f32 %v782, %v5012
        %v5203 = vmul.f32 %v783, %v5025
        %v5204 = vmul.f32 %v784, %v5038
        %v5205 = vmul.f32 %v785, %v5051
        %v5206 = vmul.f32 %v786, %v5064
        %v5207 = vmul.f32 %v787, %v5077
        %v5208 = vmul.f32 %v788, %v5090
        %v5209 = vmul.f32 %v789, %v5103
        %v5210 = vmul.f32 %v790, %v5116
        %v5211 = vmul.f32 %v791, %v5129
        %v5212 = vmul.f32 %v792, %v5142
        %v5213 = vmul.f32 %v793, %v5155
        %v5214 = vmul.f32 %v794, %v5168
        %v5215 = vmul.f32 %v795, %v5181
        %5216 = vst [vmem:[%s245] sm:$0xff] %v5184
        %5217 = vst [vmem:[%s245 + $0x8] sm:$0xff] %v5185
        %5218 = vst [vmem:[%s245 + $0x10] sm:$0xff] %v5186
        %5219 = vst [vmem:[%s245 + $0x18] sm:$0xff] %v5187
        %5220 = vst [vmem:[%s245 + $0x20] sm:$0xff] %v5188
        %5221 = vst [vmem:[%s245 + $0x28] sm:$0xff] %v5189
        %5222 = vst [vmem:[%s245 + $0x30] sm:$0xff] %v5190
        %5223 = vst [vmem:[%s245 + $0x38] sm:$0xff] %v5191
        %5224 = vst [vmem:[%s245 + $0x40] sm:$0xff] %v5192
        %5225 = vst [vmem:[%s245 + $0x48] sm:$0xff] %v5193
        %5226 = vst [vmem:[%s245 + $0x50] sm:$0xff] %v5194
        %5227 = vst [vmem:[%s245 + $0x58] sm:$0xff] %v5195
        %5228 = vst [vmem:[%s245 + $0x60] sm:$0xff] %v5196
        %5229 = vst [vmem:[%s245 + $0x68] sm:$0xff] %v5197
        %5230 = vst [vmem:[%s245 + $0x70] sm:$0xff] %v5198
        %5231 = vst [vmem:[%s245 + $0x78] sm:$0xff] %v5199
        %5232 = vst [vmem:[%s245 + $0x80] sm:$0xff] %v5200
        %5233 = vst [vmem:[%s245 + $0x88] sm:$0xff] %v5201
        %5234 = vst [vmem:[%s245 + $0x90] sm:$0xff] %v5202
        %5235 = vst [vmem:[%s245 + $0x98] sm:$0xff] %v5203
        %5236 = vst [vmem:[%s245 + $0xa0] sm:$0xff] %v5204
        %5237 = vst [vmem:[%s245 + $0xa8] sm:$0xff] %v5205
        %5238 = vst [vmem:[%s245 + $0xb0] sm:$0xff] %v5206
        %5239 = vst [vmem:[%s245 + $0xb8] sm:$0xff] %v5207
        %5240 = vst [vmem:[%s245 + $0xc0] sm:$0xff] %v5208
        %5241 = vst [vmem:[%s245 + $0xc8] sm:$0xff] %v5209
        %5242 = vst [vmem:[%s245 + $0xd0] sm:$0xff] %v5210
        %5243 = vst [vmem:[%s245 + $0xd8] sm:$0xff] %v5211
        %5244 = vst [vmem:[%s245 + $0xe0] sm:$0xff] %v5212
        %5245 = vst [vmem:[%s245 + $0xe8] sm:$0xff] %v5213
        %5246 = vst [vmem:[%s245 + $0xf0] sm:$0xff] %v5214
        %5247 = vst [vmem:[%s245 + $0xf8] sm:$0xff] %v5215
        %s5248 = sand.u32 %s160, 1
        %s5249 = scalar_lea.sflag [#allocation4], %s5248
        %s5250 = sand.u32 %s160, 1
        %s5251 = smul.addr %s5250, 256
        %s5252 = scalar_lea.vmem [#allocation3], %s5251
        // Predicated region
        $region45: #{tpu_custom_call.1} parent=43 // pred_check
          %p5253 = pneg %p170
        $region46: #{tpu_custom_call.1} parent=43 // pred_check_branch
          %5255 = sbr.rel (%p5253) target = $region48
        $region47: #{tpu_custom_call.1} parent=43 // pred_region
          %5257 = vsyncadd %s5249, 0
          %s5258 = smul.addr %s21, 32
          %s5259 = smul.addr %s5258, 8
          %s5260 = scalar_lea.hbm %s6, %s5259
          %s5262 = sshll.u32 %s5252, 4
          %s5263 = int_to_ptr.vmem [resolvable:$true] %s5262
          %s5264 = sshll.u32 %s5260, 4
          %s5265 = int_to_ptr.hbm [resolvable:$true] %s5264
          %5267 = dma.vmem_to_hbm [thread:$0]  %s5263, 4096, %s5265, %s5249
        $region48: #{tpu_custom_call.1} parent=43 // pred_fallthru
          _
      $region44: #{tpu_custom_call.1} parent=5 // pred_fallthru
        _
      %p5268 = scmp.le.s32.totalorder 2, %s16
      // Predicated region
      $region49: #{tpu_custom_call.1} parent=5 // pred_check
        %p5269 = pneg %p5268
      $region50: #{tpu_custom_call.1} parent=5 // pred_check_branch
        %5271 = sbr.rel (%p5269) target = $region52
      $region51: #{tpu_custom_call.1} parent=5 // pred_region
        %s5272 = ssub.s32 %s16, 2
        // Predicated region
        $region53: #{tpu_custom_call.1} parent=51 // pred_check
          %p5273 = pneg %p176
        $region54: #{tpu_custom_call.1} parent=51 // pred_check_branch
          %5275 = sbr.rel (%p5273) target = $region56
        $region55: #{tpu_custom_call.1} parent=51 // pred_region
          %s5276 = sand.u32 %s161, 1
          %s5277 = scalar_lea.sflag [#allocation4], %s5276
          %s5278 = sand.u32 %s161, 1
          %s5279 = smul.addr %s5278, 256
          %s5280 = scalar_lea.vmem [#allocation3], %s5279
          %5282 = dma.done %s5277, 4096
        $region56: #{tpu_custom_call.1} parent=51 // pred_fallthru
          _
      $region52: #{tpu_custom_call.1} parent=5 // pred_fallthru
        _
    $region6: #{tpu_custom_call.1} parent=1 // loop_footer
      %s20 = sadd.s32 1, %s16
    $region7: #{tpu_custom_call.1} parent=1 // loop_footer_branch
      %15 = sbr.rel target = $region3
    $region8: #{tpu_custom_call.1} parent=1 // loop_exit
      _
    %5283 = vsyncpa [#allocation4], 1
    %s5284 = scalar_lea.sflag [#allocation4], 1
    %5285 = vsyncpa %s5284, 1

</llo_original>
